<compile_context>
chip_gen: v5e
topology: v5e:2x2
jax: 0.10.0
libtpu: 0.0.40
codegen_flags: <defaults>
</compile_context>

<pallas_src>
import functools
import numpy as np
import jax
import jax.numpy as jnp
from jax.experimental import pallas as pl
from jax.experimental.pallas import tpu as pltpu


# ---------------------------------------------------------------------------
# Pallas kernel: window MSA for a block of W_BLK windows (head-batched)
# ---------------------------------------------------------------------------
def swin_window_msa_kernel(x_ref, wqkvT_ref, bqkv_ref, wpTh_ref, bp_ref, rb_ref,
                           *rest, num_heads, head_dim, w_blk, n_tok, has_mask):
    # x_ref    : (M, C)            bf16  tokens of w_blk windows (M = w_blk*N)
    # wqkvT_ref: (C, 3C)           bf16  fused QKV weight (q rows pre-scaled)
    # bqkv_ref : (1, 3C)           f32   fused QKV bias   (q part pre-scaled)
    # wpTh_ref : (nH, hd, C)       bf16  output projection, split per head
    # bp_ref   : (1, C)            f32
    # rb_ref   : (nH, N, N)        bf16  relative-position bias (resident)
    # mask_ref : (w_blk, N, N)     bf16  shift mask (only if has_mask)
    if has_mask:
        mask_ref, out_ref = rest
    else:
        (out_ref,) = rest

    C = num_heads * head_dim
    G = num_heads * w_blk                                  # batch of tiny matmuls
    x = x_ref[...]                                         # (M, C) bf16

    # Fused QKV projection: ONE (M, C) @ (C, 3C) matmul, f32 accumulation.
    qkv = jnp.dot(x, wqkvT_ref[...], preferred_element_type=jnp.float32)
    qkv = (qkv + bqkv_ref[...]).astype(jnp.bfloat16)       # (M, 3C) bf16

    def to_heads(off):
        # Stack per-head lane slices head-major, then regroup rows (lane dim
        # untouched) -> (G, N, hd) with batch index g = h*w_blk + w.
        parts = [qkv[:, off + h * head_dim: off + (h + 1) * head_dim]
                 for h in range(num_heads)]
        return jnp.stack(parts, axis=0).reshape(G, n_tok, head_dim)

    q = to_heads(0)
    k = to_heads(C)
    v = to_heads(2 * C)

    # ONE batched QK^T over (head, window) pairs: (G, N, N) f32.
    attn = jax.lax.dot_general(
        q, k, (((2,), (2,)), ((0,), (0,))),
        preferred_element_type=jnp.float32)

    # Rel-pos bias (broadcast over windows) and shift mask (broadcast over heads).
    attn4 = attn.reshape(num_heads, w_blk, n_tok, n_tok)
    attn4 = attn4 + rb_ref[...].astype(jnp.float32)[:, None]
    if has_mask:
        attn4 = attn4 + mask_ref[...].astype(jnp.float32)[None]
    attn = attn4.reshape(G, n_tok, n_tok)

    # Softmax over keys (f32); normalization deferred past P.V.
    m = jnp.max(attn, axis=-1, keepdims=True)
    e = jnp.exp(attn - m)
    denom = jnp.sum(e, axis=-1, keepdims=True)             # (G, N, 1)

    # ONE batched P.V: (G, N, hd) f32, then cheap (N, hd) scaling on the EUP path.
    oh = jax.lax.dot_general(
        e.astype(jnp.bfloat16), v, (((2,), (1,)), ((0,), (0,))),
        preferred_element_type=jnp.float32)
    oh = oh * pl.reciprocal(denom, approx=True)

    # Output projection, head-batched against per-head weight slabs, then summed
    # over the head (major) axis -> no ctx scratch, no masked stripe stores.
    oh = oh.reshape(num_heads, w_blk * n_tok, head_dim).astype(jnp.bfloat16)
    outh = jax.lax.dot_general(
        oh, wpTh_ref[...], (((2,), (1,)), ((0,), (0,))),
        preferred_element_type=jnp.float32)                # (nH, M, C)
    out = jnp.sum(outh, axis=0) + bp_ref[...]              # (M, C) f32
    out_ref[...] = out.astype(out_ref.dtype)


def _pick_w_blk():
    # M = w_blk * N rows per projection matmul: 256 matches the 2x256^2 MXU of
    # v6e/v7x, 128 matches v5e's 4x128^2 MXU.
    try:
        kind = jax.devices()[0].device_kind.lower()
        if 'v6' in kind or 'v7' in kind or '7x' in kind:
            return 16
    except Exception:
        pass
    return 8


def window_msa_pallas(x_windows, params, num_heads, rel_bias, attn_mask, batch,
                      w_blk=None):
    Bw, N, C = x_windows.shape
    nW = Bw // batch
    hd = C // num_heads
    scale = hd ** (-0.5)
    if w_blk is None:
        w_blk = _pick_w_blk()

    # Fold the attention scale into the Q rows of the fused QKV weight / bias.
    row_scale = jnp.concatenate(
        [jnp.full((C,), scale, jnp.float32), jnp.ones((2 * C,), jnp.float32)])
    wqkvT = (params['wqkv'] * row_scale[:, None]).T.astype(jnp.bfloat16)   # (C, 3C)
    bqkv = (params['bqkv'] * row_scale).reshape(1, 3 * C).astype(jnp.float32)
    # Output projection split per head: proj(x) = x @ wproj.T, rows of wproj.T
    # are input features ordered (head, head_dim).
    wpT_heads = params['wproj'].T.reshape(num_heads, hd, C).astype(jnp.bfloat16)
    bp = params['bproj'].reshape(1, C).astype(jnp.float32)

    # Pad the per-image window axis to a multiple of w_blk so the shift mask can
    # be indexed with `w % blocks_per_img` (no batch-times tiling in HBM).
    nW_pad = ((nW + w_blk - 1) // w_blk) * w_blk
    blocks_per_img = nW_pad // w_blk
    x = x_windows.reshape(batch, nW, N, C)
    x = jnp.pad(x, ((0, 0), (0, nW_pad - nW), (0, 0), (0, 0)))
    x_flat = x.reshape(batch * nW_pad * N, C).astype(jnp.bfloat16)

    rb = rel_bias.astype(jnp.bfloat16)                                      # (nH, N, N)

    has_mask = attn_mask is not None
    inputs = [x_flat, wqkvT, bqkv, wpT_heads, bp, rb]
    in_specs = [
        pl.BlockSpec((w_blk * N, C), lambda w: (w, 0)),
        pl.BlockSpec((C, 3 * C), lambda w: (0, 0)),
        pl.BlockSpec((1, 3 * C), lambda w: (0, 0)),
        pl.BlockSpec((num_heads, hd, C), lambda w: (0, 0, 0)),
        pl.BlockSpec((1, C), lambda w: (0, 0)),
        pl.BlockSpec((num_heads, N, N), lambda w: (0, 0, 0)),   # resident rel-pos bias
    ]
    if has_mask:
        mask = jnp.pad(attn_mask, ((0, nW_pad - nW), (0, 0), (0, 0)))
        inputs.append(mask.astype(jnp.bfloat16))                            # (nW_pad, N, N)
        in_specs.append(
            pl.BlockSpec((w_blk, N, N), lambda w: (w % blocks_per_img, 0, 0)))

    kernel = functools.partial(swin_window_msa_kernel, num_heads=num_heads,
                               head_dim=hd, w_blk=w_blk, n_tok=N,
                               has_mask=has_mask)
    out = pl.pallas_call(
        kernel,
        out_shape=jax.ShapeDtypeStruct((batch * nW_pad * N, C), jnp.bfloat16),
        grid_spec=pltpu.PrefetchScalarGridSpec(
            num_scalar_prefetch=0,
            grid=(batch * nW_pad // w_blk,),
            in_specs=in_specs,
            out_specs=pl.BlockSpec((w_blk * N, C), lambda w: (w, 0)),
        ),
        compiler_params=pltpu.CompilerParams(
            dimension_semantics=("parallel",)),   # window blocks are independent
        # TODO(synk): set vmem_limit_bytes and re-derive w_blk at real Swin
        # shapes (N=49, C=96-768) for v7x's 64 MiB VMEM.
    )(*inputs)

    out = out.reshape(batch, nW_pad, N, C)[:, :nW]
    return out.reshape(batch * nW, N, C).astype(jnp.float32)


# ---------------------------------------------------------------------------
# Glue (pure JAX) mirroring the PyTorch module
# ---------------------------------------------------------------------------
def window_partition(x, ws):
    B, H, W, C = x.shape
    x = x.reshape(B, H // ws, ws, W // ws, ws, C)
    return jnp.transpose(x, (0, 1, 3, 2, 4, 5)).reshape(-1, ws, ws, C)


def window_reverse(windows, H, W, ws):
    B = windows.shape[0] // ((H // ws) * (W // ws))
    x = windows.reshape(B, H // ws, W // ws, ws, ws, -1)
    return jnp.transpose(x, (0, 1, 3, 2, 4, 5)).reshape(B, H, W, -1)


def relative_position_bias(table, ws, num_heads):
    Wh = Ww = ws
    seq1 = jnp.arange(0, (2 * Ww - 1) * Wh, 2 * Ww - 1)
    seq2 = jnp.arange(0, Ww, 1)
    rel_index_coords = (seq1[:, None] + seq2[None, :]).reshape(1, -1)   # (1, N)
    rel_position_index = rel_index_coords + rel_index_coords.T          # (N, N)
    rel_position_index = jnp.flip(rel_position_index, axis=1)
    N = Wh * Ww
    bias = table[rel_position_index.reshape(-1)]                        # (N*N, nH)
    return jnp.transpose(bias.reshape(N, N, num_heads), (2, 0, 1))      # (nH, N, N)


def window_msa_ref(x_windows, params, num_heads, rel_bias, attn_mask):
    """Pure-JAX f32 reference of WindowMSA.forward (for correctness check)."""
    Bw, N, C = x_windows.shape
    hd = C // num_heads
    scale = hd ** (-0.5)
    hp = jax.lax.Precision.HIGHEST
    qkv = jnp.matmul(x_windows, params['wqkv'].T, precision=hp) + params['bqkv']
    qkv = jnp.transpose(qkv.reshape(Bw, N, 3, num_heads, hd), (2, 0, 3, 1, 4))
    q, k, v = qkv[0] * scale, qkv[1], qkv[2]
    attn = jnp.einsum('bhnd,bhmd->bhnm', q, k, precision=hp)
    attn = attn + rel_bias[None]
    if attn_mask is not None:
        nW = attn_mask.shape[0]
        attn = attn.reshape(Bw // nW, nW, num_heads, N, N) + attn_mask[None, :, None]
        attn = attn.reshape(Bw, num_heads, N, N)
    attn = jax.nn.softmax(attn, axis=-1)
    out = jnp.einsum('bhnm,bhmd->bhnd', attn, v, precision=hp)
    out = jnp.transpose(out, (0, 2, 1, 3)).reshape(Bw, N, C)
    return jnp.matmul(out, params['wproj'].T, precision=hp) + params['bproj']


def shift_window_msa_forward(query, hw_shape, params, window_size, shift_size,
                             num_heads, use_pallas=True):
    B, L, C = query.shape
    H, W = hw_shape
    ws = window_size
    assert L == H * W, 'input feature has wrong size'
    x = query.reshape(B, H, W, C)
    pad_r = (ws - W % ws) % ws
    pad_b = (ws - H % ws) % ws
    x = jnp.pad(x, ((0, 0), (0, pad_b), (0, pad_r), (0, 0)))
    H_pad, W_pad = x.shape[1], x.shape[2]
    N = ws * ws

    if shift_size > 0:
        x = jnp.roll(x, shift=(-shift_size, -shift_size), axis=(1, 2))
        img_mask = np.zeros((1, H_pad, W_pad, 1), np.float32)
        slices = (slice(0, -ws), slice(-ws, -shift_size), slice(-shift_size, None))
        cnt = 0
        for hs in slices:
            for wsl in slices:
                img_mask[:, hs, wsl, :] = cnt
                cnt += 1
        mw = window_partition(jnp.asarray(img_mask), ws).reshape(-1, N)     # (nW, N)
        attn_mask = mw[:, None, :] - mw[:, :, None]
        attn_mask = jnp.where(attn_mask != 0, -100.0, 0.0).astype(jnp.float32)
    else:
        attn_mask = None

    x_windows = window_partition(x, ws).reshape(-1, N, C)                   # (B*nW, N, C)
    rel_bias = relative_position_bias(params['table'], ws, num_heads)       # (nH, N, N)

    if use_pallas:
        attn_windows = window_msa_pallas(x_windows, params, num_heads,
                                         rel_bias, attn_mask, B)
    else:
        attn_windows = window_msa_ref(x_windows, params, num_heads, rel_bias, attn_mask)

    attn_windows = attn_windows.reshape(-1, ws, ws, C)
    shifted_x = window_reverse(attn_windows, H_pad, W_pad, ws)
    if shift_size > 0:
        out = jnp.roll(shifted_x, shift=(shift_size, shift_size), axis=(1, 2))
    else:
        out = shifted_x
    if pad_r > 0 or pad_b > 0:
        out = out[:, :H, :W, :]
    # TODO(synk): self.drop (BuildDropout) is identity for dropout_cfg=None.
    return out.reshape(B, H * W, C)


# ---------------------------------------------------------------------------
# Main
# ---------------------------------------------------------------------------
if __name__ == "__main__":
    B, H, W = 2, 10, 10          # L = 100 (exercises padding to 12x12)
    C = 32
    num_heads = 4
    window_size = 4

    key = jax.random.PRNGKey(0)
    k1, k2, k3, k4, k5, k6 = jax.random.split(key, 6)
    params = {
        'wqkv':  0.05 * jax.random.normal(k1, (3 * C, C), jnp.float32),
        'bqkv':  0.05 * jax.random.normal(k2, (3 * C,), jnp.float32),
        'wproj': 0.05 * jax.random.normal(k3, (C, C), jnp.float32),
        'bproj': 0.05 * jax.random.normal(k4, (C,), jnp.float32),
        'table': 0.10 * jax.random.normal(
            k5, ((2 * window_size - 1) * (2 * window_size - 1), num_heads), jnp.float32),
    }
    query = jax.random.normal(k6, (B, H * W, C), jnp.float32)

    # Exercise both the shifted (masked) and unshifted (mask-free) paths.
    for shift_size in (2, 0):
        out_pallas = shift_window_msa_forward(query, (H, W), params, window_size,
                                              shift_size, num_heads, use_pallas=True)
        out_pallas = jax.block_until_ready(out_pallas)
        out_ref = shift_window_msa_forward(query, (H, W), params, window_size,
                                           shift_size, num_heads, use_pallas=False)
        out_ref = jax.block_until_ready(out_ref)
        # Tolerance relaxed vs. the f32 reference: bf16 MXU operands, bf16
        # bias/mask/output and approx reciprocal (accumulation/softmax in f32).
        np.testing.assert_allclose(np.asarray(out_pallas), np.asarray(out_ref),
                                   rtol=2e-2, atol=2e-2)
    print("KERNEL_OK")
</pallas_src>

<mosaic_0001>
module attributes {stable_mosaic.version = 11 : i64} {
  func.func @swin_window_msa_kernel(%arg0: i32, %arg1: memref<128x32xbf16, #tpu.memory_space<vmem>>, %arg2: memref<32x96xbf16, #tpu.memory_space<vmem>>, %arg3: memref<1x96xf32, #tpu.memory_space<vmem>>, %arg4: memref<4x8x32xbf16, #tpu.memory_space<vmem>>, %arg5: memref<1x32xf32, #tpu.memory_space<vmem>>, %arg6: memref<4x16x16xbf16, #tpu.memory_space<vmem>>, %arg7: memref<8x16x16xbf16, #tpu.memory_space<vmem>>, %arg8: memref<128x32xbf16, #tpu.memory_space<vmem>>) attributes {dimension_semantics = [#tpu.dimension_semantics<parallel>], iteration_bounds = array<i64: 4>, scalar_prefetch = 0 : i64, scratch_operands = 0 : i64, tpu.core_type = #tpu.core_type<tc>, window_params = [{transform_indices = @transform_0, window_bounds = array<i64: 128, 32>}, {pipeline_mode = #tpu.pipeline_mode<synchronous>, transform_indices = @transform_1, window_bounds = array<i64: 32, 96>}, {pipeline_mode = #tpu.pipeline_mode<synchronous>, transform_indices = @transform_2, window_bounds = array<i64: 1, 96>}, {pipeline_mode = #tpu.pipeline_mode<synchronous>, transform_indices = @transform_3, window_bounds = array<i64: 4, 8, 32>}, {pipeline_mode = #tpu.pipeline_mode<synchronous>, transform_indices = @transform_4, window_bounds = array<i64: 1, 32>}, {pipeline_mode = #tpu.pipeline_mode<synchronous>, transform_indices = @transform_5, window_bounds = array<i64: 4, 16, 16>}, {transform_indices = @transform_6, window_bounds = array<i64: 8, 16, 16>}, {transform_indices = @transform_7, window_bounds = array<i64: 128, 32>}]} {
    %c0 = arith.constant 0 : index
    %c0_0 = arith.constant 0 : index
    %0 = vector.load %arg1[%c0, %c0_0] : memref<128x32xbf16, #tpu.memory_space<vmem>>, vector<128x32xbf16>
    %c0_1 = arith.constant 0 : index
    %c0_2 = arith.constant 0 : index
    %1 = vector.load %arg2[%c0_1, %c0_2] : memref<32x96xbf16, #tpu.memory_space<vmem>>, vector<32x96xbf16>
    %cst = arith.constant dense<0.000000e+00> : vector<128x96xf32>
    %2 = tpu.matmul %0, %1, %cst {dimension_numbers = #tpu.dot_dimension_numbers<[1], [0], [0], [1], [0, 0, 1, 1], [], []>} : vector<128x32xbf16>, vector<32x96xbf16>, vector<128x96xf32> -> vector<128x96xf32>
    %c0_3 = arith.constant 0 : index
    %c0_4 = arith.constant 0 : index
    %3 = vector.load %arg3[%c0_3, %c0_4] : memref<1x96xf32, #tpu.memory_space<vmem>>, vector<1x96xf32>
    %4 = vector.broadcast %3 : vector<1x96xf32> to vector<128x96xf32>
    %5 = arith.addf %2, %4 : vector<128x96xf32>
    %6 = arith.truncf %5 : vector<128x96xf32> to vector<128x96xbf16>
    %7 = vector.extract_strided_slice %6 {offsets = [0, 0], sizes = [128, 8], strides = [1, 1]} : vector<128x96xbf16> to vector<128x8xbf16>
    %8 = vector.extract_strided_slice %6 {offsets = [0, 8], sizes = [128, 8], strides = [1, 1]} : vector<128x96xbf16> to vector<128x8xbf16>
    %9 = vector.extract_strided_slice %6 {offsets = [0, 16], sizes = [128, 8], strides = [1, 1]} : vector<128x96xbf16> to vector<128x8xbf16>
    %10 = vector.extract_strided_slice %6 {offsets = [0, 24], sizes = [128, 8], strides = [1, 1]} : vector<128x96xbf16> to vector<128x8xbf16>
    %11 = vector.shape_cast %7 : vector<128x8xbf16> to vector<1x128x8xbf16>
    %12 = vector.shape_cast %8 : vector<128x8xbf16> to vector<1x128x8xbf16>
    %13 = vector.shape_cast %9 : vector<128x8xbf16> to vector<1x128x8xbf16>
    %14 = vector.shape_cast %10 : vector<128x8xbf16> to vector<1x128x8xbf16>
    %15 = tpu.concatenate %11, %12, %13, %14 in 0 : vector<1x128x8xbf16>, vector<1x128x8xbf16>, vector<1x128x8xbf16>, vector<1x128x8xbf16> -> vector<4x128x8xbf16>
    %16 = vector.shape_cast %15 : vector<4x128x8xbf16> to vector<32x16x8xbf16>
    %17 = vector.extract_strided_slice %6 {offsets = [0, 32], sizes = [128, 8], strides = [1, 1]} : vector<128x96xbf16> to vector<128x8xbf16>
    %18 = vector.extract_strided_slice %6 {offsets = [0, 40], sizes = [128, 8], strides = [1, 1]} : vector<128x96xbf16> to vector<128x8xbf16>
    %19 = vector.extract_strided_slice %6 {offsets = [0, 48], sizes = [128, 8], strides = [1, 1]} : vector<128x96xbf16> to vector<128x8xbf16>
    %20 = vector.extract_strided_slice %6 {offsets = [0, 56], sizes = [128, 8], strides = [1, 1]} : vector<128x96xbf16> to vector<128x8xbf16>
    %21 = vector.shape_cast %17 : vector<128x8xbf16> to vector<1x128x8xbf16>
    %22 = vector.shape_cast %18 : vector<128x8xbf16> to vector<1x128x8xbf16>
    %23 = vector.shape_cast %19 : vector<128x8xbf16> to vector<1x128x8xbf16>
    %24 = vector.shape_cast %20 : vector<128x8xbf16> to vector<1x128x8xbf16>
    %25 = tpu.concatenate %21, %22, %23, %24 in 0 : vector<1x128x8xbf16>, vector<1x128x8xbf16>, vector<1x128x8xbf16>, vector<1x128x8xbf16> -> vector<4x128x8xbf16>
    %26 = vector.shape_cast %25 : vector<4x128x8xbf16> to vector<32x16x8xbf16>
    %27 = vector.extract_strided_slice %6 {offsets = [0, 64], sizes = [128, 8], strides = [1, 1]} : vector<128x96xbf16> to vector<128x8xbf16>
    %28 = vector.extract_strided_slice %6 {offsets = [0, 72], sizes = [128, 8], strides = [1, 1]} : vector<128x96xbf16> to vector<128x8xbf16>
    %29 = vector.extract_strided_slice %6 {offsets = [0, 80], sizes = [128, 8], strides = [1, 1]} : vector<128x96xbf16> to vector<128x8xbf16>
    %30 = vector.extract_strided_slice %6 {offsets = [0, 88], sizes = [128, 8], strides = [1, 1]} : vector<128x96xbf16> to vector<128x8xbf16>
    %31 = vector.shape_cast %27 : vector<128x8xbf16> to vector<1x128x8xbf16>
    %32 = vector.shape_cast %28 : vector<128x8xbf16> to vector<1x128x8xbf16>
    %33 = vector.shape_cast %29 : vector<128x8xbf16> to vector<1x128x8xbf16>
    %34 = vector.shape_cast %30 : vector<128x8xbf16> to vector<1x128x8xbf16>
    %35 = tpu.concatenate %31, %32, %33, %34 in 0 : vector<1x128x8xbf16>, vector<1x128x8xbf16>, vector<1x128x8xbf16>, vector<1x128x8xbf16> -> vector<4x128x8xbf16>
    %36 = vector.shape_cast %35 : vector<4x128x8xbf16> to vector<32x16x8xbf16>
    %cst_5 = arith.constant dense<0.000000e+00> : vector<32x16x16xf32>
    %37 = tpu.matmul %16, %26, %cst_5 {dimension_numbers = #tpu.dot_dimension_numbers<[2], [2], [1], [1], [0, 0, 0, 1, 1, 1], [0], [0]>} : vector<32x16x8xbf16>, vector<32x16x8xbf16>, vector<32x16x16xf32> -> vector<32x16x16xf32>
    %38 = vector.shape_cast %37 : vector<32x16x16xf32> to vector<4x8x16x16xf32>
    %c0_6 = arith.constant 0 : index
    %c0_7 = arith.constant 0 : index
    %c0_8 = arith.constant 0 : index
    %39 = vector.load %arg6[%c0_6, %c0_7, %c0_8] : memref<4x16x16xbf16, #tpu.memory_space<vmem>>, vector<4x16x16xbf16>
    %40 = arith.extf %39 : vector<4x16x16xbf16> to vector<4x16x16xf32>
    %41 = vector.shape_cast %40 : vector<4x16x16xf32> to vector<4x1x16x16xf32>
    %42 = vector.broadcast %41 : vector<4x1x16x16xf32> to vector<4x8x16x16xf32>
    %43 = arith.addf %38, %42 : vector<4x8x16x16xf32>
    %c0_9 = arith.constant 0 : index
    %c0_10 = arith.constant 0 : index
    %c0_11 = arith.constant 0 : index
    %44 = vector.load %arg7[%c0_9, %c0_10, %c0_11] : memref<8x16x16xbf16, #tpu.memory_space<vmem>>, vector<8x16x16xbf16>
    %45 = arith.extf %44 : vector<8x16x16xbf16> to vector<8x16x16xf32>
    %46 = vector.shape_cast %45 : vector<8x16x16xf32> to vector<1x8x16x16xf32>
    %47 = vector.broadcast %46 : vector<1x8x16x16xf32> to vector<4x8x16x16xf32>
    %48 = arith.addf %43, %47 : vector<4x8x16x16xf32>
    %49 = vector.shape_cast %48 : vector<4x8x16x16xf32> to vector<32x16x16xf32>
    %cst_12 = arith.constant dense<0xFF800000> : vector<32x16xf32>
    %50 = vector.multi_reduction <maximumf>, %49, %cst_12 [2] : vector<32x16x16xf32> to vector<32x16xf32>
    %51 = vector.shape_cast %50 : vector<32x16xf32> to vector<32x16x1xf32>
    %52 = vector.broadcast %51 : vector<32x16x1xf32> to vector<32x16x16xf32>
    %53 = arith.subf %49, %52 : vector<32x16x16xf32>
    %54 = math.exp %53 : vector<32x16x16xf32>
    %cst_13 = arith.constant dense<0.000000e+00> : vector<32x16xf32>
    %55 = vector.multi_reduction <add>, %54, %cst_13 [2] : vector<32x16x16xf32> to vector<32x16xf32>
    %56 = vector.shape_cast %55 : vector<32x16xf32> to vector<32x16x1xf32>
    %57 = arith.truncf %54 : vector<32x16x16xf32> to vector<32x16x16xbf16>
    %cst_14 = arith.constant dense<0.000000e+00> : vector<32x16x8xf32>
    %58 = tpu.matmul %57, %36, %cst_14 {dimension_numbers = #tpu.dot_dimension_numbers<[2], [1], [1], [2], [0, 0, 0, 1, 1, 2], [0], [0]>} : vector<32x16x16xbf16>, vector<32x16x8xbf16>, vector<32x16x8xf32> -> vector<32x16x8xf32>
    %59 = tpu.reciprocal %56 {approx = true} : vector<32x16x1xf32> -> vector<32x16x1xf32>
    %60 = vector.broadcast %59 : vector<32x16x1xf32> to vector<32x16x8xf32>
    %61 = arith.mulf %58, %60 : vector<32x16x8xf32>
    %62 = vector.shape_cast %61 : vector<32x16x8xf32> to vector<4x128x8xf32>
    %63 = arith.truncf %62 : vector<4x128x8xf32> to vector<4x128x8xbf16>
    %c0_15 = arith.constant 0 : index
    %c0_16 = arith.constant 0 : index
    %c0_17 = arith.constant 0 : index
    %64 = vector.load %arg4[%c0_15, %c0_16, %c0_17] : memref<4x8x32xbf16, #tpu.memory_space<vmem>>, vector<4x8x32xbf16>
    %cst_18 = arith.constant dense<0.000000e+00> : vector<4x128x32xf32>
    %65 = tpu.matmul %63, %64, %cst_18 {dimension_numbers = #tpu.dot_dimension_numbers<[2], [1], [1], [2], [0, 0, 0, 1, 1, 2], [0], [0]>} : vector<4x128x8xbf16>, vector<4x8x32xbf16>, vector<4x128x32xf32> -> vector<4x128x32xf32>
    %cst_19 = arith.constant dense<0.000000e+00> : vector<128x32xf32>
    %66 = vector.multi_reduction <add>, %65, %cst_19 [0] : vector<4x128x32xf32> to vector<128x32xf32>
    %c0_20 = arith.constant 0 : index
    %c0_21 = arith.constant 0 : index
    %67 = vector.load %arg5[%c0_20, %c0_21] : memref<1x32xf32, #tpu.memory_space<vmem>>, vector<1x32xf32>
    %68 = vector.broadcast %67 : vector<1x32xf32> to vector<128x32xf32>
    %69 = arith.addf %66, %68 : vector<128x32xf32>
    %70 = arith.truncf %69 : vector<128x32xf32> to vector<128x32xbf16>
    %c0_22 = arith.constant 0 : index
    %c0_23 = arith.constant 0 : index
    %71 = vector.load %arg8[%c0_22, %c0_23] : memref<128x32xbf16, #tpu.memory_space<vmem>>, vector<128x32xbf16>
    tpu.vector_store %arg8[%c0_22, %c0_23], %70 {strides = array<i32>} : memref<128x32xbf16, #tpu.memory_space<vmem>>, vector<128x32xbf16>,
    return
  }
  func.func @transform_0(%arg0: i32) -> (i32, i32) {
    %c0_i32 = arith.constant 0 : i32
    %c0_i32_0 = arith.constant 0 : i32
    return %arg0, %c0_i32 : i32, i32
  }
  func.func @transform_1(%arg0: i32) -> (i32, i32) {
    %c0_i32 = arith.constant 0 : i32
    %c0_i32_0 = arith.constant 0 : i32
    %c0_i32_1 = arith.constant 0 : i32
    return %c0_i32, %c0_i32_0 : i32, i32
  }
  func.func @transform_2(%arg0: i32) -> (i32, i32) {
    %c0_i32 = arith.constant 0 : i32
    %c0_i32_0 = arith.constant 0 : i32
    %c0_i32_1 = arith.constant 0 : i32
    return %c0_i32, %c0_i32_0 : i32, i32
  }
  func.func @transform_3(%arg0: i32) -> (i32, i32, i32) {
    %c0_i32 = arith.constant 0 : i32
    %c0_i32_0 = arith.constant 0 : i32
    %c0_i32_1 = arith.constant 0 : i32
    %c0_i32_2 = arith.constant 0 : i32
    return %c0_i32, %c0_i32_0, %c0_i32_1 : i32, i32, i32
  }
  func.func @transform_4(%arg0: i32) -> (i32, i32) {
    %c0_i32 = arith.constant 0 : i32
    %c0_i32_0 = arith.constant 0 : i32
    %c0_i32_1 = arith.constant 0 : i32
    return %c0_i32, %c0_i32_0 : i32, i32
  }
  func.func @transform_5(%arg0: i32) -> (i32, i32, i32) {
    %c0_i32 = arith.constant 0 : i32
    %c0_i32_0 = arith.constant 0 : i32
    %c0_i32_1 = arith.constant 0 : i32
    %c0_i32_2 = arith.constant 0 : i32
    return %c0_i32, %c0_i32_0, %c0_i32_1 : i32, i32, i32
  }
  func.func @transform_6(%arg0: i32) -> (i32, i32, i32) {
    %c2_i32 = arith.constant 2 : i32
    %c0_i32 = arith.constant 0 : i32
    %0 = arith.cmpi eq, %c2_i32, %c0_i32 : i32
    %c1_i32 = arith.constant 1 : i32
    %1 = arith.select %0, %c1_i32, %c2_i32 : i32
    %2 = arith.remsi %arg0, %1 : i32
    %c0_i32_0 = arith.constant 0 : i32
    %3 = arith.cmpi ne, %2, %c0_i32_0 : i32
    %c0_i32_1 = arith.constant 0 : i32
    %4 = arith.cmpi slt, %2, %c0_i32_1 : i32
    %c0_i32_2 = arith.constant 0 : i32
    %5 = arith.cmpi slt, %1, %c0_i32_2 : i32
    %6 = arith.xori %4, %5 : i1
    %7 = arith.andi %6, %3 : i1
    %8 = arith.addi %2, %1 : i32
    %9 = arith.select %7, %8, %2 : i32
    %c0_i32_3 = arith.constant 0 : i32
    %c0_i32_4 = arith.constant 0 : i32
    %c0_i32_5 = arith.constant 0 : i32
    return %9, %c0_i32_3, %c0_i32_4 : i32, i32, i32
  }
  func.func @transform_7(%arg0: i32) -> (i32, i32) {
    %c0_i32 = arith.constant 0 : i32
    %c0_i32_0 = arith.constant 0 : i32
    return %arg0, %c0_i32 : i32, i32
  }
}

</mosaic_0001>

<llo_original>
// kernel: tpu_custom_call.1
$region0: #{tpu_custom_call.1}
  #allocation0 [shape = 'u32[]', space=smem, size = 0x4, offset = 0x4, fixed_abs, tag = 'smem constant byte address 0x4 - core index']
  #allocation1 [shape = 'u32[72,128]{1,0:T(1,128)}', space=vmem, size = 0x9000, scoped, tag = 'internal scratch']
  %s0 = inlined_call_operand.vmem [shape: bf16[512,32], index: 0, kind: input, shape index: {}]
  %s1 = inlined_call_operand.vmem [shape: bf16[32,96], index: 1, kind: input, shape index: {}]
  %s2 = inlined_call_operand.vmem [shape: f32[1,96], index: 2, kind: input, shape index: {}]
  %s3 = inlined_call_operand.vmem [shape: bf16[4,8,32], index: 3, kind: input, shape index: {}]
  %s4 = inlined_call_operand.vmem [shape: f32[1,32], index: 4, kind: input, shape index: {}]
  %s5 = inlined_call_operand.vmem [shape: bf16[4,16,16], index: 5, kind: input, shape index: {}]
  %s6 = inlined_call_operand.vmem [shape: bf16[16,16,16], index: 6, kind: input, shape index: {}]
  %s7 = inlined_call_operand.vmem [shape: bf16[512,32], index: 7, kind: output, shape index: {}]
  %s8 = sld [smem:[#allocation0]]
  $region61: #{tpu_custom_call.1} parent=0
    _
  %s10 = ssub.s32 1, %s8
  %s11 = scalar_select 0, %s10, %s8
  loop: start=0, step=1, limit=6
  $region2: #{tpu_custom_call.1} parent=0 // loop_pre_header
    _
  $region3: #{tpu_custom_call.1} parent=0 // loop_header
    %s13 = sphi 0, %s17
    %p14 = scmp.ge.s32.totalorder %s13, 6
    %s23 = sphi 0, %s25
    %s26 = sphi 0, %s23
    %s27 = sphi 0, %s26
    %s43 = sphi 0, %s27
    %s47 = sphi 0, %s47
    %s49 = sphi 0, %s47
    %s50 = sphi 0, %s49
    %s64 = sphi 0, %s50
    %s68 = sphi 0, %s68
    %s70 = sphi 0, %s68
    %s71 = sphi 0, %s70
    %s85 = sphi 0, %s71
    %s89 = sphi 0, %s89
    %s91 = sphi 0, %s89
    %s92 = sphi 0, %s91
    %s106 = sphi 0, %s92
    %s110 = sphi 0, %s110
    %s112 = sphi 0, %s110
    %s113 = sphi 0, %s112
    %s127 = sphi 0, %s113
    %s131 = sphi 0, %s131
    %s133 = sphi 0, %s131
    %s134 = sphi 0, %s133
    %s148 = sphi 0, %s134
    %s178 = sphi 0, %s180
    %s181 = sphi 0, %s178
    %s182 = sphi 0, %s181
    %s198 = sphi 0, %s182
    %s204 = sphi 0, %s206
    %s207 = sphi 0, %s204
    %s208 = sphi 0, %s207
    %s224 = sphi 0, %s208
  $region4: #{tpu_custom_call.1} parent=0 // loop_header_branch
    %16 = sbr.rel (%p14) target = $region8
  $region5: #{tpu_custom_call.1} parent=0 // loop_body
    %s18 = ssub.s32 %s13, 1
    %s19 = ssub.s32 %s13, 2
    %s20 = sadd.s32 %s13, 1
    %s21 = ssub.s32 %s13, %s20
    %p22 = scmp.eq.s32.totalorder %s21, 0
    %s24 = sadd.s32 %s23, 1
    %s25 = scalar_select %p22, %s23, %s24
    %p28 = pneg %p22
    %p29 = scmp.eq.s32.totalorder %s13, 3
    %p30 = por %p28, %p29
    %p31 = scmp.ne.s32.totalorder %s23, %s26
    %p32 = scmp.eq.s32.totalorder %s13, 0
    %p33 = por %p31, %p32
    %p34 = scmp.ne.s32.totalorder %s23, %s26
    %p35 = scmp.eq.s32.totalorder %s18, 3
    %p36 = por %p34, %p35
    %p37 = scmp.ne.s32.totalorder %s26, %s27
    %p38 = scmp.eq.s32.totalorder %s18, 0
    %p39 = por %p37, %p38
    %p40 = scmp.ne.s32.totalorder %s26, %s27
    %p41 = scmp.eq.s32.totalorder %s19, 3
    %p42 = por %p40, %p41
    %p44 = scmp.ne.s32.totalorder %s27, %s43
    %p45 = scmp.eq.s32.totalorder %s19, 0
    %p46 = por %p44, %p45
    %s48 = sadd.s32 %s47, 1
    %p51 = scmp.eq.s32.totalorder %s13, 3
    %p52 = scmp.ne.s32.totalorder %s47, %s49
    %p53 = scmp.eq.s32.totalorder %s13, 0
    %p54 = por %p52, %p53
    %p55 = scmp.ne.s32.totalorder %s47, %s49
    %p56 = scmp.eq.s32.totalorder %s18, 3
    %p57 = por %p55, %p56
    %p58 = scmp.ne.s32.totalorder %s49, %s50
    %p59 = scmp.eq.s32.totalorder %s18, 0
    %p60 = por %p58, %p59
    %p61 = scmp.ne.s32.totalorder %s49, %s50
    %p62 = scmp.eq.s32.totalorder %s19, 3
    %p63 = por %p61, %p62
    %p65 = scmp.ne.s32.totalorder %s50, %s64
    %p66 = scmp.eq.s32.totalorder %s19, 0
    %p67 = por %p65, %p66
    %s69 = sadd.s32 %s68, 1
    %p72 = scmp.eq.s32.totalorder %s13, 3
    %p73 = scmp.ne.s32.totalorder %s68, %s70
    %p74 = scmp.eq.s32.totalorder %s13, 0
    %p75 = por %p73, %p74
    %p76 = scmp.ne.s32.totalorder %s68, %s70
    %p77 = scmp.eq.s32.totalorder %s18, 3
    %p78 = por %p76, %p77
    %p79 = scmp.ne.s32.totalorder %s70, %s71
    %p80 = scmp.eq.s32.totalorder %s18, 0
    %p81 = por %p79, %p80
    %p82 = scmp.ne.s32.totalorder %s70, %s71
    %p83 = scmp.eq.s32.totalorder %s19, 3
    %p84 = por %p82, %p83
    %p86 = scmp.ne.s32.totalorder %s71, %s85
    %p87 = scmp.eq.s32.totalorder %s19, 0
    %p88 = por %p86, %p87
    %s90 = sadd.s32 %s89, 1
    %p93 = scmp.eq.s32.totalorder %s13, 3
    %p94 = scmp.ne.s32.totalorder %s89, %s91
    %p95 = scmp.eq.s32.totalorder %s13, 0
    %p96 = por %p94, %p95
    %p97 = scmp.ne.s32.totalorder %s89, %s91
    %p98 = scmp.eq.s32.totalorder %s18, 3
    %p99 = por %p97, %p98
    %p100 = scmp.ne.s32.totalorder %s91, %s92
    %p101 = scmp.eq.s32.totalorder %s18, 0
    %p102 = por %p100, %p101
    %p103 = scmp.ne.s32.totalorder %s91, %s92
    %p104 = scmp.eq.s32.totalorder %s19, 3
    %p105 = por %p103, %p104
    %p107 = scmp.ne.s32.totalorder %s92, %s106
    %p108 = scmp.eq.s32.totalorder %s19, 0
    %p109 = por %p107, %p108
    %s111 = sadd.s32 %s110, 1
    %p114 = scmp.eq.s32.totalorder %s13, 3
    %p115 = scmp.ne.s32.totalorder %s110, %s112
    %p116 = scmp.eq.s32.totalorder %s13, 0
    %p117 = por %p115, %p116
    %p118 = scmp.ne.s32.totalorder %s110, %s112
    %p119 = scmp.eq.s32.totalorder %s18, 3
    %p120 = por %p118, %p119
    %p121 = scmp.ne.s32.totalorder %s112, %s113
    %p122 = scmp.eq.s32.totalorder %s18, 0
    %p123 = por %p121, %p122
    %p124 = scmp.ne.s32.totalorder %s112, %s113
    %p125 = scmp.eq.s32.totalorder %s19, 3
    %p126 = por %p124, %p125
    %p128 = scmp.ne.s32.totalorder %s113, %s127
    %p129 = scmp.eq.s32.totalorder %s19, 0
    %p130 = por %p128, %p129
    %s132 = sadd.s32 %s131, 1
    %p135 = scmp.eq.s32.totalorder %s13, 3
    %p136 = scmp.ne.s32.totalorder %s131, %s133
    %p137 = scmp.eq.s32.totalorder %s13, 0
    %p138 = por %p136, %p137
    %p139 = scmp.ne.s32.totalorder %s131, %s133
    %p140 = scmp.eq.s32.totalorder %s18, 3
    %p141 = por %p139, %p140
    %p142 = scmp.ne.s32.totalorder %s133, %s134
    %p143 = scmp.eq.s32.totalorder %s18, 0
    %p144 = por %p142, %p143
    %p145 = scmp.ne.s32.totalorder %s133, %s134
    %p146 = scmp.eq.s32.totalorder %s19, 3
    %p147 = por %p145, %p146
    %p149 = scmp.ne.s32.totalorder %s134, %s148
    %p150 = scmp.eq.s32.totalorder %s19, 0
    %p151 = por %p149, %p150
    %p152 = scmp.lt.s32.totalorder %s13, 0
    %s153 = ssub.s32 0, %s13
    %s154 = scalar_select %p152, %s153, %s13
    %s155 = sand.u32 %s154, 1
    %s156 = ssub.s32 0, %s155
    %s157 = scalar_select %p152, %s156, %s155
    %p158 = scmp.ne.s32.totalorder %s157, 0
    %p159 = scmp.lt.s32.totalorder %s157, 0
    %p160 = pnand %p159, %p158
    %p161 = pneg %p160
    %s162 = sadd.s32 %s157, 2
    %s163 = scalar_select %p161, %s162, %s157
    %p164 = scmp.lt.s32.totalorder %s20, 0
    %s165 = ssub.s32 0, %s20
    %s166 = scalar_select %p164, %s165, %s20
    %s167 = sand.u32 %s166, 1
    %s168 = ssub.s32 0, %s167
    %s169 = scalar_select %p164, %s168, %s167
    %p170 = scmp.ne.s32.totalorder %s169, 0
    %p171 = scmp.lt.s32.totalorder %s169, 0
    %p172 = pnand %p171, %p170
    %p173 = pneg %p172
    %s174 = sadd.s32 %s169, 2
    %s175 = scalar_select %p173, %s174, %s169
    %s176 = ssub.s32 %s163, %s175
    %p177 = scmp.eq.s32.totalorder %s176, 0
    %s179 = sadd.s32 %s178, 1
    %s180 = scalar_select %p177, %s178, %s179
    %p183 = pneg %p177
    %p184 = scmp.eq.s32.totalorder %s13, 3
    %p185 = por %p183, %p184
    %p186 = scmp.ne.s32.totalorder %s178, %s181
    %p187 = scmp.eq.s32.totalorder %s13, 0
    %p188 = por %p186, %p187
    %p189 = scmp.ne.s32.totalorder %s178, %s181
    %p190 = scmp.eq.s32.totalorder %s18, 3
    %p191 = por %p189, %p190
    %p192 = scmp.ne.s32.totalorder %s181, %s182
    %p193 = scmp.eq.s32.totalorder %s18, 0
    %p194 = por %p192, %p193
    %p195 = scmp.ne.s32.totalorder %s181, %s182
    %p196 = scmp.eq.s32.totalorder %s19, 3
    %p197 = por %p195, %p196
    %p199 = scmp.ne.s32.totalorder %s182, %s198
    %p200 = scmp.eq.s32.totalorder %s19, 0
    %p201 = por %p199, %p200
    %s202 = ssub.s32 %s13, %s20
    %p203 = scmp.eq.s32.totalorder %s202, 0
    %s205 = sadd.s32 %s204, 1
    %s206 = scalar_select %p203, %s204, %s205
    %p209 = pneg %p203
    %p210 = scmp.eq.s32.totalorder %s13, 3
    %p211 = por %p209, %p210
    %p212 = scmp.ne.s32.totalorder %s204, %s207
    %p213 = scmp.eq.s32.totalorder %s13, 0
    %p214 = por %p212, %p213
    %p215 = scmp.ne.s32.totalorder %s204, %s207
    %p216 = scmp.eq.s32.totalorder %s18, 3
    %p217 = por %p215, %p216
    %p218 = scmp.ne.s32.totalorder %s207, %s208
    %p219 = scmp.eq.s32.totalorder %s18, 0
    %p220 = por %p218, %p219
    %p221 = scmp.ne.s32.totalorder %s207, %s208
    %p222 = scmp.eq.s32.totalorder %s19, 3
    %p223 = por %p221, %p222
    %p225 = scmp.ne.s32.totalorder %s208, %s224
    %p226 = scmp.eq.s32.totalorder %s19, 0
    %p227 = por %p225, %p226
    %p228 = scmp.le.s32.totalorder 1, %s13
    %p229 = scmp.lt.s32.totalorder %s13, 5
    %p230 = pnand %p228, %p229
    %p231 = pneg %p230
    // Predicated region
    $region9: #{tpu_custom_call.1} parent=5 // pred_check
      _
    $region10: #{tpu_custom_call.1} parent=5 // pred_check_branch
      %233 = sbr.rel (%p230) target = $region12
    $region11: #{tpu_custom_call.1} parent=5 // pred_region
      %s234 = ssub.s32 %s13, 1
      // Predicated region
      $region13: #{tpu_custom_call.1} parent=11 // pred_check
        %p235 = pneg %p60
      $region14: #{tpu_custom_call.1} parent=11 // pred_check_branch
        %237 = sbr.rel (%p235) target = $region16
      $region15: #{tpu_custom_call.1} parent=11 // pred_region
        _
      $region16: #{tpu_custom_call.1} parent=11 // pred_fallthru
        _
      // Predicated region
      $region17: #{tpu_custom_call.1} parent=11 // pred_check
        %p238 = pneg %p81
      $region18: #{tpu_custom_call.1} parent=11 // pred_check_branch
        %240 = sbr.rel (%p238) target = $region20
      $region19: #{tpu_custom_call.1} parent=11 // pred_region
        _
      $region20: #{tpu_custom_call.1} parent=11 // pred_fallthru
        _
      // Predicated region
      $region21: #{tpu_custom_call.1} parent=11 // pred_check
        %p241 = pneg %p102
      $region22: #{tpu_custom_call.1} parent=11 // pred_check_branch
        %243 = sbr.rel (%p241) target = $region24
      $region23: #{tpu_custom_call.1} parent=11 // pred_region
        _
      $region24: #{tpu_custom_call.1} parent=11 // pred_fallthru
        _
      // Predicated region
      $region25: #{tpu_custom_call.1} parent=11 // pred_check
        %p244 = pneg %p123
      $region26: #{tpu_custom_call.1} parent=11 // pred_check_branch
        %246 = sbr.rel (%p244) target = $region28
      $region27: #{tpu_custom_call.1} parent=11 // pred_region
        _
      $region28: #{tpu_custom_call.1} parent=11 // pred_fallthru
        _
      // Predicated region
      $region29: #{tpu_custom_call.1} parent=11 // pred_check
        %p247 = pneg %p144
      $region30: #{tpu_custom_call.1} parent=11 // pred_check_branch
        %249 = sbr.rel (%p247) target = $region32
      $region31: #{tpu_custom_call.1} parent=11 // pred_region
        _
      $region32: #{tpu_custom_call.1} parent=11 // pred_fallthru
        _
    $region12: #{tpu_custom_call.1} parent=5 // pred_fallthru
      _
    %p250 = scmp.lt.s32.totalorder %s13, 4
    // Predicated region
    $region33: #{tpu_custom_call.1} parent=5 // pred_check
      %p251 = pneg %p250
    $region34: #{tpu_custom_call.1} parent=5 // pred_check_branch
      %253 = sbr.rel (%p251) target = $region36
    $region35: #{tpu_custom_call.1} parent=5 // pred_region
      // Predicated region
      $region37: #{tpu_custom_call.1} parent=35 // pred_check
        %p254 = pneg %p33
      $region38: #{tpu_custom_call.1} parent=35 // pred_check_branch
        %256 = sbr.rel (%p254) target = $region40
      $region39: #{tpu_custom_call.1} parent=35 // pred_region
        %s257 = smul.u32 16, %s13
        %p258 = scmp.lt.s32.totalorder %s257, 63
        %s259 = scalar_select %p258, %s257, 63
        %s260 = smul.addr %s259, 4
        %s261 = scalar_lea.vmem %s0, %s260
        %s262 = smul.u32 16, %s13
      $region40: #{tpu_custom_call.1} parent=35 // pred_fallthru
        _
      // Predicated region
      $region41: #{tpu_custom_call.1} parent=35 // pred_check
        %p263 = pneg %p188
      $region42: #{tpu_custom_call.1} parent=35 // pred_check_branch
        %265 = sbr.rel (%p263) target = $region44
      $region43: #{tpu_custom_call.1} parent=35 // pred_region
        %p266 = scmp.lt.s32.totalorder %s13, 0
        %s267 = ssub.s32 0, %s13
        %s268 = scalar_select %p266, %s267, %s13
        %s269 = sand.u32 %s268, 1
        %s270 = ssub.s32 0, %s269
        %s271 = scalar_select %p266, %s270, %s269
        %p272 = scmp.ne.s32.totalorder %s271, 0
        %p273 = scmp.lt.s32.totalorder %s271, 0
        %p274 = pnand %p273, %p272
        %p275 = pneg %p274
        %s276 = sadd.s32 %s271, 2
        %s277 = scalar_select %p275, %s276, %s271
        %s278 = smul.u32 8, %s277
        %p279 = scmp.lt.s32.totalorder %s278, 15
        %s280 = scalar_select %p279, %s278, 15
        %s281 = smul.addr %s280, 2
        %s282 = smul.addr %s281, 4
        %s283 = scalar_lea.vmem %s6, %s282
        %p284 = scmp.lt.s32.totalorder %s13, 0
        %s285 = ssub.s32 0, %s13
        %s286 = scalar_select %p284, %s285, %s13
        %s287 = sand.u32 %s286, 1
        %s288 = ssub.s32 0, %s287
        %s289 = scalar_select %p284, %s288, %s287
        %p290 = scmp.ne.s32.totalorder %s289, 0
        %p291 = scmp.lt.s32.totalorder %s289, 0
        %p292 = pnand %p291, %p290
        %p293 = pneg %p292
        %s294 = sadd.s32 %s289, 2
        %s295 = scalar_select %p293, %s294, %s289
        %s296 = smul.u32 8, %s295
      $region44: #{tpu_custom_call.1} parent=35 // pred_fallthru
        _
    $region36: #{tpu_custom_call.1} parent=5 // pred_fallthru
      _
    %p297 = scmp.le.s32.totalorder 1, %s13
    %p298 = scmp.lt.s32.totalorder %s13, 5
    %p299 = pnand %p297, %p298
    %p300 = pneg %p299
    // Predicated region
    $region45: #{tpu_custom_call.1} parent=5 // pred_check
      _
    $region46: #{tpu_custom_call.1} parent=5 // pred_check_branch
      %302 = sbr.rel (%p299) target = $region48
    $region47: #{tpu_custom_call.1} parent=5 // pred_region
      %s303 = ssub.s32 %s13, 1
      %s304 = smul.u32 16, %s18
      %p305 = scmp.lt.s32.totalorder %s304, 63
      %s306 = scalar_select %p305, %s304, 63
      %s307 = smul.addr %s306, 4
      %s308 = scalar_lea.vmem %s0, %s307
      %p309 = pneg %p39
      %p310 = pneg %p36
      %p311 = pneg %p60
      %p312 = pneg %p57
      %p313 = pneg %p81
      %p314 = pneg %p78
      %p315 = pneg %p102
      %p316 = pneg %p99
      %p317 = pneg %p123
      %p318 = pneg %p120
      %p319 = pneg %p144
      %p320 = pneg %p141
      %p321 = scmp.lt.s32.totalorder %s18, 0
      %s322 = ssub.s32 0, %s18
      %s323 = scalar_select %p321, %s322, %s18
      %s324 = sand.u32 %s323, 1
      %s325 = ssub.s32 0, %s324
      %s326 = scalar_select %p321, %s325, %s324
      %p327 = scmp.ne.s32.totalorder %s326, 0
      %p328 = scmp.lt.s32.totalorder %s326, 0
      %p329 = pnand %p328, %p327
      %p330 = pneg %p329
      %s331 = sadd.s32 %s326, 2
      %s332 = scalar_select %p330, %s331, %s326
      %s333 = smul.u32 8, %s332
      %p334 = scmp.lt.s32.totalorder %s333, 15
      %s335 = scalar_select %p334, %s333, 15
      %s336 = smul.addr %s335, 2
      %s337 = smul.addr %s336, 4
      %s338 = scalar_lea.vmem %s6, %s337
      %p339 = pneg %p194
      %p340 = pneg %p191
      %p341 = pneg %p220
      %p342 = pneg %p217
      %s343 = smul.u32 16, %s18
      %p344 = scmp.lt.s32.totalorder %s343, 63
      %s345 = scalar_select %p344, %s343, 63
      %s346 = smul.addr %s345, 4
      %s347 = scalar_lea.vmem %s7, %s346
      %s348 = smul.u32 16, %s18
      %p349 = scmp.lt.s32.totalorder %s348, 63
      %s350 = scalar_select %p349, %s348, 63
      %s351 = smul.addr %s350, 4
      %s352 = scalar_lea.vmem %s0, %s351
      %s353 = smul.u32 16, %s18
      %p354 = scmp.lt.s32.totalorder %s18, 0
      %s355 = ssub.s32 0, %s18
      %s356 = scalar_select %p354, %s355, %s18
      %s357 = sand.u32 %s356, 1
      %s358 = ssub.s32 0, %s357
      %s359 = scalar_select %p354, %s358, %s357
      %p360 = scmp.ne.s32.totalorder %s359, 0
      %p361 = scmp.lt.s32.totalorder %s359, 0
      %p362 = pnand %p361, %p360
      %p363 = pneg %p362
      %s364 = sadd.s32 %s359, 2
      %s365 = scalar_select %p363, %s364, %s359
      %s366 = smul.u32 8, %s365
      %p367 = scmp.lt.s32.totalorder %s366, 15
      %s368 = scalar_select %p367, %s366, 15
      %s369 = smul.addr %s368, 2
      %s370 = smul.addr %s369, 4
      %s371 = scalar_lea.vmem %s6, %s370
      %p372 = scmp.lt.s32.totalorder %s18, 0
      %s373 = ssub.s32 0, %s18
      %s374 = scalar_select %p372, %s373, %s18
      %s375 = sand.u32 %s374, 1
      %s376 = ssub.s32 0, %s375
      %s377 = scalar_select %p372, %s376, %s375
      %p378 = scmp.ne.s32.totalorder %s377, 0
      %p379 = scmp.lt.s32.totalorder %s377, 0
      %p380 = pnand %p379, %p378
      %p381 = pneg %p380
      %s382 = sadd.s32 %s377, 2
      %s383 = scalar_select %p381, %s382, %s377
      %s384 = smul.u32 8, %s383
      %s385 = smul.u32 16, %s18
      %p386 = scmp.lt.s32.totalorder %s385, 63
      %s387 = scalar_select %p386, %s385, 63
      %s388 = smul.addr %s387, 4
      %s389 = scalar_lea.vmem %s7, %s388
      %s390 = smul.u32 16, %s18
      %v392 = vld [vmem:[%s352] sm:$0xf]
      %v393 = vld [vmem:[%s352 + $0x4] sm:$0xf]
      %v394 = vld [vmem:[%s352 + $0x8] sm:$0xf]
      %v395 = vld [vmem:[%s352 + $0xc] sm:$0xf]
      %v396 = vld [vmem:[%s352 + $0x10] sm:$0xf]
      %v397 = vld [vmem:[%s352 + $0x14] sm:$0xf]
      %v398 = vld [vmem:[%s352 + $0x18] sm:$0xf]
      %v399 = vld [vmem:[%s352 + $0x1c] sm:$0xf]
      %v400 = vld [vmem:[%s352 + $0x20] sm:$0xf]
      %v401 = vld [vmem:[%s352 + $0x24] sm:$0xf]
      %v402 = vld [vmem:[%s352 + $0x28] sm:$0xf]
      %v403 = vld [vmem:[%s352 + $0x2c] sm:$0xf]
      %v404 = vld [vmem:[%s352 + $0x30] sm:$0xf]
      %v405 = vld [vmem:[%s352 + $0x34] sm:$0xf]
      %v406 = vld [vmem:[%s352 + $0x38] sm:$0xf]
      %v407 = vld [vmem:[%s352 + $0x3c] sm:$0xf]
      %v408 = vld [vmem:[%s1] sm:$0xf]
      %v409 = vld [vmem:[%s1 + $0x4] sm:$0xf]
      %v410 = vld [vmem:[%s1 + $0x8] sm:$0xf]
      %v411 = vld [vmem:[%s1 + $0xc] sm:$0xf]
      %v412 = vld [vmem:[%s2] sm:$0x1]
      %v414 = vperm.slane %v412, 0
      %v432 = vunpack.c.l.b16 %v392
      %v433 = vunpack.c.l.b16 %v393
      %v434 = vunpack.c.l.b16 %v394
      %v435 = vunpack.c.l.b16 %v395
      %v436 = vunpack.c.l.b16 %v396
      %v437 = vunpack.c.l.b16 %v397
      %v438 = vunpack.c.l.b16 %v398
      %v439 = vunpack.c.l.b16 %v399
      %v440 = vunpack.c.l.b16 %v400
      %v441 = vunpack.c.l.b16 %v401
      %v442 = vunpack.c.l.b16 %v402
      %v443 = vunpack.c.l.b16 %v403
      %v444 = vunpack.c.l.b16 %v404
      %v445 = vunpack.c.l.b16 %v405
      %v446 = vunpack.c.l.b16 %v406
      %v447 = vunpack.c.l.b16 %v407
      %v448 = vpack.c.b16 %v433, %v432
      %v449 = vpack.c.b16 %v435, %v434
      %v450 = vpack.c.b16 %v437, %v436
      %v451 = vpack.c.b16 %v439, %v438
      %v452 = vpack.c.b16 %v441, %v440
      %v453 = vpack.c.b16 %v443, %v442
      %v454 = vpack.c.b16 %v445, %v444
      %v455 = vpack.c.b16 %v447, %v446
      %v460 = vunpack.c.l.b16 %v408
      %v461 = vunpack.c.l.b16 %v409
      %v462 = vunpack.c.l.b16 %v410
      %v463 = vunpack.c.l.b16 %v411
      %v464 = vpack.c.b16 %v461, %v460
      %v465 = vpack.c.b16 %v463, %v462
      %vm468 = vcmask 261120
      %v470 = vsel %vm468, %v448, 0
      %v473 = vsel %vm468, %v449, 0
      %v476 = vsel %vm468, %v450, 0
      %v479 = vsel %vm468, %v451, 0
      %v482 = vsel %vm468, %v452, 0
      %v485 = vsel %vm468, %v453, 0
      %v488 = vsel %vm468, %v454, 0
      %v491 = vsel %vm468, %v455, 0
      %493 = vmatpush.bf16.msra.mxu0 0
      %494 = vmatpush.bf16.msra.mxu0 0
      %495 = vmatpush.bf16.msra.mxu0 0
      %496 = vmatpush.bf16.msra.mxu0 0
      %497 = vmatpush.bf16.msra.mxu0 0
      %498 = vmatpush.bf16.msra.mxu0 0
      %499 = vmatpush.bf16.msra.mxu0 %v465
      %500 = vmatpush.bf16.msra.mxu0 %v464
      %501 = vmatmul.bf16.gmra.mxu0 %v470
      %v502 = vpop.f32.mrf.mxu0
      %v503 = vadd.f32 %v414, %v502
      %v504 = vpop.f32.mrf.mxu0
      %v505 = vadd.f32 %v414, %v504
      %506 = vmatmul.bf16.gmra.mxu0 %v473
      %v507 = vpop.f32.mrf.mxu0
      %v508 = vadd.f32 %v414, %v507
      %v509 = vpop.f32.mrf.mxu0
      %v510 = vadd.f32 %v414, %v509
      %511 = vmatmul.bf16.gmra.mxu0 %v476
      %v512 = vpop.f32.mrf.mxu0
      %v513 = vadd.f32 %v414, %v512
      %v514 = vpop.f32.mrf.mxu0
      %v515 = vadd.f32 %v414, %v514
      %516 = vmatmul.bf16.gmra.mxu0 %v479
      %v517 = vpop.f32.mrf.mxu0
      %v518 = vadd.f32 %v414, %v517
      %v519 = vpop.f32.mrf.mxu0
      %v520 = vadd.f32 %v414, %v519
      %521 = vmatmul.bf16.gmra.mxu0 %v482
      %v522 = vpop.f32.mrf.mxu0
      %v523 = vadd.f32 %v414, %v522
      %v524 = vpop.f32.mrf.mxu0
      %v525 = vadd.f32 %v414, %v524
      %526 = vmatmul.bf16.gmra.mxu0 %v485
      %v527 = vpop.f32.mrf.mxu0
      %v528 = vadd.f32 %v414, %v527
      %v529 = vpop.f32.mrf.mxu0
      %v530 = vadd.f32 %v414, %v529
      %531 = vmatmul.bf16.gmra.mxu0 %v488
      %v532 = vpop.f32.mrf.mxu0
      %v533 = vadd.f32 %v414, %v532
      %v534 = vpop.f32.mrf.mxu0
      %v535 = vadd.f32 %v414, %v534
      %536 = vmatmul.bf16.gmra.mxu0 %v491
      %v537 = vpop.f32.mrf.mxu0
      %v538 = vadd.f32 %v414, %v537
      %v539 = vpop.f32.mrf.mxu0
      %v540 = vadd.f32 %v414, %v539
      %541 = vdwg.mxu0
      %v542 = vpack.c.bf16 %v503, %v503
      %v543 = vpack.c.bf16 %v505, %v505
      %v544 = vpack.c.bf16 %v508, %v508
      %v545 = vpack.c.bf16 %v510, %v510
      %v546 = vpack.c.bf16 %v513, %v513
      %v547 = vpack.c.bf16 %v515, %v515
      %v548 = vpack.c.bf16 %v518, %v518
      %v549 = vpack.c.bf16 %v520, %v520
      %v550 = vpack.c.bf16 %v523, %v523
      %v551 = vpack.c.bf16 %v525, %v525
      %v552 = vpack.c.bf16 %v528, %v528
      %v553 = vpack.c.bf16 %v530, %v530
      %v554 = vpack.c.bf16 %v533, %v533
      %v555 = vpack.c.bf16 %v535, %v535
      %v556 = vpack.c.bf16 %v538, %v538
      %v557 = vpack.c.bf16 %v540, %v540
      %574 = vrot.lane.b32.xlu0 %v542, 120
      %v575 = vpop.permute.xlu0 %574
      %576 = vrot.lane.b32.xlu0 %v543, 120
      %v577 = vpop.permute.xlu0 %576
      %578 = vrot.lane.b32.xlu0 %v544, 120
      %v579 = vpop.permute.xlu0 %578
      %580 = vrot.lane.b32.xlu0 %v545, 120
      %v581 = vpop.permute.xlu0 %580
      %582 = vrot.lane.b32.xlu0 %v546, 120
      %v583 = vpop.permute.xlu0 %582
      %584 = vrot.lane.b32.xlu0 %v547, 120
      %v585 = vpop.permute.xlu0 %584
      %586 = vrot.lane.b32.xlu0 %v548, 120
      %v587 = vpop.permute.xlu0 %586
      %588 = vrot.lane.b32.xlu0 %v549, 120
      %v589 = vpop.permute.xlu0 %588
      %590 = vrot.lane.b32.xlu0 %v550, 120
      %v591 = vpop.permute.xlu0 %590
      %592 = vrot.lane.b32.xlu0 %v551, 120
      %v593 = vpop.permute.xlu0 %592
      %594 = vrot.lane.b32.xlu0 %v552, 120
      %v595 = vpop.permute.xlu0 %594
      %596 = vrot.lane.b32.xlu0 %v553, 120
      %v597 = vpop.permute.xlu0 %596
      %598 = vrot.lane.b32.xlu0 %v554, 120
      %v599 = vpop.permute.xlu0 %598
      %600 = vrot.lane.b32.xlu0 %v555, 120
      %v601 = vpop.permute.xlu0 %600
      %602 = vrot.lane.b32.xlu0 %v556, 120
      %v603 = vpop.permute.xlu0 %602
      %604 = vrot.lane.b32.xlu0 %v557, 120
      %v605 = vpop.permute.xlu0 %604
      %606 = vrot.lane.b32.xlu0 %v542, 112
      %v607 = vpop.permute.xlu0 %606
      %608 = vrot.lane.b32.xlu0 %v543, 112
      %v609 = vpop.permute.xlu0 %608
      %610 = vrot.lane.b32.xlu0 %v544, 112
      %v611 = vpop.permute.xlu0 %610
      %612 = vrot.lane.b32.xlu0 %v545, 112
      %v613 = vpop.permute.xlu0 %612
      %614 = vrot.lane.b32.xlu0 %v546, 112
      %v615 = vpop.permute.xlu0 %614
      %616 = vrot.lane.b32.xlu0 %v547, 112
      %v617 = vpop.permute.xlu0 %616
      %618 = vrot.lane.b32.xlu0 %v548, 112
      %v619 = vpop.permute.xlu0 %618
      %620 = vrot.lane.b32.xlu0 %v549, 112
      %v621 = vpop.permute.xlu0 %620
      %622 = vrot.lane.b32.xlu0 %v550, 112
      %v623 = vpop.permute.xlu0 %622
      %624 = vrot.lane.b32.xlu0 %v551, 112
      %v625 = vpop.permute.xlu0 %624
      %626 = vrot.lane.b32.xlu0 %v552, 112
      %v627 = vpop.permute.xlu0 %626
      %628 = vrot.lane.b32.xlu0 %v553, 112
      %v629 = vpop.permute.xlu0 %628
      %630 = vrot.lane.b32.xlu0 %v554, 112
      %v631 = vpop.permute.xlu0 %630
      %632 = vrot.lane.b32.xlu0 %v555, 112
      %v633 = vpop.permute.xlu0 %632
      %634 = vrot.lane.b32.xlu0 %v556, 112
      %v635 = vpop.permute.xlu0 %634
      %636 = vrot.lane.b32.xlu0 %v557, 112
      %v637 = vpop.permute.xlu0 %636
      %638 = vrot.lane.b32.xlu0 %v542, 104
      %v639 = vpop.permute.xlu0 %638
      %640 = vrot.lane.b32.xlu0 %v543, 104
      %v641 = vpop.permute.xlu0 %640
      %642 = vrot.lane.b32.xlu0 %v544, 104
      %v643 = vpop.permute.xlu0 %642
      %644 = vrot.lane.b32.xlu0 %v545, 104
      %v645 = vpop.permute.xlu0 %644
      %646 = vrot.lane.b32.xlu0 %v546, 104
      %v647 = vpop.permute.xlu0 %646
      %648 = vrot.lane.b32.xlu0 %v547, 104
      %v649 = vpop.permute.xlu0 %648
      %650 = vrot.lane.b32.xlu0 %v548, 104
      %v651 = vpop.permute.xlu0 %650
      %652 = vrot.lane.b32.xlu0 %v549, 104
      %v653 = vpop.permute.xlu0 %652
      %654 = vrot.lane.b32.xlu0 %v550, 104
      %v655 = vpop.permute.xlu0 %654
      %656 = vrot.lane.b32.xlu0 %v551, 104
      %v657 = vpop.permute.xlu0 %656
      %658 = vrot.lane.b32.xlu0 %v552, 104
      %v659 = vpop.permute.xlu0 %658
      %660 = vrot.lane.b32.xlu0 %v553, 104
      %v661 = vpop.permute.xlu0 %660
      %662 = vrot.lane.b32.xlu0 %v554, 104
      %v663 = vpop.permute.xlu0 %662
      %664 = vrot.lane.b32.xlu0 %v555, 104
      %v665 = vpop.permute.xlu0 %664
      %666 = vrot.lane.b32.xlu0 %v556, 104
      %v667 = vpop.permute.xlu0 %666
      %668 = vrot.lane.b32.xlu0 %v557, 104
      %v669 = vpop.permute.xlu0 %668
      %v670 = vunpack.c.l.b16 %v542
      %v671 = vunpack.c.l.b16 %v543
      %v672 = vpack.c.b16 %v671, %v670
      %673 = vrot.lane.b32.xlu0 %v672, 96
      %v674 = vpop.permute.xlu0 %673
      %vm675 = vcmask 64512
      %v677 = vsel %vm675, %v672, 0
      %v680 = vsel %vm675, %v674, 0
      %682 = vmatpush.bf16.xpose.msra.mxu0 0
      %683 = vmatpush.bf16.xpose.msra.mxu0 0
      %684 = vmatpush.bf16.xpose.msra.mxu0 0
      %685 = vmatpush.bf16.xpose.msra.mxu0 0
      %686 = vmatpush.bf16.xpose.msra.mxu0 0
      %687 = vmatpush.bf16.xpose.msra.mxu0 0
      %688 = vmatpush.bf16.xpose.msra.mxu0 0
      %689 = vmatpush.bf16.xpose.msra.mxu0 %v680
      %690 = vmatmul.bf16.gmra.mxu0 %v677
      %v691 = vpop.f32.mrf.mxu0
      %v692 = vadd.f32 0.0, %v691
      %v693 = vpop.f32.mrf.mxu0
      %v694 = vadd.f32 0.0, %v693
      %695 = vdwg.mxu0
      %v696 = vunpack.c.l.b16 %v544
      %v697 = vunpack.c.l.b16 %v545
      %v698 = vpack.c.b16 %v697, %v696
      %699 = vrot.lane.b32.xlu0 %v698, 96
      %v700 = vpop.permute.xlu0 %699
      %v702 = vsel %vm675, %v698, 0
      %v705 = vsel %vm675, %v700, 0
      %707 = vmatpush.bf16.xpose.msra.mxu0 0
      %708 = vmatpush.bf16.xpose.msra.mxu0 0
      %709 = vmatpush.bf16.xpose.msra.mxu0 0
      %710 = vmatpush.bf16.xpose.msra.mxu0 0
      %711 = vmatpush.bf16.xpose.msra.mxu0 0
      %712 = vmatpush.bf16.xpose.msra.mxu0 0
      %713 = vmatpush.bf16.xpose.msra.mxu0 0
      %714 = vmatpush.bf16.xpose.msra.mxu0 %v705
      %715 = vmatmul.bf16.gmra.mxu0 %v702
      %v716 = vpop.f32.mrf.mxu0
      %v717 = vadd.f32 0.0, %v716
      %v718 = vpop.f32.mrf.mxu0
      %v719 = vadd.f32 0.0, %v718
      %720 = vdwg.mxu0
      %v721 = vunpack.c.l.b16 %v546
      %v722 = vunpack.c.l.b16 %v547
      %v723 = vpack.c.b16 %v722, %v721
      %724 = vrot.lane.b32.xlu0 %v723, 96
      %v725 = vpop.permute.xlu0 %724
      %v727 = vsel %vm675, %v723, 0
      %v730 = vsel %vm675, %v725, 0
      %732 = vmatpush.bf16.xpose.msra.mxu0 0
      %733 = vmatpush.bf16.xpose.msra.mxu0 0
      %734 = vmatpush.bf16.xpose.msra.mxu0 0
      %735 = vmatpush.bf16.xpose.msra.mxu0 0
      %736 = vmatpush.bf16.xpose.msra.mxu0 0
      %737 = vmatpush.bf16.xpose.msra.mxu0 0
      %738 = vmatpush.bf16.xpose.msra.mxu0 0
      %739 = vmatpush.bf16.xpose.msra.mxu0 %v730
      %740 = vmatmul.bf16.gmra.mxu0 %v727
      %v741 = vpop.f32.mrf.mxu0
      %v742 = vadd.f32 0.0, %v741
      %v743 = vpop.f32.mrf.mxu0
      %v744 = vadd.f32 0.0, %v743
      %745 = vdwg.mxu0
      %v746 = vunpack.c.l.b16 %v548
      %v747 = vunpack.c.l.b16 %v549
      %v748 = vpack.c.b16 %v747, %v746
      %749 = vrot.lane.b32.xlu0 %v748, 96
      %v750 = vpop.permute.xlu0 %749
      %v752 = vsel %vm675, %v748, 0
      %v755 = vsel %vm675, %v750, 0
      %757 = vmatpush.bf16.xpose.msra.mxu0 0
      %758 = vmatpush.bf16.xpose.msra.mxu0 0
      %759 = vmatpush.bf16.xpose.msra.mxu0 0
      %760 = vmatpush.bf16.xpose.msra.mxu0 0
      %761 = vmatpush.bf16.xpose.msra.mxu0 0
      %762 = vmatpush.bf16.xpose.msra.mxu0 0
      %763 = vmatpush.bf16.xpose.msra.mxu0 0
      %764 = vmatpush.bf16.xpose.msra.mxu0 %v755
      %765 = vmatmul.bf16.gmra.mxu0 %v752
      %v766 = vpop.f32.mrf.mxu0
      %v767 = vadd.f32 0.0, %v766
      %v768 = vpop.f32.mrf.mxu0
      %v769 = vadd.f32 0.0, %v768
      %770 = vdwg.mxu0
      %v771 = vunpack.c.l.b16 %v550
      %v772 = vunpack.c.l.b16 %v551
      %v773 = vpack.c.b16 %v772, %v771
      %774 = vrot.lane.b32.xlu0 %v773, 96
      %v775 = vpop.permute.xlu0 %774
      %v777 = vsel %vm675, %v773, 0
      %v780 = vsel %vm675, %v775, 0
      %782 = vmatpush.bf16.xpose.msra.mxu0 0
      %783 = vmatpush.bf16.xpose.msra.mxu0 0
      %784 = vmatpush.bf16.xpose.msra.mxu0 0
      %785 = vmatpush.bf16.xpose.msra.mxu0 0
      %786 = vmatpush.bf16.xpose.msra.mxu0 0
      %787 = vmatpush.bf16.xpose.msra.mxu0 0
      %788 = vmatpush.bf16.xpose.msra.mxu0 0
      %789 = vmatpush.bf16.xpose.msra.mxu0 %v780
      %790 = vmatmul.bf16.gmra.mxu0 %v777
      %v791 = vpop.f32.mrf.mxu0
      %v792 = vadd.f32 0.0, %v791
      %v793 = vpop.f32.mrf.mxu0
      %v794 = vadd.f32 0.0, %v793
      %795 = vdwg.mxu0
      %v796 = vunpack.c.l.b16 %v552
      %v797 = vunpack.c.l.b16 %v553
      %v798 = vpack.c.b16 %v797, %v796
      %799 = vrot.lane.b32.xlu0 %v798, 96
      %v800 = vpop.permute.xlu0 %799
      %v802 = vsel %vm675, %v798, 0
      %v805 = vsel %vm675, %v800, 0
      %807 = vmatpush.bf16.xpose.msra.mxu0 0
      %808 = vmatpush.bf16.xpose.msra.mxu0 0
      %809 = vmatpush.bf16.xpose.msra.mxu0 0
      %810 = vmatpush.bf16.xpose.msra.mxu0 0
      %811 = vmatpush.bf16.xpose.msra.mxu0 0
      %812 = vmatpush.bf16.xpose.msra.mxu0 0
      %813 = vmatpush.bf16.xpose.msra.mxu0 0
      %814 = vmatpush.bf16.xpose.msra.mxu0 %v805
      %815 = vmatmul.bf16.gmra.mxu0 %v802
      %v816 = vpop.f32.mrf.mxu0
      %v817 = vadd.f32 0.0, %v816
      %v818 = vpop.f32.mrf.mxu0
      %v819 = vadd.f32 0.0, %v818
      %820 = vdwg.mxu0
      %v821 = vunpack.c.l.b16 %v554
      %v822 = vunpack.c.l.b16 %v555
      %v823 = vpack.c.b16 %v822, %v821
      %824 = vrot.lane.b32.xlu0 %v823, 96
      %v825 = vpop.permute.xlu0 %824
      %v827 = vsel %vm675, %v823, 0
      %v830 = vsel %vm675, %v825, 0
      %832 = vmatpush.bf16.xpose.msra.mxu0 0
      %833 = vmatpush.bf16.xpose.msra.mxu0 0
      %834 = vmatpush.bf16.xpose.msra.mxu0 0
      %835 = vmatpush.bf16.xpose.msra.mxu0 0
      %836 = vmatpush.bf16.xpose.msra.mxu0 0
      %837 = vmatpush.bf16.xpose.msra.mxu0 0
      %838 = vmatpush.bf16.xpose.msra.mxu0 0
      %839 = vmatpush.bf16.xpose.msra.mxu0 %v830
      %840 = vmatmul.bf16.gmra.mxu0 %v827
      %v841 = vpop.f32.mrf.mxu0
      %v842 = vadd.f32 0.0, %v841
      %v843 = vpop.f32.mrf.mxu0
      %v844 = vadd.f32 0.0, %v843
      %845 = vdwg.mxu0
      %v846 = vunpack.c.l.b16 %v556
      %v847 = vunpack.c.l.b16 %v557
      %v848 = vpack.c.b16 %v847, %v846
      %849 = vrot.lane.b32.xlu0 %v848, 96
      %v850 = vpop.permute.xlu0 %849
      %v852 = vsel %vm675, %v848, 0
      %v855 = vsel %vm675, %v850, 0
      %857 = vmatpush.bf16.xpose.msra.mxu0 0
      %858 = vmatpush.bf16.xpose.msra.mxu0 0
      %859 = vmatpush.bf16.xpose.msra.mxu0 0
      %860 = vmatpush.bf16.xpose.msra.mxu0 0
      %861 = vmatpush.bf16.xpose.msra.mxu0 0
      %862 = vmatpush.bf16.xpose.msra.mxu0 0
      %863 = vmatpush.bf16.xpose.msra.mxu0 0
      %864 = vmatpush.bf16.xpose.msra.mxu0 %v855
      %865 = vmatmul.bf16.gmra.mxu0 %v852
      %v866 = vpop.f32.mrf.mxu0
      %v867 = vadd.f32 0.0, %v866
      %v868 = vpop.f32.mrf.mxu0
      %v869 = vadd.f32 0.0, %v868
      %870 = vdwg.mxu0
      %v871 = vunpack.c.l.b16 %v575
      %v872 = vunpack.c.l.b16 %v577
      %v873 = vpack.c.b16 %v872, %v871
      %874 = vrot.lane.b32.xlu0 %v873, 96
      %v875 = vpop.permute.xlu0 %874
      %v877 = vsel %vm675, %v873, 0
      %v880 = vsel %vm675, %v875, 0
      %882 = vmatpush.bf16.xpose.msra.mxu0 0
      %883 = vmatpush.bf16.xpose.msra.mxu0 0
      %884 = vmatpush.bf16.xpose.msra.mxu0 0
      %885 = vmatpush.bf16.xpose.msra.mxu0 0
      %886 = vmatpush.bf16.xpose.msra.mxu0 0
      %887 = vmatpush.bf16.xpose.msra.mxu0 0
      %888 = vmatpush.bf16.xpose.msra.mxu0 0
      %889 = vmatpush.bf16.xpose.msra.mxu0 %v880
      %890 = vmatmul.bf16.gmra.mxu0 %v877
      %v891 = vpop.f32.mrf.mxu0
      %v892 = vadd.f32 0.0, %v891
      %v893 = vpop.f32.mrf.mxu0
      %v894 = vadd.f32 0.0, %v893
      %895 = vdwg.mxu0
      %v896 = vunpack.c.l.b16 %v579
      %v897 = vunpack.c.l.b16 %v581
      %v898 = vpack.c.b16 %v897, %v896
      %899 = vrot.lane.b32.xlu0 %v898, 96
      %v900 = vpop.permute.xlu0 %899
      %v902 = vsel %vm675, %v898, 0
      %v905 = vsel %vm675, %v900, 0
      %907 = vmatpush.bf16.xpose.msra.mxu0 0
      %908 = vmatpush.bf16.xpose.msra.mxu0 0
      %909 = vmatpush.bf16.xpose.msra.mxu0 0
      %910 = vmatpush.bf16.xpose.msra.mxu0 0
      %911 = vmatpush.bf16.xpose.msra.mxu0 0
      %912 = vmatpush.bf16.xpose.msra.mxu0 0
      %913 = vmatpush.bf16.xpose.msra.mxu0 0
      %914 = vmatpush.bf16.xpose.msra.mxu0 %v905
      %915 = vmatmul.bf16.gmra.mxu0 %v902
      %v916 = vpop.f32.mrf.mxu0
      %v917 = vadd.f32 0.0, %v916
      %v918 = vpop.f32.mrf.mxu0
      %v919 = vadd.f32 0.0, %v918
      %920 = vdwg.mxu0
      %v921 = vunpack.c.l.b16 %v583
      %v922 = vunpack.c.l.b16 %v585
      %v923 = vpack.c.b16 %v922, %v921
      %924 = vrot.lane.b32.xlu0 %v923, 96
      %v925 = vpop.permute.xlu0 %924
      %v927 = vsel %vm675, %v923, 0
      %v930 = vsel %vm675, %v925, 0
      %932 = vmatpush.bf16.xpose.msra.mxu0 0
      %933 = vmatpush.bf16.xpose.msra.mxu0 0
      %934 = vmatpush.bf16.xpose.msra.mxu0 0
      %935 = vmatpush.bf16.xpose.msra.mxu0 0
      %936 = vmatpush.bf16.xpose.msra.mxu0 0
      %937 = vmatpush.bf16.xpose.msra.mxu0 0
      %938 = vmatpush.bf16.xpose.msra.mxu0 0
      %939 = vmatpush.bf16.xpose.msra.mxu0 %v930
      %940 = vmatmul.bf16.gmra.mxu0 %v927
      %v941 = vpop.f32.mrf.mxu0
      %v942 = vadd.f32 0.0, %v941
      %v943 = vpop.f32.mrf.mxu0
      %v944 = vadd.f32 0.0, %v943
      %945 = vdwg.mxu0
      %v946 = vunpack.c.l.b16 %v587
      %v947 = vunpack.c.l.b16 %v589
      %v948 = vpack.c.b16 %v947, %v946
      %949 = vrot.lane.b32.xlu0 %v948, 96
      %v950 = vpop.permute.xlu0 %949
      %v952 = vsel %vm675, %v948, 0
      %v955 = vsel %vm675, %v950, 0
      %957 = vmatpush.bf16.xpose.msra.mxu0 0
      %958 = vmatpush.bf16.xpose.msra.mxu0 0
      %959 = vmatpush.bf16.xpose.msra.mxu0 0
      %960 = vmatpush.bf16.xpose.msra.mxu0 0
      %961 = vmatpush.bf16.xpose.msra.mxu0 0
      %962 = vmatpush.bf16.xpose.msra.mxu0 0
      %963 = vmatpush.bf16.xpose.msra.mxu0 0
      %964 = vmatpush.bf16.xpose.msra.mxu0 %v955
      %965 = vmatmul.bf16.gmra.mxu0 %v952
      %v966 = vpop.f32.mrf.mxu0
      %v967 = vadd.f32 0.0, %v966
      %v968 = vpop.f32.mrf.mxu0
      %v969 = vadd.f32 0.0, %v968
      %970 = vdwg.mxu0
      %v971 = vunpack.c.l.b16 %v591
      %v972 = vunpack.c.l.b16 %v593
      %v973 = vpack.c.b16 %v972, %v971
      %974 = vrot.lane.b32.xlu0 %v973, 96
      %v975 = vpop.permute.xlu0 %974
      %v977 = vsel %vm675, %v973, 0
      %v980 = vsel %vm675, %v975, 0
      %982 = vmatpush.bf16.xpose.msra.mxu0 0
      %983 = vmatpush.bf16.xpose.msra.mxu0 0
      %984 = vmatpush.bf16.xpose.msra.mxu0 0
      %985 = vmatpush.bf16.xpose.msra.mxu0 0
      %986 = vmatpush.bf16.xpose.msra.mxu0 0
      %987 = vmatpush.bf16.xpose.msra.mxu0 0
      %988 = vmatpush.bf16.xpose.msra.mxu0 0
      %989 = vmatpush.bf16.xpose.msra.mxu0 %v980
      %990 = vmatmul.bf16.gmra.mxu0 %v977
      %v991 = vpop.f32.mrf.mxu0
      %v992 = vadd.f32 0.0, %v991
      %v993 = vpop.f32.mrf.mxu0
      %v994 = vadd.f32 0.0, %v993
      %995 = vdwg.mxu0
      %v996 = vunpack.c.l.b16 %v595
      %v997 = vunpack.c.l.b16 %v597
      %v998 = vpack.c.b16 %v997, %v996
      %999 = vrot.lane.b32.xlu0 %v998, 96
      %v1000 = vpop.permute.xlu0 %999
      %v1002 = vsel %vm675, %v998, 0
      %v1005 = vsel %vm675, %v1000, 0
      %1007 = vmatpush.bf16.xpose.msra.mxu0 0
      %1008 = vmatpush.bf16.xpose.msra.mxu0 0
      %1009 = vmatpush.bf16.xpose.msra.mxu0 0
      %1010 = vmatpush.bf16.xpose.msra.mxu0 0
      %1011 = vmatpush.bf16.xpose.msra.mxu0 0
      %1012 = vmatpush.bf16.xpose.msra.mxu0 0
      %1013 = vmatpush.bf16.xpose.msra.mxu0 0
      %1014 = vmatpush.bf16.xpose.msra.mxu0 %v1005
      %1015 = vmatmul.bf16.gmra.mxu0 %v1002
      %v1016 = vpop.f32.mrf.mxu0
      %v1017 = vadd.f32 0.0, %v1016
      %v1018 = vpop.f32.mrf.mxu0
      %v1019 = vadd.f32 0.0, %v1018
      %1020 = vdwg.mxu0
      %v1021 = vunpack.c.l.b16 %v599
      %v1022 = vunpack.c.l.b16 %v601
      %v1023 = vpack.c.b16 %v1022, %v1021
      %1024 = vrot.lane.b32.xlu0 %v1023, 96
      %v1025 = vpop.permute.xlu0 %1024
      %v1027 = vsel %vm675, %v1023, 0
      %v1030 = vsel %vm675, %v1025, 0
      %1032 = vmatpush.bf16.xpose.msra.mxu0 0
      %1033 = vmatpush.bf16.xpose.msra.mxu0 0
      %1034 = vmatpush.bf16.xpose.msra.mxu0 0
      %1035 = vmatpush.bf16.xpose.msra.mxu0 0
      %1036 = vmatpush.bf16.xpose.msra.mxu0 0
      %1037 = vmatpush.bf16.xpose.msra.mxu0 0
      %1038 = vmatpush.bf16.xpose.msra.mxu0 0
      %1039 = vmatpush.bf16.xpose.msra.mxu0 %v1030
      %1040 = vmatmul.bf16.gmra.mxu0 %v1027
      %v1041 = vpop.f32.mrf.mxu0
      %v1042 = vadd.f32 0.0, %v1041
      %v1043 = vpop.f32.mrf.mxu0
      %v1044 = vadd.f32 0.0, %v1043
      %1045 = vdwg.mxu0
      %v1046 = vunpack.c.l.b16 %v603
      %v1047 = vunpack.c.l.b16 %v605
      %v1048 = vpack.c.b16 %v1047, %v1046
      %1049 = vrot.lane.b32.xlu0 %v1048, 96
      %v1050 = vpop.permute.xlu0 %1049
      %v1052 = vsel %vm675, %v1048, 0
      %v1055 = vsel %vm675, %v1050, 0
      %1057 = vmatpush.bf16.xpose.msra.mxu0 0
      %1058 = vmatpush.bf16.xpose.msra.mxu0 0
      %1059 = vmatpush.bf16.xpose.msra.mxu0 0
      %1060 = vmatpush.bf16.xpose.msra.mxu0 0
      %1061 = vmatpush.bf16.xpose.msra.mxu0 0
      %1062 = vmatpush.bf16.xpose.msra.mxu0 0
      %1063 = vmatpush.bf16.xpose.msra.mxu0 0
      %1064 = vmatpush.bf16.xpose.msra.mxu0 %v1055
      %1065 = vmatmul.bf16.gmra.mxu0 %v1052
      %v1066 = vpop.f32.mrf.mxu0
      %v1067 = vadd.f32 0.0, %v1066
      %v1068 = vpop.f32.mrf.mxu0
      %v1069 = vadd.f32 0.0, %v1068
      %1070 = vdwg.mxu0
      %v1071 = vunpack.c.l.b16 %v607
      %v1072 = vunpack.c.l.b16 %v609
      %v1073 = vpack.c.b16 %v1072, %v1071
      %1074 = vrot.lane.b32.xlu0 %v1073, 96
      %v1075 = vpop.permute.xlu0 %1074
      %v1077 = vsel %vm675, %v1073, 0
      %v1080 = vsel %vm675, %v1075, 0
      %1082 = vmatpush.bf16.xpose.msra.mxu0 0
      %1083 = vmatpush.bf16.xpose.msra.mxu0 0
      %1084 = vmatpush.bf16.xpose.msra.mxu0 0
      %1085 = vmatpush.bf16.xpose.msra.mxu0 0
      %1086 = vmatpush.bf16.xpose.msra.mxu0 0
      %1087 = vmatpush.bf16.xpose.msra.mxu0 0
      %1088 = vmatpush.bf16.xpose.msra.mxu0 0
      %1089 = vmatpush.bf16.xpose.msra.mxu0 %v1080
      %1090 = vmatmul.bf16.gmra.mxu0 %v1077
      %v1091 = vpop.f32.mrf.mxu0
      %v1092 = vadd.f32 0.0, %v1091
      %v1093 = vpop.f32.mrf.mxu0
      %v1094 = vadd.f32 0.0, %v1093
      %1095 = vdwg.mxu0
      %v1096 = vunpack.c.l.b16 %v611
      %v1097 = vunpack.c.l.b16 %v613
      %v1098 = vpack.c.b16 %v1097, %v1096
      %1099 = vrot.lane.b32.xlu0 %v1098, 96
      %v1100 = vpop.permute.xlu0 %1099
      %v1102 = vsel %vm675, %v1098, 0
      %v1105 = vsel %vm675, %v1100, 0
      %1107 = vmatpush.bf16.xpose.msra.mxu0 0
      %1108 = vmatpush.bf16.xpose.msra.mxu0 0
      %1109 = vmatpush.bf16.xpose.msra.mxu0 0
      %1110 = vmatpush.bf16.xpose.msra.mxu0 0
      %1111 = vmatpush.bf16.xpose.msra.mxu0 0
      %1112 = vmatpush.bf16.xpose.msra.mxu0 0
      %1113 = vmatpush.bf16.xpose.msra.mxu0 0
      %1114 = vmatpush.bf16.xpose.msra.mxu0 %v1105
      %1115 = vmatmul.bf16.gmra.mxu0 %v1102
      %v1116 = vpop.f32.mrf.mxu0
      %v1117 = vadd.f32 0.0, %v1116
      %v1118 = vpop.f32.mrf.mxu0
      %v1119 = vadd.f32 0.0, %v1118
      %1120 = vdwg.mxu0
      %v1121 = vunpack.c.l.b16 %v615
      %v1122 = vunpack.c.l.b16 %v617
      %v1123 = vpack.c.b16 %v1122, %v1121
      %1124 = vrot.lane.b32.xlu0 %v1123, 96
      %v1125 = vpop.permute.xlu0 %1124
      %v1127 = vsel %vm675, %v1123, 0
      %v1130 = vsel %vm675, %v1125, 0
      %1132 = vmatpush.bf16.xpose.msra.mxu0 0
      %1133 = vmatpush.bf16.xpose.msra.mxu0 0
      %1134 = vmatpush.bf16.xpose.msra.mxu0 0
      %1135 = vmatpush.bf16.xpose.msra.mxu0 0
      %1136 = vmatpush.bf16.xpose.msra.mxu0 0
      %1137 = vmatpush.bf16.xpose.msra.mxu0 0
      %1138 = vmatpush.bf16.xpose.msra.mxu0 0
      %1139 = vmatpush.bf16.xpose.msra.mxu0 %v1130
      %1140 = vmatmul.bf16.gmra.mxu0 %v1127
      %v1141 = vpop.f32.mrf.mxu0
      %v1142 = vadd.f32 0.0, %v1141
      %v1143 = vpop.f32.mrf.mxu0
      %v1144 = vadd.f32 0.0, %v1143
      %1145 = vdwg.mxu0
      %v1146 = vunpack.c.l.b16 %v619
      %v1147 = vunpack.c.l.b16 %v621
      %v1148 = vpack.c.b16 %v1147, %v1146
      %1149 = vrot.lane.b32.xlu0 %v1148, 96
      %v1150 = vpop.permute.xlu0 %1149
      %v1152 = vsel %vm675, %v1148, 0
      %v1155 = vsel %vm675, %v1150, 0
      %1157 = vmatpush.bf16.xpose.msra.mxu0 0
      %1158 = vmatpush.bf16.xpose.msra.mxu0 0
      %1159 = vmatpush.bf16.xpose.msra.mxu0 0
      %1160 = vmatpush.bf16.xpose.msra.mxu0 0
      %1161 = vmatpush.bf16.xpose.msra.mxu0 0
      %1162 = vmatpush.bf16.xpose.msra.mxu0 0
      %1163 = vmatpush.bf16.xpose.msra.mxu0 0
      %1164 = vmatpush.bf16.xpose.msra.mxu0 %v1155
      %1165 = vmatmul.bf16.gmra.mxu0 %v1152
      %v1166 = vpop.f32.mrf.mxu0
      %v1167 = vadd.f32 0.0, %v1166
      %v1168 = vpop.f32.mrf.mxu0
      %v1169 = vadd.f32 0.0, %v1168
      %1170 = vdwg.mxu0
      %v1171 = vunpack.c.l.b16 %v623
      %v1172 = vunpack.c.l.b16 %v625
      %v1173 = vpack.c.b16 %v1172, %v1171
      %1174 = vrot.lane.b32.xlu0 %v1173, 96
      %v1175 = vpop.permute.xlu0 %1174
      %v1177 = vsel %vm675, %v1173, 0
      %v1180 = vsel %vm675, %v1175, 0
      %1182 = vmatpush.bf16.xpose.msra.mxu0 0
      %1183 = vmatpush.bf16.xpose.msra.mxu0 0
      %1184 = vmatpush.bf16.xpose.msra.mxu0 0
      %1185 = vmatpush.bf16.xpose.msra.mxu0 0
      %1186 = vmatpush.bf16.xpose.msra.mxu0 0
      %1187 = vmatpush.bf16.xpose.msra.mxu0 0
      %1188 = vmatpush.bf16.xpose.msra.mxu0 0
      %1189 = vmatpush.bf16.xpose.msra.mxu0 %v1180
      %1190 = vmatmul.bf16.gmra.mxu0 %v1177
      %v1191 = vpop.f32.mrf.mxu0
      %v1192 = vadd.f32 0.0, %v1191
      %v1193 = vpop.f32.mrf.mxu0
      %v1194 = vadd.f32 0.0, %v1193
      %1195 = vdwg.mxu0
      %v1196 = vunpack.c.l.b16 %v627
      %v1197 = vunpack.c.l.b16 %v629
      %v1198 = vpack.c.b16 %v1197, %v1196
      %1199 = vrot.lane.b32.xlu0 %v1198, 96
      %v1200 = vpop.permute.xlu0 %1199
      %v1202 = vsel %vm675, %v1198, 0
      %v1205 = vsel %vm675, %v1200, 0
      %1207 = vmatpush.bf16.xpose.msra.mxu0 0
      %1208 = vmatpush.bf16.xpose.msra.mxu0 0
      %1209 = vmatpush.bf16.xpose.msra.mxu0 0
      %1210 = vmatpush.bf16.xpose.msra.mxu0 0
      %1211 = vmatpush.bf16.xpose.msra.mxu0 0
      %1212 = vmatpush.bf16.xpose.msra.mxu0 0
      %1213 = vmatpush.bf16.xpose.msra.mxu0 0
      %1214 = vmatpush.bf16.xpose.msra.mxu0 %v1205
      %1215 = vmatmul.bf16.gmra.mxu0 %v1202
      %v1216 = vpop.f32.mrf.mxu0
      %v1217 = vadd.f32 0.0, %v1216
      %v1218 = vpop.f32.mrf.mxu0
      %v1219 = vadd.f32 0.0, %v1218
      %1220 = vdwg.mxu0
      %v1221 = vunpack.c.l.b16 %v631
      %v1222 = vunpack.c.l.b16 %v633
      %v1223 = vpack.c.b16 %v1222, %v1221
      %1224 = vrot.lane.b32.xlu0 %v1223, 96
      %v1225 = vpop.permute.xlu0 %1224
      %v1227 = vsel %vm675, %v1223, 0
      %v1230 = vsel %vm675, %v1225, 0
      %1232 = vmatpush.bf16.xpose.msra.mxu0 0
      %1233 = vmatpush.bf16.xpose.msra.mxu0 0
      %1234 = vmatpush.bf16.xpose.msra.mxu0 0
      %1235 = vmatpush.bf16.xpose.msra.mxu0 0
      %1236 = vmatpush.bf16.xpose.msra.mxu0 0
      %1237 = vmatpush.bf16.xpose.msra.mxu0 0
      %1238 = vmatpush.bf16.xpose.msra.mxu0 0
      %1239 = vmatpush.bf16.xpose.msra.mxu0 %v1230
      %1240 = vmatmul.bf16.gmra.mxu0 %v1227
      %v1241 = vpop.f32.mrf.mxu0
      %v1242 = vadd.f32 0.0, %v1241
      %v1243 = vpop.f32.mrf.mxu0
      %v1244 = vadd.f32 0.0, %v1243
      %1245 = vdwg.mxu0
      %v1246 = vunpack.c.l.b16 %v635
      %v1247 = vunpack.c.l.b16 %v637
      %v1248 = vpack.c.b16 %v1247, %v1246
      %1249 = vrot.lane.b32.xlu0 %v1248, 96
      %v1250 = vpop.permute.xlu0 %1249
      %v1252 = vsel %vm675, %v1248, 0
      %v1255 = vsel %vm675, %v1250, 0
      %1257 = vmatpush.bf16.xpose.msra.mxu0 0
      %1258 = vmatpush.bf16.xpose.msra.mxu0 0
      %1259 = vmatpush.bf16.xpose.msra.mxu0 0
      %1260 = vmatpush.bf16.xpose.msra.mxu0 0
      %1261 = vmatpush.bf16.xpose.msra.mxu0 0
      %1262 = vmatpush.bf16.xpose.msra.mxu0 0
      %1263 = vmatpush.bf16.xpose.msra.mxu0 0
      %1264 = vmatpush.bf16.xpose.msra.mxu0 %v1255
      %1265 = vmatmul.bf16.gmra.mxu0 %v1252
      %v1266 = vpop.f32.mrf.mxu0
      %v1267 = vadd.f32 0.0, %v1266
      %v1268 = vpop.f32.mrf.mxu0
      %v1269 = vadd.f32 0.0, %v1268
      %1270 = vdwg.mxu0
      %v1271 = vunpack.c.l.b16 %v639
      %v1272 = vunpack.c.l.b16 %v641
      %v1273 = vpack.c.b16 %v1272, %v1271
      %1274 = vrot.lane.b32.xlu0 %v1273, 96
      %v1275 = vpop.permute.xlu0 %1274
      %v1277 = vsel %vm675, %v1273, 0
      %v1280 = vsel %vm675, %v1275, 0
      %1282 = vmatpush.bf16.xpose.msra.mxu0 0
      %1283 = vmatpush.bf16.xpose.msra.mxu0 0
      %1284 = vmatpush.bf16.xpose.msra.mxu0 0
      %1285 = vmatpush.bf16.xpose.msra.mxu0 0
      %1286 = vmatpush.bf16.xpose.msra.mxu0 0
      %1287 = vmatpush.bf16.xpose.msra.mxu0 0
      %1288 = vmatpush.bf16.xpose.msra.mxu0 0
      %1289 = vmatpush.bf16.xpose.msra.mxu0 %v1280
      %1290 = vmatmul.bf16.gmra.mxu0 %v1277
      %v1291 = vpop.f32.mrf.mxu0
      %v1292 = vadd.f32 0.0, %v1291
      %v1293 = vpop.f32.mrf.mxu0
      %v1294 = vadd.f32 0.0, %v1293
      %1295 = vdwg.mxu0
      %v1296 = vunpack.c.l.b16 %v643
      %v1297 = vunpack.c.l.b16 %v645
      %v1298 = vpack.c.b16 %v1297, %v1296
      %1299 = vrot.lane.b32.xlu0 %v1298, 96
      %v1300 = vpop.permute.xlu0 %1299
      %v1302 = vsel %vm675, %v1298, 0
      %v1305 = vsel %vm675, %v1300, 0
      %1307 = vmatpush.bf16.xpose.msra.mxu0 0
      %1308 = vmatpush.bf16.xpose.msra.mxu0 0
      %1309 = vmatpush.bf16.xpose.msra.mxu0 0
      %1310 = vmatpush.bf16.xpose.msra.mxu0 0
      %1311 = vmatpush.bf16.xpose.msra.mxu0 0
      %1312 = vmatpush.bf16.xpose.msra.mxu0 0
      %1313 = vmatpush.bf16.xpose.msra.mxu0 0
      %1314 = vmatpush.bf16.xpose.msra.mxu0 %v1305
      %1315 = vmatmul.bf16.gmra.mxu0 %v1302
      %v1316 = vpop.f32.mrf.mxu0
      %v1317 = vadd.f32 0.0, %v1316
      %v1318 = vpop.f32.mrf.mxu0
      %v1319 = vadd.f32 0.0, %v1318
      %1320 = vdwg.mxu0
      %v1321 = vunpack.c.l.b16 %v647
      %v1322 = vunpack.c.l.b16 %v649
      %v1323 = vpack.c.b16 %v1322, %v1321
      %1324 = vrot.lane.b32.xlu0 %v1323, 96
      %v1325 = vpop.permute.xlu0 %1324
      %v1327 = vsel %vm675, %v1323, 0
      %v1330 = vsel %vm675, %v1325, 0
      %1332 = vmatpush.bf16.xpose.msra.mxu0 0
      %1333 = vmatpush.bf16.xpose.msra.mxu0 0
      %1334 = vmatpush.bf16.xpose.msra.mxu0 0
      %1335 = vmatpush.bf16.xpose.msra.mxu0 0
      %1336 = vmatpush.bf16.xpose.msra.mxu0 0
      %1337 = vmatpush.bf16.xpose.msra.mxu0 0
      %1338 = vmatpush.bf16.xpose.msra.mxu0 0
      %1339 = vmatpush.bf16.xpose.msra.mxu0 %v1330
      %1340 = vmatmul.bf16.gmra.mxu0 %v1327
      %v1341 = vpop.f32.mrf.mxu0
      %v1342 = vadd.f32 0.0, %v1341
      %v1343 = vpop.f32.mrf.mxu0
      %v1344 = vadd.f32 0.0, %v1343
      %1345 = vdwg.mxu0
      %v1346 = vunpack.c.l.b16 %v651
      %v1347 = vunpack.c.l.b16 %v653
      %v1348 = vpack.c.b16 %v1347, %v1346
      %1349 = vrot.lane.b32.xlu0 %v1348, 96
      %v1350 = vpop.permute.xlu0 %1349
      %v1352 = vsel %vm675, %v1348, 0
      %v1355 = vsel %vm675, %v1350, 0
      %1357 = vmatpush.bf16.xpose.msra.mxu0 0
      %1358 = vmatpush.bf16.xpose.msra.mxu0 0
      %1359 = vmatpush.bf16.xpose.msra.mxu0 0
      %1360 = vmatpush.bf16.xpose.msra.mxu0 0
      %1361 = vmatpush.bf16.xpose.msra.mxu0 0
      %1362 = vmatpush.bf16.xpose.msra.mxu0 0
      %1363 = vmatpush.bf16.xpose.msra.mxu0 0
      %1364 = vmatpush.bf16.xpose.msra.mxu0 %v1355
      %1365 = vmatmul.bf16.gmra.mxu0 %v1352
      %v1366 = vpop.f32.mrf.mxu0
      %v1367 = vadd.f32 0.0, %v1366
      %v1368 = vpop.f32.mrf.mxu0
      %v1369 = vadd.f32 0.0, %v1368
      %1370 = vdwg.mxu0
      %v1371 = vunpack.c.l.b16 %v655
      %v1372 = vunpack.c.l.b16 %v657
      %v1373 = vpack.c.b16 %v1372, %v1371
      %1374 = vrot.lane.b32.xlu0 %v1373, 96
      %v1375 = vpop.permute.xlu0 %1374
      %v1377 = vsel %vm675, %v1373, 0
      %v1380 = vsel %vm675, %v1375, 0
      %1382 = vmatpush.bf16.xpose.msra.mxu0 0
      %1383 = vmatpush.bf16.xpose.msra.mxu0 0
      %1384 = vmatpush.bf16.xpose.msra.mxu0 0
      %1385 = vmatpush.bf16.xpose.msra.mxu0 0
      %1386 = vmatpush.bf16.xpose.msra.mxu0 0
      %1387 = vmatpush.bf16.xpose.msra.mxu0 0
      %1388 = vmatpush.bf16.xpose.msra.mxu0 0
      %1389 = vmatpush.bf16.xpose.msra.mxu0 %v1380
      %1390 = vmatmul.bf16.gmra.mxu0 %v1377
      %v1391 = vpop.f32.mrf.mxu0
      %v1392 = vadd.f32 0.0, %v1391
      %v1393 = vpop.f32.mrf.mxu0
      %v1394 = vadd.f32 0.0, %v1393
      %1395 = vdwg.mxu0
      %v1396 = vunpack.c.l.b16 %v659
      %v1397 = vunpack.c.l.b16 %v661
      %v1398 = vpack.c.b16 %v1397, %v1396
      %1399 = vrot.lane.b32.xlu0 %v1398, 96
      %v1400 = vpop.permute.xlu0 %1399
      %v1402 = vsel %vm675, %v1398, 0
      %v1405 = vsel %vm675, %v1400, 0
      %1407 = vmatpush.bf16.xpose.msra.mxu0 0
      %1408 = vmatpush.bf16.xpose.msra.mxu0 0
      %1409 = vmatpush.bf16.xpose.msra.mxu0 0
      %1410 = vmatpush.bf16.xpose.msra.mxu0 0
      %1411 = vmatpush.bf16.xpose.msra.mxu0 0
      %1412 = vmatpush.bf16.xpose.msra.mxu0 0
      %1413 = vmatpush.bf16.xpose.msra.mxu0 0
      %1414 = vmatpush.bf16.xpose.msra.mxu0 %v1405
      %1415 = vmatmul.bf16.gmra.mxu0 %v1402
      %v1416 = vpop.f32.mrf.mxu0
      %v1417 = vadd.f32 0.0, %v1416
      %v1418 = vpop.f32.mrf.mxu0
      %v1419 = vadd.f32 0.0, %v1418
      %1420 = vdwg.mxu0
      %v1421 = vunpack.c.l.b16 %v663
      %v1422 = vunpack.c.l.b16 %v665
      %v1423 = vpack.c.b16 %v1422, %v1421
      %1424 = vrot.lane.b32.xlu0 %v1423, 96
      %v1425 = vpop.permute.xlu0 %1424
      %v1427 = vsel %vm675, %v1423, 0
      %v1430 = vsel %vm675, %v1425, 0
      %1432 = vmatpush.bf16.xpose.msra.mxu0 0
      %1433 = vmatpush.bf16.xpose.msra.mxu0 0
      %1434 = vmatpush.bf16.xpose.msra.mxu0 0
      %1435 = vmatpush.bf16.xpose.msra.mxu0 0
      %1436 = vmatpush.bf16.xpose.msra.mxu0 0
      %1437 = vmatpush.bf16.xpose.msra.mxu0 0
      %1438 = vmatpush.bf16.xpose.msra.mxu0 0
      %1439 = vmatpush.bf16.xpose.msra.mxu0 %v1430
      %1440 = vmatmul.bf16.gmra.mxu0 %v1427
      %v1441 = vpop.f32.mrf.mxu0
      %v1442 = vadd.f32 0.0, %v1441
      %v1443 = vpop.f32.mrf.mxu0
      %v1444 = vadd.f32 0.0, %v1443
      %1445 = vdwg.mxu0
      %v1446 = vunpack.c.l.b16 %v667
      %v1447 = vunpack.c.l.b16 %v669
      %v1448 = vpack.c.b16 %v1447, %v1446
      %1449 = vrot.lane.b32.xlu0 %v1448, 96
      %v1450 = vpop.permute.xlu0 %1449
      %v1452 = vsel %vm675, %v1448, 0
      %v1455 = vsel %vm675, %v1450, 0
      %1457 = vmatpush.bf16.xpose.msra.mxu0 0
      %1458 = vmatpush.bf16.xpose.msra.mxu0 0
      %1459 = vmatpush.bf16.xpose.msra.mxu0 0
      %1460 = vmatpush.bf16.xpose.msra.mxu0 0
      %1461 = vmatpush.bf16.xpose.msra.mxu0 0
      %1462 = vmatpush.bf16.xpose.msra.mxu0 0
      %1463 = vmatpush.bf16.xpose.msra.mxu0 0
      %1464 = vmatpush.bf16.xpose.msra.mxu0 %v1455
      %1465 = vmatmul.bf16.gmra.mxu0 %v1452
      %v1466 = vpop.f32.mrf.mxu0
      %v1467 = vadd.f32 0.0, %v1466
      %v1468 = vpop.f32.mrf.mxu0
      %v1469 = vadd.f32 0.0, %v1468
      %1470 = vdwg.mxu0
      %v1471 = vld [vmem:[%s5] sm:$0xf]
      %v1472 = vld [vmem:[%s5 + $0x4] sm:$0xf]
      %v1473 = vld [vmem:[%s5 + $0x8] sm:$0xf]
      %v1474 = vld [vmem:[%s5 + $0xc] sm:$0xf]
      %v1475 = vld [vmem:[%s5 + $0x10] sm:$0xf]
      %v1476 = vld [vmem:[%s5 + $0x14] sm:$0xf]
      %v1477 = vld [vmem:[%s5 + $0x18] sm:$0xf]
      %v1478 = vld [vmem:[%s5 + $0x1c] sm:$0xf]
      %v1479 = vunpack.c.l.bf16 %v1471
      %v1480 = vunpack.c.l.bf16 %v1472
      %v1481 = vunpack.c.l.bf16 %v1473
      %v1482 = vunpack.c.l.bf16 %v1474
      %v1483 = vunpack.c.l.bf16 %v1475
      %v1484 = vunpack.c.l.bf16 %v1476
      %v1485 = vunpack.c.l.bf16 %v1477
      %v1486 = vunpack.c.l.bf16 %v1478
      %v1487 = vadd.f32 %v692, %v1479
      %v1488 = vadd.f32 %v694, %v1480
      %v1489 = vadd.f32 %v717, %v1479
      %v1490 = vadd.f32 %v719, %v1480
      %v1491 = vadd.f32 %v742, %v1479
      %v1492 = vadd.f32 %v744, %v1480
      %v1493 = vadd.f32 %v767, %v1479
      %v1494 = vadd.f32 %v769, %v1480
      %v1495 = vadd.f32 %v792, %v1479
      %v1496 = vadd.f32 %v794, %v1480
      %v1497 = vadd.f32 %v817, %v1479
      %v1498 = vadd.f32 %v819, %v1480
      %v1499 = vadd.f32 %v842, %v1479
      %v1500 = vadd.f32 %v844, %v1480
      %v1501 = vadd.f32 %v867, %v1479
      %v1502 = vadd.f32 %v869, %v1480
      %v1503 = vadd.f32 %v892, %v1481
      %v1504 = vadd.f32 %v894, %v1482
      %v1505 = vadd.f32 %v917, %v1481
      %v1506 = vadd.f32 %v919, %v1482
      %v1507 = vadd.f32 %v942, %v1481
      %v1508 = vadd.f32 %v944, %v1482
      %v1509 = vadd.f32 %v967, %v1481
      %v1510 = vadd.f32 %v969, %v1482
      %v1511 = vadd.f32 %v992, %v1481
      %v1512 = vadd.f32 %v994, %v1482
      %v1513 = vadd.f32 %v1017, %v1481
      %v1514 = vadd.f32 %v1019, %v1482
      %v1515 = vadd.f32 %v1042, %v1481
      %v1516 = vadd.f32 %v1044, %v1482
      %v1517 = vadd.f32 %v1067, %v1481
      %v1518 = vadd.f32 %v1069, %v1482
      %v1519 = vadd.f32 %v1092, %v1483
      %v1520 = vadd.f32 %v1094, %v1484
      %v1521 = vadd.f32 %v1117, %v1483
      %v1522 = vadd.f32 %v1119, %v1484
      %v1523 = vadd.f32 %v1142, %v1483
      %v1524 = vadd.f32 %v1144, %v1484
      %v1525 = vadd.f32 %v1167, %v1483
      %v1526 = vadd.f32 %v1169, %v1484
      %v1527 = vadd.f32 %v1192, %v1483
      %v1528 = vadd.f32 %v1194, %v1484
      %v1529 = vadd.f32 %v1217, %v1483
      %v1530 = vadd.f32 %v1219, %v1484
      %v1531 = vadd.f32 %v1242, %v1483
      %v1532 = vadd.f32 %v1244, %v1484
      %v1533 = vadd.f32 %v1267, %v1483
      %v1534 = vadd.f32 %v1269, %v1484
      %v1535 = vadd.f32 %v1292, %v1485
      %v1536 = vadd.f32 %v1294, %v1486
      %v1537 = vadd.f32 %v1317, %v1485
      %v1538 = vadd.f32 %v1319, %v1486
      %v1539 = vadd.f32 %v1342, %v1485
      %v1540 = vadd.f32 %v1344, %v1486
      %v1541 = vadd.f32 %v1367, %v1485
      %v1542 = vadd.f32 %v1369, %v1486
      %v1543 = vadd.f32 %v1392, %v1485
      %v1544 = vadd.f32 %v1394, %v1486
      %v1545 = vadd.f32 %v1417, %v1485
      %v1546 = vadd.f32 %v1419, %v1486
      %v1547 = vadd.f32 %v1442, %v1485
      %v1548 = vadd.f32 %v1444, %v1486
      %v1549 = vadd.f32 %v1467, %v1485
      %v1550 = vadd.f32 %v1469, %v1486
      %v1551 = vld [vmem:[%s371] sm:$0xf]
      %v1552 = vld [vmem:[%s371 + $0x4] sm:$0xf]
      %v1553 = vld [vmem:[%s371 + $0x8] sm:$0xf]
      %v1554 = vld [vmem:[%s371 + $0xc] sm:$0xf]
      %v1555 = vld [vmem:[%s371 + $0x10] sm:$0xf]
      %v1556 = vld [vmem:[%s371 + $0x14] sm:$0xf]
      %v1557 = vld [vmem:[%s371 + $0x18] sm:$0xf]
      %v1558 = vld [vmem:[%s371 + $0x1c] sm:$0xf]
      %v1559 = vld [vmem:[%s371 + $0x20] sm:$0xf]
      %v1560 = vld [vmem:[%s371 + $0x24] sm:$0xf]
      %v1561 = vld [vmem:[%s371 + $0x28] sm:$0xf]
      %v1562 = vld [vmem:[%s371 + $0x2c] sm:$0xf]
      %v1563 = vld [vmem:[%s371 + $0x30] sm:$0xf]
      %v1564 = vld [vmem:[%s371 + $0x34] sm:$0xf]
      %v1565 = vld [vmem:[%s371 + $0x38] sm:$0xf]
      %v1566 = vld [vmem:[%s371 + $0x3c] sm:$0xf]
      %v1567 = vunpack.c.l.bf16 %v1551
      %v1568 = vunpack.c.l.bf16 %v1552
      %v1569 = vunpack.c.l.bf16 %v1553
      %v1570 = vunpack.c.l.bf16 %v1554
      %v1571 = vunpack.c.l.bf16 %v1555
      %v1572 = vunpack.c.l.bf16 %v1556
      %v1573 = vunpack.c.l.bf16 %v1557
      %v1574 = vunpack.c.l.bf16 %v1558
      %v1575 = vunpack.c.l.bf16 %v1559
      %v1576 = vunpack.c.l.bf16 %v1560
      %v1577 = vunpack.c.l.bf16 %v1561
      %v1578 = vunpack.c.l.bf16 %v1562
      %v1579 = vunpack.c.l.bf16 %v1563
      %v1580 = vunpack.c.l.bf16 %v1564
      %v1581 = vunpack.c.l.bf16 %v1565
      %v1582 = vunpack.c.l.bf16 %v1566
      %v1583 = vadd.f32 %v1487, %v1567
      %v1584 = vadd.f32 %v1488, %v1568
      %v1585 = vadd.f32 %v1489, %v1569
      %v1586 = vadd.f32 %v1490, %v1570
      %v1587 = vadd.f32 %v1491, %v1571
      %v1588 = vadd.f32 %v1492, %v1572
      %v1589 = vadd.f32 %v1493, %v1573
      %v1590 = vadd.f32 %v1494, %v1574
      %v1591 = vadd.f32 %v1495, %v1575
      %v1592 = vadd.f32 %v1496, %v1576
      %v1593 = vadd.f32 %v1497, %v1577
      %v1594 = vadd.f32 %v1498, %v1578
      %v1595 = vadd.f32 %v1499, %v1579
      %v1596 = vadd.f32 %v1500, %v1580
      %v1597 = vadd.f32 %v1501, %v1581
      %v1598 = vadd.f32 %v1502, %v1582
      %v1599 = vadd.f32 %v1503, %v1567
      %v1600 = vadd.f32 %v1504, %v1568
      %v1601 = vadd.f32 %v1505, %v1569
      %v1602 = vadd.f32 %v1506, %v1570
      %v1603 = vadd.f32 %v1507, %v1571
      %v1604 = vadd.f32 %v1508, %v1572
      %v1605 = vadd.f32 %v1509, %v1573
      %v1606 = vadd.f32 %v1510, %v1574
      %v1607 = vadd.f32 %v1511, %v1575
      %v1608 = vadd.f32 %v1512, %v1576
      %v1609 = vadd.f32 %v1513, %v1577
      %v1610 = vadd.f32 %v1514, %v1578
      %v1611 = vadd.f32 %v1515, %v1579
      %v1612 = vadd.f32 %v1516, %v1580
      %v1613 = vadd.f32 %v1517, %v1581
      %v1614 = vadd.f32 %v1518, %v1582
      %v1615 = vadd.f32 %v1519, %v1567
      %v1616 = vadd.f32 %v1520, %v1568
      %v1617 = vadd.f32 %v1521, %v1569
      %v1618 = vadd.f32 %v1522, %v1570
      %v1619 = vadd.f32 %v1523, %v1571
      %v1620 = vadd.f32 %v1524, %v1572
      %v1621 = vadd.f32 %v1525, %v1573
      %v1622 = vadd.f32 %v1526, %v1574
      %v1623 = vadd.f32 %v1527, %v1575
      %v1624 = vadd.f32 %v1528, %v1576
      %v1625 = vadd.f32 %v1529, %v1577
      %v1626 = vadd.f32 %v1530, %v1578
      %v1627 = vadd.f32 %v1531, %v1579
      %v1628 = vadd.f32 %v1532, %v1580
      %v1629 = vadd.f32 %v1533, %v1581
      %v1630 = vadd.f32 %v1534, %v1582
      %v1631 = vadd.f32 %v1535, %v1567
      %v1632 = vadd.f32 %v1536, %v1568
      %v1633 = vadd.f32 %v1537, %v1569
      %v1634 = vadd.f32 %v1538, %v1570
      %v1635 = vadd.f32 %v1539, %v1571
      %v1636 = vadd.f32 %v1540, %v1572
      %v1637 = vadd.f32 %v1541, %v1573
      %v1638 = vadd.f32 %v1542, %v1574
      %v1639 = vadd.f32 %v1543, %v1575
      %v1640 = vadd.f32 %v1544, %v1576
      %v1641 = vadd.f32 %v1545, %v1577
      %v1642 = vadd.f32 %v1546, %v1578
      %v1643 = vadd.f32 %v1547, %v1579
      %v1644 = vadd.f32 %v1548, %v1580
      %v1645 = vadd.f32 %v1549, %v1581
      %v1646 = vadd.f32 %v1550, %v1582
      %vm1647 = vcmask 130048
      %v1648 = vsel %vm1647, %v1583, -inf
      %1649 = vmax.xlane.f32.xlu0 %v1648
      %v1650 = vpop.xlane.xlu0 %1649
      %v1651 = vsel %vm1647, %v1584, -inf
      %1652 = vmax.xlane.f32.xlu0 %v1651
      %v1653 = vpop.xlane.xlu0 %1652
      %v1654 = vsel %vm1647, %v1585, -inf
      %1655 = vmax.xlane.f32.xlu0 %v1654
      %v1656 = vpop.xlane.xlu0 %1655
      %v1657 = vsel %vm1647, %v1586, -inf
      %1658 = vmax.xlane.f32.xlu0 %v1657
      %v1659 = vpop.xlane.xlu0 %1658
      %v1660 = vsel %vm1647, %v1587, -inf
      %1661 = vmax.xlane.f32.xlu0 %v1660
      %v1662 = vpop.xlane.xlu0 %1661
      %v1663 = vsel %vm1647, %v1588, -inf
      %1664 = vmax.xlane.f32.xlu0 %v1663
      %v1665 = vpop.xlane.xlu0 %1664
      %v1666 = vsel %vm1647, %v1589, -inf
      %1667 = vmax.xlane.f32.xlu0 %v1666
      %v1668 = vpop.xlane.xlu0 %1667
      %v1669 = vsel %vm1647, %v1590, -inf
      %1670 = vmax.xlane.f32.xlu0 %v1669
      %v1671 = vpop.xlane.xlu0 %1670
      %v1672 = vsel %vm1647, %v1591, -inf
      %1673 = vmax.xlane.f32.xlu0 %v1672
      %v1674 = vpop.xlane.xlu0 %1673
      %v1675 = vsel %vm1647, %v1592, -inf
      %1676 = vmax.xlane.f32.xlu0 %v1675
      %v1677 = vpop.xlane.xlu0 %1676
      %v1678 = vsel %vm1647, %v1593, -inf
      %1679 = vmax.xlane.f32.xlu0 %v1678
      %v1680 = vpop.xlane.xlu0 %1679
      %v1681 = vsel %vm1647, %v1594, -inf
      %1682 = vmax.xlane.f32.xlu0 %v1681
      %v1683 = vpop.xlane.xlu0 %1682
      %v1684 = vsel %vm1647, %v1595, -inf
      %1685 = vmax.xlane.f32.xlu0 %v1684
      %v1686 = vpop.xlane.xlu0 %1685
      %v1687 = vsel %vm1647, %v1596, -inf
      %1688 = vmax.xlane.f32.xlu0 %v1687
      %v1689 = vpop.xlane.xlu0 %1688
      %v1690 = vsel %vm1647, %v1597, -inf
      %1691 = vmax.xlane.f32.xlu0 %v1690
      %v1692 = vpop.xlane.xlu0 %1691
      %v1693 = vsel %vm1647, %v1598, -inf
      %1694 = vmax.xlane.f32.xlu0 %v1693
      %v1695 = vpop.xlane.xlu0 %1694
      %v1696 = vsel %vm1647, %v1599, -inf
      %1697 = vmax.xlane.f32.xlu0 %v1696
      %v1698 = vpop.xlane.xlu0 %1697
      %v1699 = vsel %vm1647, %v1600, -inf
      %1700 = vmax.xlane.f32.xlu0 %v1699
      %v1701 = vpop.xlane.xlu0 %1700
      %v1702 = vsel %vm1647, %v1601, -inf
      %1703 = vmax.xlane.f32.xlu0 %v1702
      %v1704 = vpop.xlane.xlu0 %1703
      %v1705 = vsel %vm1647, %v1602, -inf
      %1706 = vmax.xlane.f32.xlu0 %v1705
      %v1707 = vpop.xlane.xlu0 %1706
      %v1708 = vsel %vm1647, %v1603, -inf
      %1709 = vmax.xlane.f32.xlu0 %v1708
      %v1710 = vpop.xlane.xlu0 %1709
      %v1711 = vsel %vm1647, %v1604, -inf
      %1712 = vmax.xlane.f32.xlu0 %v1711
      %v1713 = vpop.xlane.xlu0 %1712
      %v1714 = vsel %vm1647, %v1605, -inf
      %1715 = vmax.xlane.f32.xlu0 %v1714
      %v1716 = vpop.xlane.xlu0 %1715
      %v1717 = vsel %vm1647, %v1606, -inf
      %1718 = vmax.xlane.f32.xlu0 %v1717
      %v1719 = vpop.xlane.xlu0 %1718
      %v1720 = vsel %vm1647, %v1607, -inf
      %1721 = vmax.xlane.f32.xlu0 %v1720
      %v1722 = vpop.xlane.xlu0 %1721
      %v1723 = vsel %vm1647, %v1608, -inf
      %1724 = vmax.xlane.f32.xlu0 %v1723
      %v1725 = vpop.xlane.xlu0 %1724
      %v1726 = vsel %vm1647, %v1609, -inf
      %1727 = vmax.xlane.f32.xlu0 %v1726
      %v1728 = vpop.xlane.xlu0 %1727
      %v1729 = vsel %vm1647, %v1610, -inf
      %1730 = vmax.xlane.f32.xlu0 %v1729
      %v1731 = vpop.xlane.xlu0 %1730
      %v1732 = vsel %vm1647, %v1611, -inf
      %1733 = vmax.xlane.f32.xlu0 %v1732
      %v1734 = vpop.xlane.xlu0 %1733
      %v1735 = vsel %vm1647, %v1612, -inf
      %1736 = vmax.xlane.f32.xlu0 %v1735
      %v1737 = vpop.xlane.xlu0 %1736
      %v1738 = vsel %vm1647, %v1613, -inf
      %1739 = vmax.xlane.f32.xlu0 %v1738
      %v1740 = vpop.xlane.xlu0 %1739
      %v1741 = vsel %vm1647, %v1614, -inf
      %1742 = vmax.xlane.f32.xlu0 %v1741
      %v1743 = vpop.xlane.xlu0 %1742
      %v1744 = vsel %vm1647, %v1615, -inf
      %1745 = vmax.xlane.f32.xlu0 %v1744
      %v1746 = vpop.xlane.xlu0 %1745
      %v1747 = vsel %vm1647, %v1616, -inf
      %1748 = vmax.xlane.f32.xlu0 %v1747
      %v1749 = vpop.xlane.xlu0 %1748
      %v1750 = vsel %vm1647, %v1617, -inf
      %1751 = vmax.xlane.f32.xlu0 %v1750
      %v1752 = vpop.xlane.xlu0 %1751
      %v1753 = vsel %vm1647, %v1618, -inf
      %1754 = vmax.xlane.f32.xlu0 %v1753
      %v1755 = vpop.xlane.xlu0 %1754
      %v1756 = vsel %vm1647, %v1619, -inf
      %1757 = vmax.xlane.f32.xlu0 %v1756
      %v1758 = vpop.xlane.xlu0 %1757
      %v1759 = vsel %vm1647, %v1620, -inf
      %1760 = vmax.xlane.f32.xlu0 %v1759
      %v1761 = vpop.xlane.xlu0 %1760
      %v1762 = vsel %vm1647, %v1621, -inf
      %1763 = vmax.xlane.f32.xlu0 %v1762
      %v1764 = vpop.xlane.xlu0 %1763
      %v1765 = vsel %vm1647, %v1622, -inf
      %1766 = vmax.xlane.f32.xlu0 %v1765
      %v1767 = vpop.xlane.xlu0 %1766
      %v1768 = vsel %vm1647, %v1623, -inf
      %1769 = vmax.xlane.f32.xlu0 %v1768
      %v1770 = vpop.xlane.xlu0 %1769
      %v1771 = vsel %vm1647, %v1624, -inf
      %1772 = vmax.xlane.f32.xlu0 %v1771
      %v1773 = vpop.xlane.xlu0 %1772
      %v1774 = vsel %vm1647, %v1625, -inf
      %1775 = vmax.xlane.f32.xlu0 %v1774
      %v1776 = vpop.xlane.xlu0 %1775
      %v1777 = vsel %vm1647, %v1626, -inf
      %1778 = vmax.xlane.f32.xlu0 %v1777
      %v1779 = vpop.xlane.xlu0 %1778
      %v1780 = vsel %vm1647, %v1627, -inf
      %1781 = vmax.xlane.f32.xlu0 %v1780
      %v1782 = vpop.xlane.xlu0 %1781
      %v1783 = vsel %vm1647, %v1628, -inf
      %1784 = vmax.xlane.f32.xlu0 %v1783
      %v1785 = vpop.xlane.xlu0 %1784
      %v1786 = vsel %vm1647, %v1629, -inf
      %1787 = vmax.xlane.f32.xlu0 %v1786
      %v1788 = vpop.xlane.xlu0 %1787
      %v1789 = vsel %vm1647, %v1630, -inf
      %1790 = vmax.xlane.f32.xlu0 %v1789
      %v1791 = vpop.xlane.xlu0 %1790
      %v1792 = vsel %vm1647, %v1631, -inf
      %1793 = vmax.xlane.f32.xlu0 %v1792
      %v1794 = vpop.xlane.xlu0 %1793
      %v1795 = vsel %vm1647, %v1632, -inf
      %1796 = vmax.xlane.f32.xlu0 %v1795
      %v1797 = vpop.xlane.xlu0 %1796
      %v1798 = vsel %vm1647, %v1633, -inf
      %1799 = vmax.xlane.f32.xlu0 %v1798
      %v1800 = vpop.xlane.xlu0 %1799
      %v1801 = vsel %vm1647, %v1634, -inf
      %1802 = vmax.xlane.f32.xlu0 %v1801
      %v1803 = vpop.xlane.xlu0 %1802
      %v1804 = vsel %vm1647, %v1635, -inf
      %1805 = vmax.xlane.f32.xlu0 %v1804
      %v1806 = vpop.xlane.xlu0 %1805
      %v1807 = vsel %vm1647, %v1636, -inf
      %1808 = vmax.xlane.f32.xlu0 %v1807
      %v1809 = vpop.xlane.xlu0 %1808
      %v1810 = vsel %vm1647, %v1637, -inf
      %1811 = vmax.xlane.f32.xlu0 %v1810
      %v1812 = vpop.xlane.xlu0 %1811
      %v1813 = vsel %vm1647, %v1638, -inf
      %1814 = vmax.xlane.f32.xlu0 %v1813
      %v1815 = vpop.xlane.xlu0 %1814
      %v1816 = vsel %vm1647, %v1639, -inf
      %1817 = vmax.xlane.f32.xlu0 %v1816
      %v1818 = vpop.xlane.xlu0 %1817
      %v1819 = vsel %vm1647, %v1640, -inf
      %1820 = vmax.xlane.f32.xlu0 %v1819
      %v1821 = vpop.xlane.xlu0 %1820
      %v1822 = vsel %vm1647, %v1641, -inf
      %1823 = vmax.xlane.f32.xlu0 %v1822
      %v1824 = vpop.xlane.xlu0 %1823
      %v1825 = vsel %vm1647, %v1642, -inf
      %1826 = vmax.xlane.f32.xlu0 %v1825
      %v1827 = vpop.xlane.xlu0 %1826
      %v1828 = vsel %vm1647, %v1643, -inf
      %1829 = vmax.xlane.f32.xlu0 %v1828
      %v1830 = vpop.xlane.xlu0 %1829
      %v1831 = vsel %vm1647, %v1644, -inf
      %1832 = vmax.xlane.f32.xlu0 %v1831
      %v1833 = vpop.xlane.xlu0 %1832
      %v1834 = vsel %vm1647, %v1645, -inf
      %1835 = vmax.xlane.f32.xlu0 %v1834
      %v1836 = vpop.xlane.xlu0 %1835
      %v1837 = vsel %vm1647, %v1646, -inf
      %1838 = vmax.xlane.f32.xlu0 %v1837
      %v1839 = vpop.xlane.xlu0 %1838
      %v1840 = vsub.f32 %v1583, %v1650
      %v1841 = vsub.f32 %v1584, %v1653
      %v1842 = vsub.f32 %v1585, %v1656
      %v1843 = vsub.f32 %v1586, %v1659
      %v1844 = vsub.f32 %v1587, %v1662
      %v1845 = vsub.f32 %v1588, %v1665
      %v1846 = vsub.f32 %v1589, %v1668
      %v1847 = vsub.f32 %v1590, %v1671
      %v1848 = vsub.f32 %v1591, %v1674
      %v1849 = vsub.f32 %v1592, %v1677
      %v1850 = vsub.f32 %v1593, %v1680
      %v1851 = vsub.f32 %v1594, %v1683
      %v1852 = vsub.f32 %v1595, %v1686
      %v1853 = vsub.f32 %v1596, %v1689
      %v1854 = vsub.f32 %v1597, %v1692
      %v1855 = vsub.f32 %v1598, %v1695
      %v1856 = vsub.f32 %v1599, %v1698
      %v1857 = vsub.f32 %v1600, %v1701
      %v1858 = vsub.f32 %v1601, %v1704
      %v1859 = vsub.f32 %v1602, %v1707
      %v1860 = vsub.f32 %v1603, %v1710
      %v1861 = vsub.f32 %v1604, %v1713
      %v1862 = vsub.f32 %v1605, %v1716
      %v1863 = vsub.f32 %v1606, %v1719
      %v1864 = vsub.f32 %v1607, %v1722
      %v1865 = vsub.f32 %v1608, %v1725
      %v1866 = vsub.f32 %v1609, %v1728
      %v1867 = vsub.f32 %v1610, %v1731
      %v1868 = vsub.f32 %v1611, %v1734
      %v1869 = vsub.f32 %v1612, %v1737
      %v1870 = vsub.f32 %v1613, %v1740
      %v1871 = vsub.f32 %v1614, %v1743
      %v1872 = vsub.f32 %v1615, %v1746
      %v1873 = vsub.f32 %v1616, %v1749
      %v1874 = vsub.f32 %v1617, %v1752
      %v1875 = vsub.f32 %v1618, %v1755
      %v1876 = vsub.f32 %v1619, %v1758
      %v1877 = vsub.f32 %v1620, %v1761
      %v1878 = vsub.f32 %v1621, %v1764
      %v1879 = vsub.f32 %v1622, %v1767
      %v1880 = vsub.f32 %v1623, %v1770
      %v1881 = vsub.f32 %v1624, %v1773
      %v1882 = vsub.f32 %v1625, %v1776
      %v1883 = vsub.f32 %v1626, %v1779
      %v1884 = vsub.f32 %v1627, %v1782
      %v1885 = vsub.f32 %v1628, %v1785
      %v1886 = vsub.f32 %v1629, %v1788
      %v1887 = vsub.f32 %v1630, %v1791
      %v1888 = vsub.f32 %v1631, %v1794
      %v1889 = vsub.f32 %v1632, %v1797
      %v1890 = vsub.f32 %v1633, %v1800
      %v1891 = vsub.f32 %v1634, %v1803
      %v1892 = vsub.f32 %v1635, %v1806
      %v1893 = vsub.f32 %v1636, %v1809
      %v1894 = vsub.f32 %v1637, %v1812
      %v1895 = vsub.f32 %v1638, %v1815
      %v1896 = vsub.f32 %v1639, %v1818
      %v1897 = vsub.f32 %v1640, %v1821
      %v1898 = vsub.f32 %v1641, %v1824
      %v1899 = vsub.f32 %v1642, %v1827
      %v1900 = vsub.f32 %v1643, %v1830
      %v1901 = vsub.f32 %v1644, %v1833
      %v1902 = vsub.f32 %v1645, %v1836
      %v1903 = vsub.f32 %v1646, %v1839
      %v1904 = vmul.f32 %v1840, 1.442695
      %v1905 = vpow.pop %v1904
      %v1906 = vmul.f32 %v1841, 1.442695
      %v1907 = vpow.pop %v1906
      %v1908 = vmul.f32 %v1842, 1.442695
      %v1909 = vpow.pop %v1908
      %v1910 = vmul.f32 %v1843, 1.442695
      %v1911 = vpow.pop %v1910
      %v1912 = vmul.f32 %v1844, 1.442695
      %v1913 = vpow.pop %v1912
      %v1914 = vmul.f32 %v1845, 1.442695
      %v1915 = vpow.pop %v1914
      %v1916 = vmul.f32 %v1846, 1.442695
      %v1917 = vpow.pop %v1916
      %v1918 = vmul.f32 %v1847, 1.442695
      %v1919 = vpow.pop %v1918
      %v1920 = vmul.f32 %v1848, 1.442695
      %v1921 = vpow.pop %v1920
      %v1922 = vmul.f32 %v1849, 1.442695
      %v1923 = vpow.pop %v1922
      %v1924 = vmul.f32 %v1850, 1.442695
      %v1925 = vpow.pop %v1924
      %v1926 = vmul.f32 %v1851, 1.442695
      %v1927 = vpow.pop %v1926
      %v1928 = vmul.f32 %v1852, 1.442695
      %v1929 = vpow.pop %v1928
      %v1930 = vmul.f32 %v1853, 1.442695
      %v1931 = vpow.pop %v1930
      %v1932 = vmul.f32 %v1854, 1.442695
      %v1933 = vpow.pop %v1932
      %v1934 = vmul.f32 %v1855, 1.442695
      %v1935 = vpow.pop %v1934
      %v1936 = vmul.f32 %v1856, 1.442695
      %v1937 = vpow.pop %v1936
      %v1938 = vmul.f32 %v1857, 1.442695
      %v1939 = vpow.pop %v1938
      %v1940 = vmul.f32 %v1858, 1.442695
      %v1941 = vpow.pop %v1940
      %v1942 = vmul.f32 %v1859, 1.442695
      %v1943 = vpow.pop %v1942
      %v1944 = vmul.f32 %v1860, 1.442695
      %v1945 = vpow.pop %v1944
      %v1946 = vmul.f32 %v1861, 1.442695
      %v1947 = vpow.pop %v1946
      %v1948 = vmul.f32 %v1862, 1.442695
      %v1949 = vpow.pop %v1948
      %v1950 = vmul.f32 %v1863, 1.442695
      %v1951 = vpow.pop %v1950
      %v1952 = vmul.f32 %v1864, 1.442695
      %v1953 = vpow.pop %v1952
      %v1954 = vmul.f32 %v1865, 1.442695
      %v1955 = vpow.pop %v1954
      %v1956 = vmul.f32 %v1866, 1.442695
      %v1957 = vpow.pop %v1956
      %v1958 = vmul.f32 %v1867, 1.442695
      %v1959 = vpow.pop %v1958
      %v1960 = vmul.f32 %v1868, 1.442695
      %v1961 = vpow.pop %v1960
      %v1962 = vmul.f32 %v1869, 1.442695
      %v1963 = vpow.pop %v1962
      %v1964 = vmul.f32 %v1870, 1.442695
      %v1965 = vpow.pop %v1964
      %v1966 = vmul.f32 %v1871, 1.442695
      %v1967 = vpow.pop %v1966
      %v1968 = vmul.f32 %v1872, 1.442695
      %v1969 = vpow.pop %v1968
      %v1970 = vmul.f32 %v1873, 1.442695
      %v1971 = vpow.pop %v1970
      %v1972 = vmul.f32 %v1874, 1.442695
      %v1973 = vpow.pop %v1972
      %v1974 = vmul.f32 %v1875, 1.442695
      %v1975 = vpow.pop %v1974
      %v1976 = vmul.f32 %v1876, 1.442695
      %v1977 = vpow.pop %v1976
      %v1978 = vmul.f32 %v1877, 1.442695
      %v1979 = vpow.pop %v1978
      %v1980 = vmul.f32 %v1878, 1.442695
      %v1981 = vpow.pop %v1980
      %v1982 = vmul.f32 %v1879, 1.442695
      %v1983 = vpow.pop %v1982
      %v1984 = vmul.f32 %v1880, 1.442695
      %v1985 = vpow.pop %v1984
      %v1986 = vmul.f32 %v1881, 1.442695
      %v1987 = vpow.pop %v1986
      %v1988 = vmul.f32 %v1882, 1.442695
      %v1989 = vpow.pop %v1988
      %v1990 = vmul.f32 %v1883, 1.442695
      %v1991 = vpow.pop %v1990
      %v1992 = vmul.f32 %v1884, 1.442695
      %v1993 = vpow.pop %v1992
      %v1994 = vmul.f32 %v1885, 1.442695
      %v1995 = vpow.pop %v1994
      %v1996 = vmul.f32 %v1886, 1.442695
      %v1997 = vpow.pop %v1996
      %v1998 = vmul.f32 %v1887, 1.442695
      %v1999 = vpow.pop %v1998
      %v2000 = vmul.f32 %v1888, 1.442695
      %v2001 = vpow.pop %v2000
      %v2002 = vmul.f32 %v1889, 1.442695
      %v2003 = vpow.pop %v2002
      %v2004 = vmul.f32 %v1890, 1.442695
      %v2005 = vpow.pop %v2004
      %v2006 = vmul.f32 %v1891, 1.442695
      %v2007 = vpow.pop %v2006
      %v2008 = vmul.f32 %v1892, 1.442695
      %v2009 = vpow.pop %v2008
      %v2010 = vmul.f32 %v1893, 1.442695
      %v2011 = vpow.pop %v2010
      %v2012 = vmul.f32 %v1894, 1.442695
      %v2013 = vpow.pop %v2012
      %v2014 = vmul.f32 %v1895, 1.442695
      %v2015 = vpow.pop %v2014
      %v2016 = vmul.f32 %v1896, 1.442695
      %v2017 = vpow.pop %v2016
      %v2018 = vmul.f32 %v1897, 1.442695
      %v2019 = vpow.pop %v2018
      %v2020 = vmul.f32 %v1898, 1.442695
      %v2021 = vpow.pop %v2020
      %v2022 = vmul.f32 %v1899, 1.442695
      %v2023 = vpow.pop %v2022
      %v2024 = vmul.f32 %v1900, 1.442695
      %v2025 = vpow.pop %v2024
      %v2026 = vmul.f32 %v1901, 1.442695
      %v2027 = vpow.pop %v2026
      %v2028 = vmul.f32 %v1902, 1.442695
      %v2029 = vpow.pop %v2028
      %v2030 = vmul.f32 %v1903, 1.442695
      %v2031 = vpow.pop %v2030
      %v2032 = vsel %vm1647, %v1905, 0.0
      %2033 = vadd.xlane.f32.xlu0 %v2032
      %v2034 = vpop.xlane.xlu0 %2033
      %v2035 = vsel %vm1647, %v1907, 0.0
      %2036 = vadd.xlane.f32.xlu0 %v2035
      %v2037 = vpop.xlane.xlu0 %2036
      %v2038 = vsel %vm1647, %v1909, 0.0
      %2039 = vadd.xlane.f32.xlu0 %v2038
      %v2040 = vpop.xlane.xlu0 %2039
      %v2041 = vsel %vm1647, %v1911, 0.0
      %2042 = vadd.xlane.f32.xlu0 %v2041
      %v2043 = vpop.xlane.xlu0 %2042
      %v2044 = vsel %vm1647, %v1913, 0.0
      %2045 = vadd.xlane.f32.xlu0 %v2044
      %v2046 = vpop.xlane.xlu0 %2045
      %v2047 = vsel %vm1647, %v1915, 0.0
      %2048 = vadd.xlane.f32.xlu0 %v2047
      %v2049 = vpop.xlane.xlu0 %2048
      %v2050 = vsel %vm1647, %v1917, 0.0
      %2051 = vadd.xlane.f32.xlu0 %v2050
      %v2052 = vpop.xlane.xlu0 %2051
      %v2053 = vsel %vm1647, %v1919, 0.0
      %2054 = vadd.xlane.f32.xlu0 %v2053
      %v2055 = vpop.xlane.xlu0 %2054
      %v2056 = vsel %vm1647, %v1921, 0.0
      %2057 = vadd.xlane.f32.xlu0 %v2056
      %v2058 = vpop.xlane.xlu0 %2057
      %v2059 = vsel %vm1647, %v1923, 0.0
      %2060 = vadd.xlane.f32.xlu0 %v2059
      %v2061 = vpop.xlane.xlu0 %2060
      %v2062 = vsel %vm1647, %v1925, 0.0
      %2063 = vadd.xlane.f32.xlu0 %v2062
      %v2064 = vpop.xlane.xlu0 %2063
      %v2065 = vsel %vm1647, %v1927, 0.0
      %2066 = vadd.xlane.f32.xlu0 %v2065
      %v2067 = vpop.xlane.xlu0 %2066
      %v2068 = vsel %vm1647, %v1929, 0.0
      %2069 = vadd.xlane.f32.xlu0 %v2068
      %v2070 = vpop.xlane.xlu0 %2069
      %v2071 = vsel %vm1647, %v1931, 0.0
      %2072 = vadd.xlane.f32.xlu0 %v2071
      %v2073 = vpop.xlane.xlu0 %2072
      %v2074 = vsel %vm1647, %v1933, 0.0
      %2075 = vadd.xlane.f32.xlu0 %v2074
      %v2076 = vpop.xlane.xlu0 %2075
      %v2077 = vsel %vm1647, %v1935, 0.0
      %2078 = vadd.xlane.f32.xlu0 %v2077
      %v2079 = vpop.xlane.xlu0 %2078
      %v2080 = vsel %vm1647, %v1937, 0.0
      %2081 = vadd.xlane.f32.xlu0 %v2080
      %v2082 = vpop.xlane.xlu0 %2081
      %v2083 = vsel %vm1647, %v1939, 0.0
      %2084 = vadd.xlane.f32.xlu0 %v2083
      %v2085 = vpop.xlane.xlu0 %2084
      %v2086 = vsel %vm1647, %v1941, 0.0
      %2087 = vadd.xlane.f32.xlu0 %v2086
      %v2088 = vpop.xlane.xlu0 %2087
      %v2089 = vsel %vm1647, %v1943, 0.0
      %2090 = vadd.xlane.f32.xlu0 %v2089
      %v2091 = vpop.xlane.xlu0 %2090
      %v2092 = vsel %vm1647, %v1945, 0.0
      %2093 = vadd.xlane.f32.xlu0 %v2092
      %v2094 = vpop.xlane.xlu0 %2093
      %v2095 = vsel %vm1647, %v1947, 0.0
      %2096 = vadd.xlane.f32.xlu0 %v2095
      %v2097 = vpop.xlane.xlu0 %2096
      %v2098 = vsel %vm1647, %v1949, 0.0
      %2099 = vadd.xlane.f32.xlu0 %v2098
      %v2100 = vpop.xlane.xlu0 %2099
      %v2101 = vsel %vm1647, %v1951, 0.0
      %2102 = vadd.xlane.f32.xlu0 %v2101
      %v2103 = vpop.xlane.xlu0 %2102
      %v2104 = vsel %vm1647, %v1953, 0.0
      %2105 = vadd.xlane.f32.xlu0 %v2104
      %v2106 = vpop.xlane.xlu0 %2105
      %v2107 = vsel %vm1647, %v1955, 0.0
      %2108 = vadd.xlane.f32.xlu0 %v2107
      %v2109 = vpop.xlane.xlu0 %2108
      %v2110 = vsel %vm1647, %v1957, 0.0
      %2111 = vadd.xlane.f32.xlu0 %v2110
      %v2112 = vpop.xlane.xlu0 %2111
      %v2113 = vsel %vm1647, %v1959, 0.0
      %2114 = vadd.xlane.f32.xlu0 %v2113
      %v2115 = vpop.xlane.xlu0 %2114
      %v2116 = vsel %vm1647, %v1961, 0.0
      %2117 = vadd.xlane.f32.xlu0 %v2116
      %v2118 = vpop.xlane.xlu0 %2117
      %v2119 = vsel %vm1647, %v1963, 0.0
      %2120 = vadd.xlane.f32.xlu0 %v2119
      %v2121 = vpop.xlane.xlu0 %2120
      %v2122 = vsel %vm1647, %v1965, 0.0
      %2123 = vadd.xlane.f32.xlu0 %v2122
      %v2124 = vpop.xlane.xlu0 %2123
      %v2125 = vsel %vm1647, %v1967, 0.0
      %2126 = vadd.xlane.f32.xlu0 %v2125
      %v2127 = vpop.xlane.xlu0 %2126
      %v2128 = vsel %vm1647, %v1969, 0.0
      %2129 = vadd.xlane.f32.xlu0 %v2128
      %v2130 = vpop.xlane.xlu0 %2129
      %v2131 = vsel %vm1647, %v1971, 0.0
      %2132 = vadd.xlane.f32.xlu0 %v2131
      %v2133 = vpop.xlane.xlu0 %2132
      %v2134 = vsel %vm1647, %v1973, 0.0
      %2135 = vadd.xlane.f32.xlu0 %v2134
      %v2136 = vpop.xlane.xlu0 %2135
      %v2137 = vsel %vm1647, %v1975, 0.0
      %2138 = vadd.xlane.f32.xlu0 %v2137
      %v2139 = vpop.xlane.xlu0 %2138
      %v2140 = vsel %vm1647, %v1977, 0.0
      %2141 = vadd.xlane.f32.xlu0 %v2140
      %v2142 = vpop.xlane.xlu0 %2141
      %v2143 = vsel %vm1647, %v1979, 0.0
      %2144 = vadd.xlane.f32.xlu0 %v2143
      %v2145 = vpop.xlane.xlu0 %2144
      %v2146 = vsel %vm1647, %v1981, 0.0
      %2147 = vadd.xlane.f32.xlu0 %v2146
      %v2148 = vpop.xlane.xlu0 %2147
      %v2149 = vsel %vm1647, %v1983, 0.0
      %2150 = vadd.xlane.f32.xlu0 %v2149
      %v2151 = vpop.xlane.xlu0 %2150
      %v2152 = vsel %vm1647, %v1985, 0.0
      %2153 = vadd.xlane.f32.xlu0 %v2152
      %v2154 = vpop.xlane.xlu0 %2153
      %v2155 = vsel %vm1647, %v1987, 0.0
      %2156 = vadd.xlane.f32.xlu0 %v2155
      %v2157 = vpop.xlane.xlu0 %2156
      %v2158 = vsel %vm1647, %v1989, 0.0
      %2159 = vadd.xlane.f32.xlu0 %v2158
      %v2160 = vpop.xlane.xlu0 %2159
      %v2161 = vsel %vm1647, %v1991, 0.0
      %2162 = vadd.xlane.f32.xlu0 %v2161
      %v2163 = vpop.xlane.xlu0 %2162
      %v2164 = vsel %vm1647, %v1993, 0.0
      %2165 = vadd.xlane.f32.xlu0 %v2164
      %v2166 = vpop.xlane.xlu0 %2165
      %v2167 = vsel %vm1647, %v1995, 0.0
      %2168 = vadd.xlane.f32.xlu0 %v2167
      %v2169 = vpop.xlane.xlu0 %2168
      %v2170 = vsel %vm1647, %v1997, 0.0
      %2171 = vadd.xlane.f32.xlu0 %v2170
      %v2172 = vpop.xlane.xlu0 %2171
      %v2173 = vsel %vm1647, %v1999, 0.0
      %2174 = vadd.xlane.f32.xlu0 %v2173
      %v2175 = vpop.xlane.xlu0 %2174
      %v2176 = vsel %vm1647, %v2001, 0.0
      %2177 = vadd.xlane.f32.xlu0 %v2176
      %v2178 = vpop.xlane.xlu0 %2177
      %v2179 = vsel %vm1647, %v2003, 0.0
      %2180 = vadd.xlane.f32.xlu0 %v2179
      %v2181 = vpop.xlane.xlu0 %2180
      %v2182 = vsel %vm1647, %v2005, 0.0
      %2183 = vadd.xlane.f32.xlu0 %v2182
      %v2184 = vpop.xlane.xlu0 %2183
      %v2185 = vsel %vm1647, %v2007, 0.0
      %2186 = vadd.xlane.f32.xlu0 %v2185
      %v2187 = vpop.xlane.xlu0 %2186
      %v2188 = vsel %vm1647, %v2009, 0.0
      %2189 = vadd.xlane.f32.xlu0 %v2188
      %v2190 = vpop.xlane.xlu0 %2189
      %v2191 = vsel %vm1647, %v2011, 0.0
      %2192 = vadd.xlane.f32.xlu0 %v2191
      %v2193 = vpop.xlane.xlu0 %2192
      %v2194 = vsel %vm1647, %v2013, 0.0
      %2195 = vadd.xlane.f32.xlu0 %v2194
      %v2196 = vpop.xlane.xlu0 %2195
      %v2197 = vsel %vm1647, %v2015, 0.0
      %2198 = vadd.xlane.f32.xlu0 %v2197
      %v2199 = vpop.xlane.xlu0 %2198
      %v2200 = vsel %vm1647, %v2017, 0.0
      %2201 = vadd.xlane.f32.xlu0 %v2200
      %v2202 = vpop.xlane.xlu0 %2201
      %v2203 = vsel %vm1647, %v2019, 0.0
      %2204 = vadd.xlane.f32.xlu0 %v2203
      %v2205 = vpop.xlane.xlu0 %2204
      %v2206 = vsel %vm1647, %v2021, 0.0
      %2207 = vadd.xlane.f32.xlu0 %v2206
      %v2208 = vpop.xlane.xlu0 %2207
      %v2209 = vsel %vm1647, %v2023, 0.0
      %2210 = vadd.xlane.f32.xlu0 %v2209
      %v2211 = vpop.xlane.xlu0 %2210
      %v2212 = vsel %vm1647, %v2025, 0.0
      %2213 = vadd.xlane.f32.xlu0 %v2212
      %v2214 = vpop.xlane.xlu0 %2213
      %v2215 = vsel %vm1647, %v2027, 0.0
      %2216 = vadd.xlane.f32.xlu0 %v2215
      %v2217 = vpop.xlane.xlu0 %2216
      %v2218 = vsel %vm1647, %v2029, 0.0
      %2219 = vadd.xlane.f32.xlu0 %v2218
      %v2220 = vpop.xlane.xlu0 %2219
      %v2221 = vsel %vm1647, %v2031, 0.0
      %2222 = vadd.xlane.f32.xlu0 %v2221
      %v2223 = vpop.xlane.xlu0 %2222
      %v2224 = vpack.c.bf16 %v1905, %v1905
      %v2225 = vpack.c.bf16 %v1907, %v1907
      %v2226 = vpack.c.bf16 %v1909, %v1909
      %v2227 = vpack.c.bf16 %v1911, %v1911
      %v2228 = vpack.c.bf16 %v1913, %v1913
      %v2229 = vpack.c.bf16 %v1915, %v1915
      %v2230 = vpack.c.bf16 %v1917, %v1917
      %v2231 = vpack.c.bf16 %v1919, %v1919
      %v2232 = vpack.c.bf16 %v1921, %v1921
      %v2233 = vpack.c.bf16 %v1923, %v1923
      %v2234 = vpack.c.bf16 %v1925, %v1925
      %v2235 = vpack.c.bf16 %v1927, %v1927
      %v2236 = vpack.c.bf16 %v1929, %v1929
      %v2237 = vpack.c.bf16 %v1931, %v1931
      %v2238 = vpack.c.bf16 %v1933, %v1933
      %v2239 = vpack.c.bf16 %v1935, %v1935
      %v2240 = vpack.c.bf16 %v1937, %v1937
      %v2241 = vpack.c.bf16 %v1939, %v1939
      %v2242 = vpack.c.bf16 %v1941, %v1941
      %v2243 = vpack.c.bf16 %v1943, %v1943
      %v2244 = vpack.c.bf16 %v1945, %v1945
      %v2245 = vpack.c.bf16 %v1947, %v1947
      %v2246 = vpack.c.bf16 %v1949, %v1949
      %v2247 = vpack.c.bf16 %v1951, %v1951
      %v2248 = vpack.c.bf16 %v1953, %v1953
      %v2249 = vpack.c.bf16 %v1955, %v1955
      %v2250 = vpack.c.bf16 %v1957, %v1957
      %v2251 = vpack.c.bf16 %v1959, %v1959
      %v2252 = vpack.c.bf16 %v1961, %v1961
      %v2253 = vpack.c.bf16 %v1963, %v1963
      %v2254 = vpack.c.bf16 %v1965, %v1965
      %v2255 = vpack.c.bf16 %v1967, %v1967
      %v2256 = vpack.c.bf16 %v1969, %v1969
      %v2257 = vpack.c.bf16 %v1971, %v1971
      %v2258 = vpack.c.bf16 %v1973, %v1973
      %v2259 = vpack.c.bf16 %v1975, %v1975
      %v2260 = vpack.c.bf16 %v1977, %v1977
      %v2261 = vpack.c.bf16 %v1979, %v1979
      %v2262 = vpack.c.bf16 %v1981, %v1981
      %v2263 = vpack.c.bf16 %v1983, %v1983
      %v2264 = vpack.c.bf16 %v1985, %v1985
      %v2265 = vpack.c.bf16 %v1987, %v1987
      %v2266 = vpack.c.bf16 %v1989, %v1989
      %v2267 = vpack.c.bf16 %v1991, %v1991
      %v2268 = vpack.c.bf16 %v1993, %v1993
      %v2269 = vpack.c.bf16 %v1995, %v1995
      %v2270 = vpack.c.bf16 %v1997, %v1997
      %v2271 = vpack.c.bf16 %v1999, %v1999
      %v2272 = vpack.c.bf16 %v2001, %v2001
      %v2273 = vpack.c.bf16 %v2003, %v2003
      %v2274 = vpack.c.bf16 %v2005, %v2005
      %v2275 = vpack.c.bf16 %v2007, %v2007
      %v2276 = vpack.c.bf16 %v2009, %v2009
      %v2277 = vpack.c.bf16 %v2011, %v2011
      %v2278 = vpack.c.bf16 %v2013, %v2013
      %v2279 = vpack.c.bf16 %v2015, %v2015
      %v2280 = vpack.c.bf16 %v2017, %v2017
      %v2281 = vpack.c.bf16 %v2019, %v2019
      %v2282 = vpack.c.bf16 %v2021, %v2021
      %v2283 = vpack.c.bf16 %v2023, %v2023
      %v2284 = vpack.c.bf16 %v2025, %v2025
      %v2285 = vpack.c.bf16 %v2027, %v2027
      %v2286 = vpack.c.bf16 %v2029, %v2029
      %v2287 = vpack.c.bf16 %v2031, %v2031
      %v2290 = vunpack.c.l.b16 %v2224
      %v2291 = vunpack.c.l.b16 %v2225
      %v2292 = vpack.c.b16 %v2291, %v2290
      %2293 = vrot.lane.b32.xlu0 %v672, 64
      %v2294 = vpop.permute.xlu0 %2293
      %v2297 = vsel %vm1647, %v2292, 0
      %2299 = vmatpush.bf16.msra.mxu0 0
      %2300 = vmatpush.bf16.msra.mxu0 0
      %2301 = vmatpush.bf16.msra.mxu0 0
      %2302 = vmatpush.bf16.msra.mxu0 0
      %2303 = vmatpush.bf16.msra.mxu0 0
      %2304 = vmatpush.bf16.msra.mxu0 0
      %2305 = vmatpush.bf16.msra.mxu0 0
      %2306 = vmatpush.bf16.msra.mxu0 %v2294
      %2307 = vmatmul.bf16.gmra.mxu0 %v2297
      %v2308 = vpop.f32.mrf.mxu0
      %v2309 = vadd.f32 0.0, %v2308
      %v2310 = vpop.f32.mrf.mxu0
      %v2311 = vadd.f32 0.0, %v2310
      %2312 = vdwg.mxu0
      %v2315 = vunpack.c.l.b16 %v2226
      %v2316 = vunpack.c.l.b16 %v2227
      %v2317 = vpack.c.b16 %v2316, %v2315
      %2318 = vrot.lane.b32.xlu0 %v698, 64
      %v2319 = vpop.permute.xlu0 %2318
      %v2322 = vsel %vm1647, %v2317, 0
      %2324 = vmatpush.bf16.msra.mxu0 0
      %2325 = vmatpush.bf16.msra.mxu0 0
      %2326 = vmatpush.bf16.msra.mxu0 0
      %2327 = vmatpush.bf16.msra.mxu0 0
      %2328 = vmatpush.bf16.msra.mxu0 0
      %2329 = vmatpush.bf16.msra.mxu0 0
      %2330 = vmatpush.bf16.msra.mxu0 0
      %2331 = vmatpush.bf16.msra.mxu0 %v2319
      %2332 = vmatmul.bf16.gmra.mxu0 %v2322
      %v2333 = vpop.f32.mrf.mxu0
      %v2334 = vadd.f32 0.0, %v2333
      %v2335 = vpop.f32.mrf.mxu0
      %v2336 = vadd.f32 0.0, %v2335
      %2337 = vdwg.mxu0
      %v2340 = vunpack.c.l.b16 %v2228
      %v2341 = vunpack.c.l.b16 %v2229
      %v2342 = vpack.c.b16 %v2341, %v2340
      %2343 = vrot.lane.b32.xlu0 %v723, 64
      %v2344 = vpop.permute.xlu0 %2343
      %v2347 = vsel %vm1647, %v2342, 0
      %2349 = vmatpush.bf16.msra.mxu0 0
      %2350 = vmatpush.bf16.msra.mxu0 0
      %2351 = vmatpush.bf16.msra.mxu0 0
      %2352 = vmatpush.bf16.msra.mxu0 0
      %2353 = vmatpush.bf16.msra.mxu0 0
      %2354 = vmatpush.bf16.msra.mxu0 0
      %2355 = vmatpush.bf16.msra.mxu0 0
      %2356 = vmatpush.bf16.msra.mxu0 %v2344
      %2357 = vmatmul.bf16.gmra.mxu0 %v2347
      %v2358 = vpop.f32.mrf.mxu0
      %v2359 = vadd.f32 0.0, %v2358
      %v2360 = vpop.f32.mrf.mxu0
      %v2361 = vadd.f32 0.0, %v2360
      %2362 = vdwg.mxu0
      %v2365 = vunpack.c.l.b16 %v2230
      %v2366 = vunpack.c.l.b16 %v2231
      %v2367 = vpack.c.b16 %v2366, %v2365
      %2368 = vrot.lane.b32.xlu0 %v748, 64
      %v2369 = vpop.permute.xlu0 %2368
      %v2372 = vsel %vm1647, %v2367, 0
      %2374 = vmatpush.bf16.msra.mxu0 0
      %2375 = vmatpush.bf16.msra.mxu0 0
      %2376 = vmatpush.bf16.msra.mxu0 0
      %2377 = vmatpush.bf16.msra.mxu0 0
      %2378 = vmatpush.bf16.msra.mxu0 0
      %2379 = vmatpush.bf16.msra.mxu0 0
      %2380 = vmatpush.bf16.msra.mxu0 0
      %2381 = vmatpush.bf16.msra.mxu0 %v2369
      %2382 = vmatmul.bf16.gmra.mxu0 %v2372
      %v2383 = vpop.f32.mrf.mxu0
      %v2384 = vadd.f32 0.0, %v2383
      %v2385 = vpop.f32.mrf.mxu0
      %v2386 = vadd.f32 0.0, %v2385
      %2387 = vdwg.mxu0
      %v2390 = vunpack.c.l.b16 %v2232
      %v2391 = vunpack.c.l.b16 %v2233
      %v2392 = vpack.c.b16 %v2391, %v2390
      %2393 = vrot.lane.b32.xlu0 %v773, 64
      %v2394 = vpop.permute.xlu0 %2393
      %v2397 = vsel %vm1647, %v2392, 0
      %2399 = vmatpush.bf16.msra.mxu0 0
      %2400 = vmatpush.bf16.msra.mxu0 0
      %2401 = vmatpush.bf16.msra.mxu0 0
      %2402 = vmatpush.bf16.msra.mxu0 0
      %2403 = vmatpush.bf16.msra.mxu0 0
      %2404 = vmatpush.bf16.msra.mxu0 0
      %2405 = vmatpush.bf16.msra.mxu0 0
      %2406 = vmatpush.bf16.msra.mxu0 %v2394
      %2407 = vmatmul.bf16.gmra.mxu0 %v2397
      %v2408 = vpop.f32.mrf.mxu0
      %v2409 = vadd.f32 0.0, %v2408
      %v2410 = vpop.f32.mrf.mxu0
      %v2411 = vadd.f32 0.0, %v2410
      %2412 = vdwg.mxu0
      %v2415 = vunpack.c.l.b16 %v2234
      %v2416 = vunpack.c.l.b16 %v2235
      %v2417 = vpack.c.b16 %v2416, %v2415
      %2418 = vrot.lane.b32.xlu0 %v798, 64
      %v2419 = vpop.permute.xlu0 %2418
      %v2422 = vsel %vm1647, %v2417, 0
      %2424 = vmatpush.bf16.msra.mxu0 0
      %2425 = vmatpush.bf16.msra.mxu0 0
      %2426 = vmatpush.bf16.msra.mxu0 0
      %2427 = vmatpush.bf16.msra.mxu0 0
      %2428 = vmatpush.bf16.msra.mxu0 0
      %2429 = vmatpush.bf16.msra.mxu0 0
      %2430 = vmatpush.bf16.msra.mxu0 0
      %2431 = vmatpush.bf16.msra.mxu0 %v2419
      %2432 = vmatmul.bf16.gmra.mxu0 %v2422
      %v2433 = vpop.f32.mrf.mxu0
      %v2434 = vadd.f32 0.0, %v2433
      %v2435 = vpop.f32.mrf.mxu0
      %v2436 = vadd.f32 0.0, %v2435
      %2437 = vdwg.mxu0
      %v2440 = vunpack.c.l.b16 %v2236
      %v2441 = vunpack.c.l.b16 %v2237
      %v2442 = vpack.c.b16 %v2441, %v2440
      %2443 = vrot.lane.b32.xlu0 %v823, 64
      %v2444 = vpop.permute.xlu0 %2443
      %v2447 = vsel %vm1647, %v2442, 0
      %2449 = vmatpush.bf16.msra.mxu0 0
      %2450 = vmatpush.bf16.msra.mxu0 0
      %2451 = vmatpush.bf16.msra.mxu0 0
      %2452 = vmatpush.bf16.msra.mxu0 0
      %2453 = vmatpush.bf16.msra.mxu0 0
      %2454 = vmatpush.bf16.msra.mxu0 0
      %2455 = vmatpush.bf16.msra.mxu0 0
      %2456 = vmatpush.bf16.msra.mxu0 %v2444
      %2457 = vmatmul.bf16.gmra.mxu0 %v2447
      %v2458 = vpop.f32.mrf.mxu0
      %v2459 = vadd.f32 0.0, %v2458
      %v2460 = vpop.f32.mrf.mxu0
      %v2461 = vadd.f32 0.0, %v2460
      %2462 = vdwg.mxu0
      %v2465 = vunpack.c.l.b16 %v2238
      %v2466 = vunpack.c.l.b16 %v2239
      %v2467 = vpack.c.b16 %v2466, %v2465
      %2468 = vrot.lane.b32.xlu0 %v848, 64
      %v2469 = vpop.permute.xlu0 %2468
      %v2472 = vsel %vm1647, %v2467, 0
      %2474 = vmatpush.bf16.msra.mxu0 0
      %2475 = vmatpush.bf16.msra.mxu0 0
      %2476 = vmatpush.bf16.msra.mxu0 0
      %2477 = vmatpush.bf16.msra.mxu0 0
      %2478 = vmatpush.bf16.msra.mxu0 0
      %2479 = vmatpush.bf16.msra.mxu0 0
      %2480 = vmatpush.bf16.msra.mxu0 0
      %2481 = vmatpush.bf16.msra.mxu0 %v2469
      %2482 = vmatmul.bf16.gmra.mxu0 %v2472
      %v2483 = vpop.f32.mrf.mxu0
      %v2484 = vadd.f32 0.0, %v2483
      %v2485 = vpop.f32.mrf.mxu0
      %v2486 = vadd.f32 0.0, %v2485
      %2487 = vdwg.mxu0
      %v2490 = vunpack.c.l.b16 %v2240
      %v2491 = vunpack.c.l.b16 %v2241
      %v2492 = vpack.c.b16 %v2491, %v2490
      %2493 = vrot.lane.b32.xlu0 %v873, 64
      %v2494 = vpop.permute.xlu0 %2493
      %v2497 = vsel %vm1647, %v2492, 0
      %2499 = vmatpush.bf16.msra.mxu0 0
      %2500 = vmatpush.bf16.msra.mxu0 0
      %2501 = vmatpush.bf16.msra.mxu0 0
      %2502 = vmatpush.bf16.msra.mxu0 0
      %2503 = vmatpush.bf16.msra.mxu0 0
      %2504 = vmatpush.bf16.msra.mxu0 0
      %2505 = vmatpush.bf16.msra.mxu0 0
      %2506 = vmatpush.bf16.msra.mxu0 %v2494
      %2507 = vmatmul.bf16.gmra.mxu0 %v2497
      %v2508 = vpop.f32.mrf.mxu0
      %v2509 = vadd.f32 0.0, %v2508
      %v2510 = vpop.f32.mrf.mxu0
      %v2511 = vadd.f32 0.0, %v2510
      %2512 = vdwg.mxu0
      %v2515 = vunpack.c.l.b16 %v2242
      %v2516 = vunpack.c.l.b16 %v2243
      %v2517 = vpack.c.b16 %v2516, %v2515
      %2518 = vrot.lane.b32.xlu0 %v898, 64
      %v2519 = vpop.permute.xlu0 %2518
      %v2522 = vsel %vm1647, %v2517, 0
      %2524 = vmatpush.bf16.msra.mxu0 0
      %2525 = vmatpush.bf16.msra.mxu0 0
      %2526 = vmatpush.bf16.msra.mxu0 0
      %2527 = vmatpush.bf16.msra.mxu0 0
      %2528 = vmatpush.bf16.msra.mxu0 0
      %2529 = vmatpush.bf16.msra.mxu0 0
      %2530 = vmatpush.bf16.msra.mxu0 0
      %2531 = vmatpush.bf16.msra.mxu0 %v2519
      %2532 = vmatmul.bf16.gmra.mxu0 %v2522
      %v2533 = vpop.f32.mrf.mxu0
      %v2534 = vadd.f32 0.0, %v2533
      %v2535 = vpop.f32.mrf.mxu0
      %v2536 = vadd.f32 0.0, %v2535
      %2537 = vdwg.mxu0
      %v2540 = vunpack.c.l.b16 %v2244
      %v2541 = vunpack.c.l.b16 %v2245
      %v2542 = vpack.c.b16 %v2541, %v2540
      %2543 = vrot.lane.b32.xlu0 %v923, 64
      %v2544 = vpop.permute.xlu0 %2543
      %v2547 = vsel %vm1647, %v2542, 0
      %2549 = vmatpush.bf16.msra.mxu0 0
      %2550 = vmatpush.bf16.msra.mxu0 0
      %2551 = vmatpush.bf16.msra.mxu0 0
      %2552 = vmatpush.bf16.msra.mxu0 0
      %2553 = vmatpush.bf16.msra.mxu0 0
      %2554 = vmatpush.bf16.msra.mxu0 0
      %2555 = vmatpush.bf16.msra.mxu0 0
      %2556 = vmatpush.bf16.msra.mxu0 %v2544
      %2557 = vmatmul.bf16.gmra.mxu0 %v2547
      %v2558 = vpop.f32.mrf.mxu0
      %v2559 = vadd.f32 0.0, %v2558
      %v2560 = vpop.f32.mrf.mxu0
      %v2561 = vadd.f32 0.0, %v2560
      %2562 = vdwg.mxu0
      %v2565 = vunpack.c.l.b16 %v2246
      %v2566 = vunpack.c.l.b16 %v2247
      %v2567 = vpack.c.b16 %v2566, %v2565
      %2568 = vrot.lane.b32.xlu0 %v948, 64
      %v2569 = vpop.permute.xlu0 %2568
      %v2572 = vsel %vm1647, %v2567, 0
      %2574 = vmatpush.bf16.msra.mxu0 0
      %2575 = vmatpush.bf16.msra.mxu0 0
      %2576 = vmatpush.bf16.msra.mxu0 0
      %2577 = vmatpush.bf16.msra.mxu0 0
      %2578 = vmatpush.bf16.msra.mxu0 0
      %2579 = vmatpush.bf16.msra.mxu0 0
      %2580 = vmatpush.bf16.msra.mxu0 0
      %2581 = vmatpush.bf16.msra.mxu0 %v2569
      %2582 = vmatmul.bf16.gmra.mxu0 %v2572
      %v2583 = vpop.f32.mrf.mxu0
      %v2584 = vadd.f32 0.0, %v2583
      %v2585 = vpop.f32.mrf.mxu0
      %v2586 = vadd.f32 0.0, %v2585
      %2587 = vdwg.mxu0
      %v2590 = vunpack.c.l.b16 %v2248
      %v2591 = vunpack.c.l.b16 %v2249
      %v2592 = vpack.c.b16 %v2591, %v2590
      %2593 = vrot.lane.b32.xlu0 %v973, 64
      %v2594 = vpop.permute.xlu0 %2593
      %v2597 = vsel %vm1647, %v2592, 0
      %2599 = vmatpush.bf16.msra.mxu0 0
      %2600 = vmatpush.bf16.msra.mxu0 0
      %2601 = vmatpush.bf16.msra.mxu0 0
      %2602 = vmatpush.bf16.msra.mxu0 0
      %2603 = vmatpush.bf16.msra.mxu0 0
      %2604 = vmatpush.bf16.msra.mxu0 0
      %2605 = vmatpush.bf16.msra.mxu0 0
      %2606 = vmatpush.bf16.msra.mxu0 %v2594
      %2607 = vmatmul.bf16.gmra.mxu0 %v2597
      %v2608 = vpop.f32.mrf.mxu0
      %v2609 = vadd.f32 0.0, %v2608
      %v2610 = vpop.f32.mrf.mxu0
      %v2611 = vadd.f32 0.0, %v2610
      %2612 = vdwg.mxu0
      %v2615 = vunpack.c.l.b16 %v2250
      %v2616 = vunpack.c.l.b16 %v2251
      %v2617 = vpack.c.b16 %v2616, %v2615
      %2618 = vrot.lane.b32.xlu0 %v998, 64
      %v2619 = vpop.permute.xlu0 %2618
      %v2622 = vsel %vm1647, %v2617, 0
      %2624 = vmatpush.bf16.msra.mxu0 0
      %2625 = vmatpush.bf16.msra.mxu0 0
      %2626 = vmatpush.bf16.msra.mxu0 0
      %2627 = vmatpush.bf16.msra.mxu0 0
      %2628 = vmatpush.bf16.msra.mxu0 0
      %2629 = vmatpush.bf16.msra.mxu0 0
      %2630 = vmatpush.bf16.msra.mxu0 0
      %2631 = vmatpush.bf16.msra.mxu0 %v2619
      %2632 = vmatmul.bf16.gmra.mxu0 %v2622
      %v2633 = vpop.f32.mrf.mxu0
      %v2634 = vadd.f32 0.0, %v2633
      %v2635 = vpop.f32.mrf.mxu0
      %v2636 = vadd.f32 0.0, %v2635
      %2637 = vdwg.mxu0
      %v2640 = vunpack.c.l.b16 %v2252
      %v2641 = vunpack.c.l.b16 %v2253
      %v2642 = vpack.c.b16 %v2641, %v2640
      %2643 = vrot.lane.b32.xlu0 %v1023, 64
      %v2644 = vpop.permute.xlu0 %2643
      %v2647 = vsel %vm1647, %v2642, 0
      %2649 = vmatpush.bf16.msra.mxu0 0
      %2650 = vmatpush.bf16.msra.mxu0 0
      %2651 = vmatpush.bf16.msra.mxu0 0
      %2652 = vmatpush.bf16.msra.mxu0 0
      %2653 = vmatpush.bf16.msra.mxu0 0
      %2654 = vmatpush.bf16.msra.mxu0 0
      %2655 = vmatpush.bf16.msra.mxu0 0
      %2656 = vmatpush.bf16.msra.mxu0 %v2644
      %2657 = vmatmul.bf16.gmra.mxu0 %v2647
      %v2658 = vpop.f32.mrf.mxu0
      %v2659 = vadd.f32 0.0, %v2658
      %v2660 = vpop.f32.mrf.mxu0
      %v2661 = vadd.f32 0.0, %v2660
      %2662 = vdwg.mxu0
      %v2665 = vunpack.c.l.b16 %v2254
      %v2666 = vunpack.c.l.b16 %v2255
      %v2667 = vpack.c.b16 %v2666, %v2665
      %2668 = vrot.lane.b32.xlu0 %v1048, 64
      %v2669 = vpop.permute.xlu0 %2668
      %v2672 = vsel %vm1647, %v2667, 0
      %2674 = vmatpush.bf16.msra.mxu0 0
      %2675 = vmatpush.bf16.msra.mxu0 0
      %2676 = vmatpush.bf16.msra.mxu0 0
      %2677 = vmatpush.bf16.msra.mxu0 0
      %2678 = vmatpush.bf16.msra.mxu0 0
      %2679 = vmatpush.bf16.msra.mxu0 0
      %2680 = vmatpush.bf16.msra.mxu0 0
      %2681 = vmatpush.bf16.msra.mxu0 %v2669
      %2682 = vmatmul.bf16.gmra.mxu0 %v2672
      %v2683 = vpop.f32.mrf.mxu0
      %v2684 = vadd.f32 0.0, %v2683
      %v2685 = vpop.f32.mrf.mxu0
      %v2686 = vadd.f32 0.0, %v2685
      %2687 = vdwg.mxu0
      %v2690 = vunpack.c.l.b16 %v2256
      %v2691 = vunpack.c.l.b16 %v2257
      %v2692 = vpack.c.b16 %v2691, %v2690
      %2693 = vrot.lane.b32.xlu0 %v1073, 64
      %v2694 = vpop.permute.xlu0 %2693
      %v2697 = vsel %vm1647, %v2692, 0
      %2699 = vmatpush.bf16.msra.mxu0 0
      %2700 = vmatpush.bf16.msra.mxu0 0
      %2701 = vmatpush.bf16.msra.mxu0 0
      %2702 = vmatpush.bf16.msra.mxu0 0
      %2703 = vmatpush.bf16.msra.mxu0 0
      %2704 = vmatpush.bf16.msra.mxu0 0
      %2705 = vmatpush.bf16.msra.mxu0 0
      %2706 = vmatpush.bf16.msra.mxu0 %v2694
      %2707 = vmatmul.bf16.gmra.mxu0 %v2697
      %v2708 = vpop.f32.mrf.mxu0
      %v2709 = vadd.f32 0.0, %v2708
      %v2710 = vpop.f32.mrf.mxu0
      %v2711 = vadd.f32 0.0, %v2710
      %2712 = vdwg.mxu0
      %v2715 = vunpack.c.l.b16 %v2258
      %v2716 = vunpack.c.l.b16 %v2259
      %v2717 = vpack.c.b16 %v2716, %v2715
      %2718 = vrot.lane.b32.xlu0 %v1098, 64
      %v2719 = vpop.permute.xlu0 %2718
      %v2722 = vsel %vm1647, %v2717, 0
      %2724 = vmatpush.bf16.msra.mxu0 0
      %2725 = vmatpush.bf16.msra.mxu0 0
      %2726 = vmatpush.bf16.msra.mxu0 0
      %2727 = vmatpush.bf16.msra.mxu0 0
      %2728 = vmatpush.bf16.msra.mxu0 0
      %2729 = vmatpush.bf16.msra.mxu0 0
      %2730 = vmatpush.bf16.msra.mxu0 0
      %2731 = vmatpush.bf16.msra.mxu0 %v2719
      %2732 = vmatmul.bf16.gmra.mxu0 %v2722
      %v2733 = vpop.f32.mrf.mxu0
      %v2734 = vadd.f32 0.0, %v2733
      %v2735 = vpop.f32.mrf.mxu0
      %v2736 = vadd.f32 0.0, %v2735
      %2737 = vdwg.mxu0
      %v2740 = vunpack.c.l.b16 %v2260
      %v2741 = vunpack.c.l.b16 %v2261
      %v2742 = vpack.c.b16 %v2741, %v2740
      %2743 = vrot.lane.b32.xlu0 %v1123, 64
      %v2744 = vpop.permute.xlu0 %2743
      %v2747 = vsel %vm1647, %v2742, 0
      %2749 = vmatpush.bf16.msra.mxu0 0
      %2750 = vmatpush.bf16.msra.mxu0 0
      %2751 = vmatpush.bf16.msra.mxu0 0
      %2752 = vmatpush.bf16.msra.mxu0 0
      %2753 = vmatpush.bf16.msra.mxu0 0
      %2754 = vmatpush.bf16.msra.mxu0 0
      %2755 = vmatpush.bf16.msra.mxu0 0
      %2756 = vmatpush.bf16.msra.mxu0 %v2744
      %2757 = vmatmul.bf16.gmra.mxu0 %v2747
      %v2758 = vpop.f32.mrf.mxu0
      %v2759 = vadd.f32 0.0, %v2758
      %v2760 = vpop.f32.mrf.mxu0
      %v2761 = vadd.f32 0.0, %v2760
      %2762 = vdwg.mxu0
      %v2765 = vunpack.c.l.b16 %v2262
      %v2766 = vunpack.c.l.b16 %v2263
      %v2767 = vpack.c.b16 %v2766, %v2765
      %2768 = vrot.lane.b32.xlu0 %v1148, 64
      %v2769 = vpop.permute.xlu0 %2768
      %v2772 = vsel %vm1647, %v2767, 0
      %2774 = vmatpush.bf16.msra.mxu0 0
      %2775 = vmatpush.bf16.msra.mxu0 0
      %2776 = vmatpush.bf16.msra.mxu0 0
      %2777 = vmatpush.bf16.msra.mxu0 0
      %2778 = vmatpush.bf16.msra.mxu0 0
      %2779 = vmatpush.bf16.msra.mxu0 0
      %2780 = vmatpush.bf16.msra.mxu0 0
      %2781 = vmatpush.bf16.msra.mxu0 %v2769
      %2782 = vmatmul.bf16.gmra.mxu0 %v2772
      %v2783 = vpop.f32.mrf.mxu0
      %v2784 = vadd.f32 0.0, %v2783
      %v2785 = vpop.f32.mrf.mxu0
      %v2786 = vadd.f32 0.0, %v2785
      %2787 = vdwg.mxu0
      %v2790 = vunpack.c.l.b16 %v2264
      %v2791 = vunpack.c.l.b16 %v2265
      %v2792 = vpack.c.b16 %v2791, %v2790
      %2793 = vrot.lane.b32.xlu0 %v1173, 64
      %v2794 = vpop.permute.xlu0 %2793
      %v2797 = vsel %vm1647, %v2792, 0
      %2799 = vmatpush.bf16.msra.mxu0 0
      %2800 = vmatpush.bf16.msra.mxu0 0
      %2801 = vmatpush.bf16.msra.mxu0 0
      %2802 = vmatpush.bf16.msra.mxu0 0
      %2803 = vmatpush.bf16.msra.mxu0 0
      %2804 = vmatpush.bf16.msra.mxu0 0
      %2805 = vmatpush.bf16.msra.mxu0 0
      %2806 = vmatpush.bf16.msra.mxu0 %v2794
      %2807 = vmatmul.bf16.gmra.mxu0 %v2797
      %v2808 = vpop.f32.mrf.mxu0
      %v2809 = vadd.f32 0.0, %v2808
      %v2810 = vpop.f32.mrf.mxu0
      %v2811 = vadd.f32 0.0, %v2810
      %2812 = vdwg.mxu0
      %v2815 = vunpack.c.l.b16 %v2266
      %v2816 = vunpack.c.l.b16 %v2267
      %v2817 = vpack.c.b16 %v2816, %v2815
      %2818 = vrot.lane.b32.xlu0 %v1198, 64
      %v2819 = vpop.permute.xlu0 %2818
      %v2822 = vsel %vm1647, %v2817, 0
      %2824 = vmatpush.bf16.msra.mxu0 0
      %2825 = vmatpush.bf16.msra.mxu0 0
      %2826 = vmatpush.bf16.msra.mxu0 0
      %2827 = vmatpush.bf16.msra.mxu0 0
      %2828 = vmatpush.bf16.msra.mxu0 0
      %2829 = vmatpush.bf16.msra.mxu0 0
      %2830 = vmatpush.bf16.msra.mxu0 0
      %2831 = vmatpush.bf16.msra.mxu0 %v2819
      %2832 = vmatmul.bf16.gmra.mxu0 %v2822
      %v2833 = vpop.f32.mrf.mxu0
      %v2834 = vadd.f32 0.0, %v2833
      %v2835 = vpop.f32.mrf.mxu0
      %v2836 = vadd.f32 0.0, %v2835
      %2837 = vdwg.mxu0
      %v2840 = vunpack.c.l.b16 %v2268
      %v2841 = vunpack.c.l.b16 %v2269
      %v2842 = vpack.c.b16 %v2841, %v2840
      %2843 = vrot.lane.b32.xlu0 %v1223, 64
      %v2844 = vpop.permute.xlu0 %2843
      %v2847 = vsel %vm1647, %v2842, 0
      %2849 = vmatpush.bf16.msra.mxu0 0
      %2850 = vmatpush.bf16.msra.mxu0 0
      %2851 = vmatpush.bf16.msra.mxu0 0
      %2852 = vmatpush.bf16.msra.mxu0 0
      %2853 = vmatpush.bf16.msra.mxu0 0
      %2854 = vmatpush.bf16.msra.mxu0 0
      %2855 = vmatpush.bf16.msra.mxu0 0
      %2856 = vmatpush.bf16.msra.mxu0 %v2844
      %2857 = vmatmul.bf16.gmra.mxu0 %v2847
      %v2858 = vpop.f32.mrf.mxu0
      %v2859 = vadd.f32 0.0, %v2858
      %v2860 = vpop.f32.mrf.mxu0
      %v2861 = vadd.f32 0.0, %v2860
      %2862 = vdwg.mxu0
      %v2865 = vunpack.c.l.b16 %v2270
      %v2866 = vunpack.c.l.b16 %v2271
      %v2867 = vpack.c.b16 %v2866, %v2865
      %2868 = vrot.lane.b32.xlu0 %v1248, 64
      %v2869 = vpop.permute.xlu0 %2868
      %v2872 = vsel %vm1647, %v2867, 0
      %2874 = vmatpush.bf16.msra.mxu0 0
      %2875 = vmatpush.bf16.msra.mxu0 0
      %2876 = vmatpush.bf16.msra.mxu0 0
      %2877 = vmatpush.bf16.msra.mxu0 0
      %2878 = vmatpush.bf16.msra.mxu0 0
      %2879 = vmatpush.bf16.msra.mxu0 0
      %2880 = vmatpush.bf16.msra.mxu0 0
      %2881 = vmatpush.bf16.msra.mxu0 %v2869
      %2882 = vmatmul.bf16.gmra.mxu0 %v2872
      %v2883 = vpop.f32.mrf.mxu0
      %v2884 = vadd.f32 0.0, %v2883
      %v2885 = vpop.f32.mrf.mxu0
      %v2886 = vadd.f32 0.0, %v2885
      %2887 = vdwg.mxu0
      %v2890 = vunpack.c.l.b16 %v2272
      %v2891 = vunpack.c.l.b16 %v2273
      %v2892 = vpack.c.b16 %v2891, %v2890
      %2893 = vrot.lane.b32.xlu0 %v1273, 64
      %v2894 = vpop.permute.xlu0 %2893
      %v2897 = vsel %vm1647, %v2892, 0
      %2899 = vmatpush.bf16.msra.mxu0 0
      %2900 = vmatpush.bf16.msra.mxu0 0
      %2901 = vmatpush.bf16.msra.mxu0 0
      %2902 = vmatpush.bf16.msra.mxu0 0
      %2903 = vmatpush.bf16.msra.mxu0 0
      %2904 = vmatpush.bf16.msra.mxu0 0
      %2905 = vmatpush.bf16.msra.mxu0 0
      %2906 = vmatpush.bf16.msra.mxu0 %v2894
      %2907 = vmatmul.bf16.gmra.mxu0 %v2897
      %v2908 = vpop.f32.mrf.mxu0
      %v2909 = vadd.f32 0.0, %v2908
      %v2910 = vpop.f32.mrf.mxu0
      %v2911 = vadd.f32 0.0, %v2910
      %2912 = vdwg.mxu0
      %v2915 = vunpack.c.l.b16 %v2274
      %v2916 = vunpack.c.l.b16 %v2275
      %v2917 = vpack.c.b16 %v2916, %v2915
      %2918 = vrot.lane.b32.xlu0 %v1298, 64
      %v2919 = vpop.permute.xlu0 %2918
      %v2922 = vsel %vm1647, %v2917, 0
      %2924 = vmatpush.bf16.msra.mxu0 0
      %2925 = vmatpush.bf16.msra.mxu0 0
      %2926 = vmatpush.bf16.msra.mxu0 0
      %2927 = vmatpush.bf16.msra.mxu0 0
      %2928 = vmatpush.bf16.msra.mxu0 0
      %2929 = vmatpush.bf16.msra.mxu0 0
      %2930 = vmatpush.bf16.msra.mxu0 0
      %2931 = vmatpush.bf16.msra.mxu0 %v2919
      %2932 = vmatmul.bf16.gmra.mxu0 %v2922
      %v2933 = vpop.f32.mrf.mxu0
      %v2934 = vadd.f32 0.0, %v2933
      %v2935 = vpop.f32.mrf.mxu0
      %v2936 = vadd.f32 0.0, %v2935
      %2937 = vdwg.mxu0
      %v2940 = vunpack.c.l.b16 %v2276
      %v2941 = vunpack.c.l.b16 %v2277
      %v2942 = vpack.c.b16 %v2941, %v2940
      %2943 = vrot.lane.b32.xlu0 %v1323, 64
      %v2944 = vpop.permute.xlu0 %2943
      %v2947 = vsel %vm1647, %v2942, 0
      %2949 = vmatpush.bf16.msra.mxu0 0
      %2950 = vmatpush.bf16.msra.mxu0 0
      %2951 = vmatpush.bf16.msra.mxu0 0
      %2952 = vmatpush.bf16.msra.mxu0 0
      %2953 = vmatpush.bf16.msra.mxu0 0
      %2954 = vmatpush.bf16.msra.mxu0 0
      %2955 = vmatpush.bf16.msra.mxu0 0
      %2956 = vmatpush.bf16.msra.mxu0 %v2944
      %2957 = vmatmul.bf16.gmra.mxu0 %v2947
      %v2958 = vpop.f32.mrf.mxu0
      %v2959 = vadd.f32 0.0, %v2958
      %v2960 = vpop.f32.mrf.mxu0
      %v2961 = vadd.f32 0.0, %v2960
      %2962 = vdwg.mxu0
      %v2965 = vunpack.c.l.b16 %v2278
      %v2966 = vunpack.c.l.b16 %v2279
      %v2967 = vpack.c.b16 %v2966, %v2965
      %2968 = vrot.lane.b32.xlu0 %v1348, 64
      %v2969 = vpop.permute.xlu0 %2968
      %v2972 = vsel %vm1647, %v2967, 0
      %2974 = vmatpush.bf16.msra.mxu0 0
      %2975 = vmatpush.bf16.msra.mxu0 0
      %2976 = vmatpush.bf16.msra.mxu0 0
      %2977 = vmatpush.bf16.msra.mxu0 0
      %2978 = vmatpush.bf16.msra.mxu0 0
      %2979 = vmatpush.bf16.msra.mxu0 0
      %2980 = vmatpush.bf16.msra.mxu0 0
      %2981 = vmatpush.bf16.msra.mxu0 %v2969
      %2982 = vmatmul.bf16.gmra.mxu0 %v2972
      %v2983 = vpop.f32.mrf.mxu0
      %v2984 = vadd.f32 0.0, %v2983
      %v2985 = vpop.f32.mrf.mxu0
      %v2986 = vadd.f32 0.0, %v2985
      %2987 = vdwg.mxu0
      %v2990 = vunpack.c.l.b16 %v2280
      %v2991 = vunpack.c.l.b16 %v2281
      %v2992 = vpack.c.b16 %v2991, %v2990
      %2993 = vrot.lane.b32.xlu0 %v1373, 64
      %v2994 = vpop.permute.xlu0 %2993
      %v2997 = vsel %vm1647, %v2992, 0
      %2999 = vmatpush.bf16.msra.mxu0 0
      %3000 = vmatpush.bf16.msra.mxu0 0
      %3001 = vmatpush.bf16.msra.mxu0 0
      %3002 = vmatpush.bf16.msra.mxu0 0
      %3003 = vmatpush.bf16.msra.mxu0 0
      %3004 = vmatpush.bf16.msra.mxu0 0
      %3005 = vmatpush.bf16.msra.mxu0 0
      %3006 = vmatpush.bf16.msra.mxu0 %v2994
      %3007 = vmatmul.bf16.gmra.mxu0 %v2997
      %v3008 = vpop.f32.mrf.mxu0
      %v3009 = vadd.f32 0.0, %v3008
      %v3010 = vpop.f32.mrf.mxu0
      %v3011 = vadd.f32 0.0, %v3010
      %3012 = vdwg.mxu0
      %v3015 = vunpack.c.l.b16 %v2282
      %v3016 = vunpack.c.l.b16 %v2283
      %v3017 = vpack.c.b16 %v3016, %v3015
      %3018 = vrot.lane.b32.xlu0 %v1398, 64
      %v3019 = vpop.permute.xlu0 %3018
      %v3022 = vsel %vm1647, %v3017, 0
      %3024 = vmatpush.bf16.msra.mxu0 0
      %3025 = vmatpush.bf16.msra.mxu0 0
      %3026 = vmatpush.bf16.msra.mxu0 0
      %3027 = vmatpush.bf16.msra.mxu0 0
      %3028 = vmatpush.bf16.msra.mxu0 0
      %3029 = vmatpush.bf16.msra.mxu0 0
      %3030 = vmatpush.bf16.msra.mxu0 0
      %3031 = vmatpush.bf16.msra.mxu0 %v3019
      %3032 = vmatmul.bf16.gmra.mxu0 %v3022
      %v3033 = vpop.f32.mrf.mxu0
      %v3034 = vadd.f32 0.0, %v3033
      %v3035 = vpop.f32.mrf.mxu0
      %v3036 = vadd.f32 0.0, %v3035
      %3037 = vdwg.mxu0
      %v3040 = vunpack.c.l.b16 %v2284
      %v3041 = vunpack.c.l.b16 %v2285
      %v3042 = vpack.c.b16 %v3041, %v3040
      %3043 = vrot.lane.b32.xlu0 %v1423, 64
      %v3044 = vpop.permute.xlu0 %3043
      %v3047 = vsel %vm1647, %v3042, 0
      %3049 = vmatpush.bf16.msra.mxu0 0
      %3050 = vmatpush.bf16.msra.mxu0 0
      %3051 = vmatpush.bf16.msra.mxu0 0
      %3052 = vmatpush.bf16.msra.mxu0 0
      %3053 = vmatpush.bf16.msra.mxu0 0
      %3054 = vmatpush.bf16.msra.mxu0 0
      %3055 = vmatpush.bf16.msra.mxu0 0
      %3056 = vmatpush.bf16.msra.mxu0 %v3044
      %3057 = vmatmul.bf16.gmra.mxu0 %v3047
      %v3058 = vpop.f32.mrf.mxu0
      %v3059 = vadd.f32 0.0, %v3058
      %v3060 = vpop.f32.mrf.mxu0
      %v3061 = vadd.f32 0.0, %v3060
      %3062 = vdwg.mxu0
      %v3065 = vunpack.c.l.b16 %v2286
      %v3066 = vunpack.c.l.b16 %v2287
      %v3067 = vpack.c.b16 %v3066, %v3065
      %3068 = vrot.lane.b32.xlu0 %v1448, 64
      %v3069 = vpop.permute.xlu0 %3068
      %v3072 = vsel %vm1647, %v3067, 0
      %3074 = vmatpush.bf16.msra.mxu0 0
      %3075 = vmatpush.bf16.msra.mxu0 0
      %3076 = vmatpush.bf16.msra.mxu0 0
      %3077 = vmatpush.bf16.msra.mxu0 0
      %3078 = vmatpush.bf16.msra.mxu0 0
      %3079 = vmatpush.bf16.msra.mxu0 0
      %3080 = vmatpush.bf16.msra.mxu0 0
      %3081 = vmatpush.bf16.msra.mxu0 %v3069
      %3082 = vmatmul.bf16.gmra.mxu0 %v3072
      %v3083 = vpop.f32.mrf.mxu0
      %v3084 = vadd.f32 0.0, %v3083
      %v3085 = vpop.f32.mrf.mxu0
      %v3086 = vadd.f32 0.0, %v3085
      %3087 = vdwg.mxu0
      %v3088 = vrcp.pop %v2034
      %v3089 = vrcp.pop %v2037
      %v3090 = vrcp.pop %v2040
      %v3091 = vrcp.pop %v2043
      %v3092 = vrcp.pop %v2046
      %v3093 = vrcp.pop %v2049
      %v3094 = vrcp.pop %v2052
      %v3095 = vrcp.pop %v2055
      %v3096 = vrcp.pop %v2058
      %v3097 = vrcp.pop %v2061
      %v3098 = vrcp.pop %v2064
      %v3099 = vrcp.pop %v2067
      %v3100 = vrcp.pop %v2070
      %v3101 = vrcp.pop %v2073
      %v3102 = vrcp.pop %v2076
      %v3103 = vrcp.pop %v2079
      %v3104 = vrcp.pop %v2082
      %v3105 = vrcp.pop %v2085
      %v3106 = vrcp.pop %v2088
      %v3107 = vrcp.pop %v2091
      %v3108 = vrcp.pop %v2094
      %v3109 = vrcp.pop %v2097
      %v3110 = vrcp.pop %v2100
      %v3111 = vrcp.pop %v2103
      %v3112 = vrcp.pop %v2106
      %v3113 = vrcp.pop %v2109
      %v3114 = vrcp.pop %v2112
      %v3115 = vrcp.pop %v2115
      %v3116 = vrcp.pop %v2118
      %v3117 = vrcp.pop %v2121
      %v3118 = vrcp.pop %v2124
      %v3119 = vrcp.pop %v2127
      %v3120 = vrcp.pop %v2130
      %v3121 = vrcp.pop %v2133
      %v3122 = vrcp.pop %v2136
      %v3123 = vrcp.pop %v2139
      %v3124 = vrcp.pop %v2142
      %v3125 = vrcp.pop %v2145
      %v3126 = vrcp.pop %v2148
      %v3127 = vrcp.pop %v2151
      %v3128 = vrcp.pop %v2154
      %v3129 = vrcp.pop %v2157
      %v3130 = vrcp.pop %v2160
      %v3131 = vrcp.pop %v2163
      %v3132 = vrcp.pop %v2166
      %v3133 = vrcp.pop %v2169
      %v3134 = vrcp.pop %v2172
      %v3135 = vrcp.pop %v2175
      %v3136 = vrcp.pop %v2178
      %v3137 = vrcp.pop %v2181
      %v3138 = vrcp.pop %v2184
      %v3139 = vrcp.pop %v2187
      %v3140 = vrcp.pop %v2190
      %v3141 = vrcp.pop %v2193
      %v3142 = vrcp.pop %v2196
      %v3143 = vrcp.pop %v2199
      %v3144 = vrcp.pop %v2202
      %v3145 = vrcp.pop %v2205
      %v3146 = vrcp.pop %v2208
      %v3147 = vrcp.pop %v2211
      %v3148 = vrcp.pop %v2214
      %v3149 = vrcp.pop %v2217
      %v3150 = vrcp.pop %v2220
      %v3151 = vrcp.pop %v2223
      %v3152 = vmul.f32 %v2309, %v3088
      %v3153 = vmul.f32 %v2311, %v3089
      %v3154 = vmul.f32 %v2334, %v3090
      %v3155 = vmul.f32 %v2336, %v3091
      %v3156 = vmul.f32 %v2359, %v3092
      %v3157 = vmul.f32 %v2361, %v3093
      %v3158 = vmul.f32 %v2384, %v3094
      %v3159 = vmul.f32 %v2386, %v3095
      %v3160 = vmul.f32 %v2409, %v3096
      %v3161 = vmul.f32 %v2411, %v3097
      %v3162 = vmul.f32 %v2434, %v3098
      %v3163 = vmul.f32 %v2436, %v3099
      %v3164 = vmul.f32 %v2459, %v3100
      %v3165 = vmul.f32 %v2461, %v3101
      %v3166 = vmul.f32 %v2484, %v3102
      %v3167 = vmul.f32 %v2486, %v3103
      %v3168 = vmul.f32 %v2509, %v3104
      %v3169 = vmul.f32 %v2511, %v3105
      %v3170 = vmul.f32 %v2534, %v3106
      %v3171 = vmul.f32 %v2536, %v3107
      %v3172 = vmul.f32 %v2559, %v3108
      %v3173 = vmul.f32 %v2561, %v3109
      %v3174 = vmul.f32 %v2584, %v3110
      %v3175 = vmul.f32 %v2586, %v3111
      %v3176 = vmul.f32 %v2609, %v3112
      %v3177 = vmul.f32 %v2611, %v3113
      %v3178 = vmul.f32 %v2634, %v3114
      %v3179 = vmul.f32 %v2636, %v3115
      %v3180 = vmul.f32 %v2659, %v3116
      %v3181 = vmul.f32 %v2661, %v3117
      %v3182 = vmul.f32 %v2684, %v3118
      %v3183 = vmul.f32 %v2686, %v3119
      %v3184 = vmul.f32 %v2709, %v3120
      %v3185 = vmul.f32 %v2711, %v3121
      %v3186 = vmul.f32 %v2734, %v3122
      %v3187 = vmul.f32 %v2736, %v3123
      %v3188 = vmul.f32 %v2759, %v3124
      %v3189 = vmul.f32 %v2761, %v3125
      %v3190 = vmul.f32 %v2784, %v3126
      %v3191 = vmul.f32 %v2786, %v3127
      %v3192 = vmul.f32 %v2809, %v3128
      %v3193 = vmul.f32 %v2811, %v3129
      %v3194 = vmul.f32 %v2834, %v3130
      %v3195 = vmul.f32 %v2836, %v3131
      %v3196 = vmul.f32 %v2859, %v3132
      %v3197 = vmul.f32 %v2861, %v3133
      %v3198 = vmul.f32 %v2884, %v3134
      %v3199 = vmul.f32 %v2886, %v3135
      %v3200 = vmul.f32 %v2909, %v3136
      %v3201 = vmul.f32 %v2911, %v3137
      %v3202 = vmul.f32 %v2934, %v3138
      %v3203 = vmul.f32 %v2936, %v3139
      %v3204 = vmul.f32 %v2959, %v3140
      %v3205 = vmul.f32 %v2961, %v3141
      %v3206 = vmul.f32 %v2984, %v3142
      %v3207 = vmul.f32 %v2986, %v3143
      %v3208 = vmul.f32 %v3009, %v3144
      %v3209 = vmul.f32 %v3011, %v3145
      %v3210 = vmul.f32 %v3034, %v3146
      %v3211 = vmul.f32 %v3036, %v3147
      %v3212 = vmul.f32 %v3059, %v3148
      %v3213 = vmul.f32 %v3061, %v3149
      %v3214 = vmul.f32 %v3084, %v3150
      %v3215 = vmul.f32 %v3086, %v3151
      %v3216 = vpack.c.bf16 %v3152, %v3152
      %v3217 = vpack.c.bf16 %v3153, %v3153
      %v3218 = vpack.c.bf16 %v3154, %v3154
      %v3219 = vpack.c.bf16 %v3155, %v3155
      %v3220 = vpack.c.bf16 %v3156, %v3156
      %v3221 = vpack.c.bf16 %v3157, %v3157
      %v3222 = vpack.c.bf16 %v3158, %v3158
      %v3223 = vpack.c.bf16 %v3159, %v3159
      %v3224 = vpack.c.bf16 %v3160, %v3160
      %v3225 = vpack.c.bf16 %v3161, %v3161
      %v3226 = vpack.c.bf16 %v3162, %v3162
      %v3227 = vpack.c.bf16 %v3163, %v3163
      %v3228 = vpack.c.bf16 %v3164, %v3164
      %v3229 = vpack.c.bf16 %v3165, %v3165
      %v3230 = vpack.c.bf16 %v3166, %v3166
      %v3231 = vpack.c.bf16 %v3167, %v3167
      %v3232 = vpack.c.bf16 %v3168, %v3168
      %v3233 = vpack.c.bf16 %v3169, %v3169
      %v3234 = vpack.c.bf16 %v3170, %v3170
      %v3235 = vpack.c.bf16 %v3171, %v3171
      %v3236 = vpack.c.bf16 %v3172, %v3172
      %v3237 = vpack.c.bf16 %v3173, %v3173
      %v3238 = vpack.c.bf16 %v3174, %v3174
      %v3239 = vpack.c.bf16 %v3175, %v3175
      %v3240 = vpack.c.bf16 %v3176, %v3176
      %v3241 = vpack.c.bf16 %v3177, %v3177
      %v3242 = vpack.c.bf16 %v3178, %v3178
      %v3243 = vpack.c.bf16 %v3179, %v3179
      %v3244 = vpack.c.bf16 %v3180, %v3180
      %v3245 = vpack.c.bf16 %v3181, %v3181
      %v3246 = vpack.c.bf16 %v3182, %v3182
      %v3247 = vpack.c.bf16 %v3183, %v3183
      %v3248 = vpack.c.bf16 %v3184, %v3184
      %v3249 = vpack.c.bf16 %v3185, %v3185
      %v3250 = vpack.c.bf16 %v3186, %v3186
      %v3251 = vpack.c.bf16 %v3187, %v3187
      %v3252 = vpack.c.bf16 %v3188, %v3188
      %v3253 = vpack.c.bf16 %v3189, %v3189
      %v3254 = vpack.c.bf16 %v3190, %v3190
      %v3255 = vpack.c.bf16 %v3191, %v3191
      %v3256 = vpack.c.bf16 %v3192, %v3192
      %v3257 = vpack.c.bf16 %v3193, %v3193
      %v3258 = vpack.c.bf16 %v3194, %v3194
      %v3259 = vpack.c.bf16 %v3195, %v3195
      %v3260 = vpack.c.bf16 %v3196, %v3196
      %v3261 = vpack.c.bf16 %v3197, %v3197
      %v3262 = vpack.c.bf16 %v3198, %v3198
      %v3263 = vpack.c.bf16 %v3199, %v3199
      %v3264 = vpack.c.bf16 %v3200, %v3200
      %v3265 = vpack.c.bf16 %v3201, %v3201
      %v3266 = vpack.c.bf16 %v3202, %v3202
      %v3267 = vpack.c.bf16 %v3203, %v3203
      %v3268 = vpack.c.bf16 %v3204, %v3204
      %v3269 = vpack.c.bf16 %v3205, %v3205
      %v3270 = vpack.c.bf16 %v3206, %v3206
      %v3271 = vpack.c.bf16 %v3207, %v3207
      %v3272 = vpack.c.bf16 %v3208, %v3208
      %v3273 = vpack.c.bf16 %v3209, %v3209
      %v3274 = vpack.c.bf16 %v3210, %v3210
      %v3275 = vpack.c.bf16 %v3211, %v3211
      %v3276 = vpack.c.bf16 %v3212, %v3212
      %v3277 = vpack.c.bf16 %v3213, %v3213
      %v3278 = vpack.c.bf16 %v3214, %v3214
      %v3279 = vpack.c.bf16 %v3215, %v3215
      %v3280 = vld [vmem:[%s3] sm:$0xf]
      %v3281 = vld [vmem:[%s3 + $0x4] sm:$0xf]
      %v3282 = vld [vmem:[%s3 + $0x8] sm:$0xf]
      %v3283 = vld [vmem:[%s3 + $0xc] sm:$0xf]
      %v3300 = vunpack.c.l.b16 %v3216
      %v3301 = vunpack.c.l.b16 %v3217
      %v3302 = vunpack.c.l.b16 %v3218
      %v3303 = vunpack.c.l.b16 %v3219
      %v3304 = vunpack.c.l.b16 %v3220
      %v3305 = vunpack.c.l.b16 %v3221
      %v3306 = vunpack.c.l.b16 %v3222
      %v3307 = vunpack.c.l.b16 %v3223
      %v3308 = vunpack.c.l.b16 %v3224
      %v3309 = vunpack.c.l.b16 %v3225
      %v3310 = vunpack.c.l.b16 %v3226
      %v3311 = vunpack.c.l.b16 %v3227
      %v3312 = vunpack.c.l.b16 %v3228
      %v3313 = vunpack.c.l.b16 %v3229
      %v3314 = vunpack.c.l.b16 %v3230
      %v3315 = vunpack.c.l.b16 %v3231
      %v3316 = vpack.c.b16 %v3301, %v3300
      %v3317 = vpack.c.b16 %v3303, %v3302
      %v3318 = vpack.c.b16 %v3305, %v3304
      %v3319 = vpack.c.b16 %v3307, %v3306
      %v3320 = vpack.c.b16 %v3309, %v3308
      %v3321 = vpack.c.b16 %v3311, %v3310
      %v3322 = vpack.c.b16 %v3313, %v3312
      %v3323 = vpack.c.b16 %v3315, %v3314
      %v3325 = vsel %vm675, %v3316, 0
      %v3328 = vsel %vm675, %v3317, 0
      %v3331 = vsel %vm675, %v3318, 0
      %v3334 = vsel %vm675, %v3319, 0
      %v3337 = vsel %vm675, %v3320, 0
      %v3340 = vsel %vm675, %v3321, 0
      %v3343 = vsel %vm675, %v3322, 0
      %v3346 = vsel %vm675, %v3323, 0
      %vm3348 = vcmask 1043456
      %v3350 = vsel %vm3348, %v3280, 0
      %3352 = vmatpush.bf16.msra.mxu0 0
      %3353 = vmatpush.bf16.msra.mxu0 0
      %3354 = vmatpush.bf16.msra.mxu0 0
      %3355 = vmatpush.bf16.msra.mxu0 0
      %3356 = vmatpush.bf16.msra.mxu0 0
      %3357 = vmatpush.bf16.msra.mxu0 0
      %3358 = vmatpush.bf16.msra.mxu0 0
      %3359 = vmatpush.bf16.msra.mxu0 %v3350
      %3360 = vmatmul.bf16.gmra.mxu0 %v3325
      %v3361 = vpop.f32.mrf.mxu0
      %v3362 = vadd.f32 0.0, %v3361
      %v3363 = vpop.f32.mrf.mxu0
      %v3364 = vadd.f32 0.0, %v3363
      %3365 = vmatmul.bf16.gmra.mxu0 %v3328
      %v3366 = vpop.f32.mrf.mxu0
      %v3367 = vadd.f32 0.0, %v3366
      %v3368 = vpop.f32.mrf.mxu0
      %v3369 = vadd.f32 0.0, %v3368
      %3370 = vmatmul.bf16.gmra.mxu0 %v3331
      %v3371 = vpop.f32.mrf.mxu0
      %v3372 = vadd.f32 0.0, %v3371
      %v3373 = vpop.f32.mrf.mxu0
      %v3374 = vadd.f32 0.0, %v3373
      %3375 = vmatmul.bf16.gmra.mxu0 %v3334
      %v3376 = vpop.f32.mrf.mxu0
      %v3377 = vadd.f32 0.0, %v3376
      %v3378 = vpop.f32.mrf.mxu0
      %v3379 = vadd.f32 0.0, %v3378
      %3380 = vmatmul.bf16.gmra.mxu0 %v3337
      %v3381 = vpop.f32.mrf.mxu0
      %v3382 = vadd.f32 0.0, %v3381
      %v3383 = vpop.f32.mrf.mxu0
      %v3384 = vadd.f32 0.0, %v3383
      %3385 = vmatmul.bf16.gmra.mxu0 %v3340
      %v3386 = vpop.f32.mrf.mxu0
      %v3387 = vadd.f32 0.0, %v3386
      %v3388 = vpop.f32.mrf.mxu0
      %v3389 = vadd.f32 0.0, %v3388
      %3390 = vmatmul.bf16.gmra.mxu0 %v3343
      %v3391 = vpop.f32.mrf.mxu0
      %v3392 = vadd.f32 0.0, %v3391
      %v3393 = vpop.f32.mrf.mxu0
      %v3394 = vadd.f32 0.0, %v3393
      %3395 = vmatmul.bf16.gmra.mxu0 %v3346
      %v3396 = vpop.f32.mrf.mxu0
      %v3397 = vadd.f32 0.0, %v3396
      %v3398 = vpop.f32.mrf.mxu0
      %v3399 = vadd.f32 0.0, %v3398
      %3400 = vdwg.mxu0
      %v3417 = vunpack.c.l.b16 %v3232
      %v3418 = vunpack.c.l.b16 %v3233
      %v3419 = vunpack.c.l.b16 %v3234
      %v3420 = vunpack.c.l.b16 %v3235
      %v3421 = vunpack.c.l.b16 %v3236
      %v3422 = vunpack.c.l.b16 %v3237
      %v3423 = vunpack.c.l.b16 %v3238
      %v3424 = vunpack.c.l.b16 %v3239
      %v3425 = vunpack.c.l.b16 %v3240
      %v3426 = vunpack.c.l.b16 %v3241
      %v3427 = vunpack.c.l.b16 %v3242
      %v3428 = vunpack.c.l.b16 %v3243
      %v3429 = vunpack.c.l.b16 %v3244
      %v3430 = vunpack.c.l.b16 %v3245
      %v3431 = vunpack.c.l.b16 %v3246
      %v3432 = vunpack.c.l.b16 %v3247
      %v3433 = vpack.c.b16 %v3418, %v3417
      %v3434 = vpack.c.b16 %v3420, %v3419
      %v3435 = vpack.c.b16 %v3422, %v3421
      %v3436 = vpack.c.b16 %v3424, %v3423
      %v3437 = vpack.c.b16 %v3426, %v3425
      %v3438 = vpack.c.b16 %v3428, %v3427
      %v3439 = vpack.c.b16 %v3430, %v3429
      %v3440 = vpack.c.b16 %v3432, %v3431
      %v3442 = vsel %vm675, %v3433, 0
      %v3445 = vsel %vm675, %v3434, 0
      %v3448 = vsel %vm675, %v3435, 0
      %v3451 = vsel %vm675, %v3436, 0
      %v3454 = vsel %vm675, %v3437, 0
      %v3457 = vsel %vm675, %v3438, 0
      %v3460 = vsel %vm675, %v3439, 0
      %v3463 = vsel %vm675, %v3440, 0
      %v3466 = vsel %vm3348, %v3281, 0
      %3468 = vmatpush.bf16.msra.mxu0 0
      %3469 = vmatpush.bf16.msra.mxu0 0
      %3470 = vmatpush.bf16.msra.mxu0 0
      %3471 = vmatpush.bf16.msra.mxu0 0
      %3472 = vmatpush.bf16.msra.mxu0 0
      %3473 = vmatpush.bf16.msra.mxu0 0
      %3474 = vmatpush.bf16.msra.mxu0 0
      %3475 = vmatpush.bf16.msra.mxu0 %v3466
      %3476 = vmatmul.bf16.gmra.mxu0 %v3442
      %v3477 = vpop.f32.mrf.mxu0
      %v3478 = vadd.f32 0.0, %v3477
      %v3479 = vpop.f32.mrf.mxu0
      %v3480 = vadd.f32 0.0, %v3479
      %3481 = vmatmul.bf16.gmra.mxu0 %v3445
      %v3482 = vpop.f32.mrf.mxu0
      %v3483 = vadd.f32 0.0, %v3482
      %v3484 = vpop.f32.mrf.mxu0
      %v3485 = vadd.f32 0.0, %v3484
      %3486 = vmatmul.bf16.gmra.mxu0 %v3448
      %v3487 = vpop.f32.mrf.mxu0
      %v3488 = vadd.f32 0.0, %v3487
      %v3489 = vpop.f32.mrf.mxu0
      %v3490 = vadd.f32 0.0, %v3489
      %3491 = vmatmul.bf16.gmra.mxu0 %v3451
      %v3492 = vpop.f32.mrf.mxu0
      %v3493 = vadd.f32 0.0, %v3492
      %v3494 = vpop.f32.mrf.mxu0
      %v3495 = vadd.f32 0.0, %v3494
      %3496 = vmatmul.bf16.gmra.mxu0 %v3454
      %v3497 = vpop.f32.mrf.mxu0
      %v3498 = vadd.f32 0.0, %v3497
      %v3499 = vpop.f32.mrf.mxu0
      %v3500 = vadd.f32 0.0, %v3499
      %3501 = vmatmul.bf16.gmra.mxu0 %v3457
      %v3502 = vpop.f32.mrf.mxu0
      %v3503 = vadd.f32 0.0, %v3502
      %v3504 = vpop.f32.mrf.mxu0
      %v3505 = vadd.f32 0.0, %v3504
      %3506 = vmatmul.bf16.gmra.mxu0 %v3460
      %v3507 = vpop.f32.mrf.mxu0
      %v3508 = vadd.f32 0.0, %v3507
      %v3509 = vpop.f32.mrf.mxu0
      %v3510 = vadd.f32 0.0, %v3509
      %3511 = vmatmul.bf16.gmra.mxu0 %v3463
      %v3512 = vpop.f32.mrf.mxu0
      %v3513 = vadd.f32 0.0, %v3512
      %v3514 = vpop.f32.mrf.mxu0
      %v3515 = vadd.f32 0.0, %v3514
      %3516 = vdwg.mxu0
      %v3533 = vunpack.c.l.b16 %v3248
      %v3534 = vunpack.c.l.b16 %v3249
      %v3535 = vunpack.c.l.b16 %v3250
      %v3536 = vunpack.c.l.b16 %v3251
      %v3537 = vunpack.c.l.b16 %v3252
      %v3538 = vunpack.c.l.b16 %v3253
      %v3539 = vunpack.c.l.b16 %v3254
      %v3540 = vunpack.c.l.b16 %v3255
      %v3541 = vunpack.c.l.b16 %v3256
      %v3542 = vunpack.c.l.b16 %v3257
      %v3543 = vunpack.c.l.b16 %v3258
      %v3544 = vunpack.c.l.b16 %v3259
      %v3545 = vunpack.c.l.b16 %v3260
      %v3546 = vunpack.c.l.b16 %v3261
      %v3547 = vunpack.c.l.b16 %v3262
      %v3548 = vunpack.c.l.b16 %v3263
      %v3549 = vpack.c.b16 %v3534, %v3533
      %v3550 = vpack.c.b16 %v3536, %v3535
      %v3551 = vpack.c.b16 %v3538, %v3537
      %v3552 = vpack.c.b16 %v3540, %v3539
      %v3553 = vpack.c.b16 %v3542, %v3541
      %v3554 = vpack.c.b16 %v3544, %v3543
      %v3555 = vpack.c.b16 %v3546, %v3545
      %v3556 = vpack.c.b16 %v3548, %v3547
      %v3558 = vsel %vm675, %v3549, 0
      %v3561 = vsel %vm675, %v3550, 0
      %v3564 = vsel %vm675, %v3551, 0
      %v3567 = vsel %vm675, %v3552, 0
      %v3570 = vsel %vm675, %v3553, 0
      %v3573 = vsel %vm675, %v3554, 0
      %v3576 = vsel %vm675, %v3555, 0
      %v3579 = vsel %vm675, %v3556, 0
      %v3582 = vsel %vm3348, %v3282, 0
      %3584 = vmatpush.bf16.msra.mxu0 0
      %3585 = vmatpush.bf16.msra.mxu0 0
      %3586 = vmatpush.bf16.msra.mxu0 0
      %3587 = vmatpush.bf16.msra.mxu0 0
      %3588 = vmatpush.bf16.msra.mxu0 0
      %3589 = vmatpush.bf16.msra.mxu0 0
      %3590 = vmatpush.bf16.msra.mxu0 0
      %3591 = vmatpush.bf16.msra.mxu0 %v3582
      %3592 = vmatmul.bf16.gmra.mxu0 %v3558
      %v3593 = vpop.f32.mrf.mxu0
      %v3594 = vadd.f32 0.0, %v3593
      %v3595 = vpop.f32.mrf.mxu0
      %v3596 = vadd.f32 0.0, %v3595
      %3597 = vmatmul.bf16.gmra.mxu0 %v3561
      %v3598 = vpop.f32.mrf.mxu0
      %v3599 = vadd.f32 0.0, %v3598
      %v3600 = vpop.f32.mrf.mxu0
      %v3601 = vadd.f32 0.0, %v3600
      %3602 = vmatmul.bf16.gmra.mxu0 %v3564
      %v3603 = vpop.f32.mrf.mxu0
      %v3604 = vadd.f32 0.0, %v3603
      %v3605 = vpop.f32.mrf.mxu0
      %v3606 = vadd.f32 0.0, %v3605
      %3607 = vmatmul.bf16.gmra.mxu0 %v3567
      %v3608 = vpop.f32.mrf.mxu0
      %v3609 = vadd.f32 0.0, %v3608
      %v3610 = vpop.f32.mrf.mxu0
      %v3611 = vadd.f32 0.0, %v3610
      %3612 = vmatmul.bf16.gmra.mxu0 %v3570
      %v3613 = vpop.f32.mrf.mxu0
      %v3614 = vadd.f32 0.0, %v3613
      %v3615 = vpop.f32.mrf.mxu0
      %v3616 = vadd.f32 0.0, %v3615
      %3617 = vmatmul.bf16.gmra.mxu0 %v3573
      %v3618 = vpop.f32.mrf.mxu0
      %v3619 = vadd.f32 0.0, %v3618
      %v3620 = vpop.f32.mrf.mxu0
      %v3621 = vadd.f32 0.0, %v3620
      %3622 = vmatmul.bf16.gmra.mxu0 %v3576
      %v3623 = vpop.f32.mrf.mxu0
      %v3624 = vadd.f32 0.0, %v3623
      %v3625 = vpop.f32.mrf.mxu0
      %v3626 = vadd.f32 0.0, %v3625
      %3627 = vmatmul.bf16.gmra.mxu0 %v3579
      %v3628 = vpop.f32.mrf.mxu0
      %v3629 = vadd.f32 0.0, %v3628
      %v3630 = vpop.f32.mrf.mxu0
      %v3631 = vadd.f32 0.0, %v3630
      %3632 = vdwg.mxu0
      %v3649 = vunpack.c.l.b16 %v3264
      %v3650 = vunpack.c.l.b16 %v3265
      %v3651 = vunpack.c.l.b16 %v3266
      %v3652 = vunpack.c.l.b16 %v3267
      %v3653 = vunpack.c.l.b16 %v3268
      %v3654 = vunpack.c.l.b16 %v3269
      %v3655 = vunpack.c.l.b16 %v3270
      %v3656 = vunpack.c.l.b16 %v3271
      %v3657 = vunpack.c.l.b16 %v3272
      %v3658 = vunpack.c.l.b16 %v3273
      %v3659 = vunpack.c.l.b16 %v3274
      %v3660 = vunpack.c.l.b16 %v3275
      %v3661 = vunpack.c.l.b16 %v3276
      %v3662 = vunpack.c.l.b16 %v3277
      %v3663 = vunpack.c.l.b16 %v3278
      %v3664 = vunpack.c.l.b16 %v3279
      %v3665 = vpack.c.b16 %v3650, %v3649
      %v3666 = vpack.c.b16 %v3652, %v3651
      %v3667 = vpack.c.b16 %v3654, %v3653
      %v3668 = vpack.c.b16 %v3656, %v3655
      %v3669 = vpack.c.b16 %v3658, %v3657
      %v3670 = vpack.c.b16 %v3660, %v3659
      %v3671 = vpack.c.b16 %v3662, %v3661
      %v3672 = vpack.c.b16 %v3664, %v3663
      %v3674 = vsel %vm675, %v3665, 0
      %v3677 = vsel %vm675, %v3666, 0
      %v3680 = vsel %vm675, %v3667, 0
      %v3683 = vsel %vm675, %v3668, 0
      %v3686 = vsel %vm675, %v3669, 0
      %v3689 = vsel %vm675, %v3670, 0
      %v3692 = vsel %vm675, %v3671, 0
      %v3695 = vsel %vm675, %v3672, 0
      %v3698 = vsel %vm3348, %v3283, 0
      %3700 = vmatpush.bf16.msra.mxu0 0
      %3701 = vmatpush.bf16.msra.mxu0 0
      %3702 = vmatpush.bf16.msra.mxu0 0
      %3703 = vmatpush.bf16.msra.mxu0 0
      %3704 = vmatpush.bf16.msra.mxu0 0
      %3705 = vmatpush.bf16.msra.mxu0 0
      %3706 = vmatpush.bf16.msra.mxu0 0
      %3707 = vmatpush.bf16.msra.mxu0 %v3698
      %3708 = vmatmul.bf16.gmra.mxu0 %v3674
      %v3709 = vpop.f32.mrf.mxu0
      %v3710 = vadd.f32 0.0, %v3709
      %v3711 = vpop.f32.mrf.mxu0
      %v3712 = vadd.f32 0.0, %v3711
      %3713 = vmatmul.bf16.gmra.mxu0 %v3677
      %v3714 = vpop.f32.mrf.mxu0
      %v3715 = vadd.f32 0.0, %v3714
      %v3716 = vpop.f32.mrf.mxu0
      %v3717 = vadd.f32 0.0, %v3716
      %3718 = vmatmul.bf16.gmra.mxu0 %v3680
      %v3719 = vpop.f32.mrf.mxu0
      %v3720 = vadd.f32 0.0, %v3719
      %v3721 = vpop.f32.mrf.mxu0
      %v3722 = vadd.f32 0.0, %v3721
      %3723 = vmatmul.bf16.gmra.mxu0 %v3683
      %v3724 = vpop.f32.mrf.mxu0
      %v3725 = vadd.f32 0.0, %v3724
      %v3726 = vpop.f32.mrf.mxu0
      %v3727 = vadd.f32 0.0, %v3726
      %3728 = vmatmul.bf16.gmra.mxu0 %v3686
      %v3729 = vpop.f32.mrf.mxu0
      %v3730 = vadd.f32 0.0, %v3729
      %v3731 = vpop.f32.mrf.mxu0
      %v3732 = vadd.f32 0.0, %v3731
      %3733 = vmatmul.bf16.gmra.mxu0 %v3689
      %v3734 = vpop.f32.mrf.mxu0
      %v3735 = vadd.f32 0.0, %v3734
      %v3736 = vpop.f32.mrf.mxu0
      %v3737 = vadd.f32 0.0, %v3736
      %3738 = vmatmul.bf16.gmra.mxu0 %v3692
      %v3739 = vpop.f32.mrf.mxu0
      %v3740 = vadd.f32 0.0, %v3739
      %v3741 = vpop.f32.mrf.mxu0
      %v3742 = vadd.f32 0.0, %v3741
      %3743 = vmatmul.bf16.gmra.mxu0 %v3695
      %v3744 = vpop.f32.mrf.mxu0
      %v3745 = vadd.f32 0.0, %v3744
      %v3746 = vpop.f32.mrf.mxu0
      %v3747 = vadd.f32 0.0, %v3746
      %3748 = vdwg.mxu0
      %v3749 = vsel %vm468, %v3362, 0.0
      %v3750 = vsel %vm468, %v3478, 0.0
      %v3751 = vadd.f32 %v3749, %v3750
      %v3752 = vsel %vm468, %v3594, 0.0
      %v3753 = vadd.f32 %v3751, %v3752
      %v3754 = vsel %vm468, %v3710, 0.0
      %v3755 = vadd.f32 %v3753, %v3754
      %v3756 = vsel %vm468, %v3364, 0.0
      %v3757 = vsel %vm468, %v3480, 0.0
      %v3758 = vadd.f32 %v3756, %v3757
      %v3759 = vsel %vm468, %v3596, 0.0
      %v3760 = vadd.f32 %v3758, %v3759
      %v3761 = vsel %vm468, %v3712, 0.0
      %v3762 = vadd.f32 %v3760, %v3761
      %v3763 = vsel %vm468, %v3367, 0.0
      %v3764 = vsel %vm468, %v3483, 0.0
      %v3765 = vadd.f32 %v3763, %v3764
      %v3766 = vsel %vm468, %v3599, 0.0
      %v3767 = vadd.f32 %v3765, %v3766
      %v3768 = vsel %vm468, %v3715, 0.0
      %v3769 = vadd.f32 %v3767, %v3768
      %v3770 = vsel %vm468, %v3369, 0.0
      %v3771 = vsel %vm468, %v3485, 0.0
      %v3772 = vadd.f32 %v3770, %v3771
      %v3773 = vsel %vm468, %v3601, 0.0
      %v3774 = vadd.f32 %v3772, %v3773
      %v3775 = vsel %vm468, %v3717, 0.0
      %v3776 = vadd.f32 %v3774, %v3775
      %v3777 = vsel %vm468, %v3372, 0.0
      %v3778 = vsel %vm468, %v3488, 0.0
      %v3779 = vadd.f32 %v3777, %v3778
      %v3780 = vsel %vm468, %v3604, 0.0
      %v3781 = vadd.f32 %v3779, %v3780
      %v3782 = vsel %vm468, %v3720, 0.0
      %v3783 = vadd.f32 %v3781, %v3782
      %v3784 = vsel %vm468, %v3374, 0.0
      %v3785 = vsel %vm468, %v3490, 0.0
      %v3786 = vadd.f32 %v3784, %v3785
      %v3787 = vsel %vm468, %v3606, 0.0
      %v3788 = vadd.f32 %v3786, %v3787
      %v3789 = vsel %vm468, %v3722, 0.0
      %v3790 = vadd.f32 %v3788, %v3789
      %v3791 = vsel %vm468, %v3377, 0.0
      %v3792 = vsel %vm468, %v3493, 0.0
      %v3793 = vadd.f32 %v3791, %v3792
      %v3794 = vsel %vm468, %v3609, 0.0
      %v3795 = vadd.f32 %v3793, %v3794
      %v3796 = vsel %vm468, %v3725, 0.0
      %v3797 = vadd.f32 %v3795, %v3796
      %v3798 = vsel %vm468, %v3379, 0.0
      %v3799 = vsel %vm468, %v3495, 0.0
      %v3800 = vadd.f32 %v3798, %v3799
      %v3801 = vsel %vm468, %v3611, 0.0
      %v3802 = vadd.f32 %v3800, %v3801
      %v3803 = vsel %vm468, %v3727, 0.0
      %v3804 = vadd.f32 %v3802, %v3803
      %v3805 = vsel %vm468, %v3382, 0.0
      %v3806 = vsel %vm468, %v3498, 0.0
      %v3807 = vadd.f32 %v3805, %v3806
      %v3808 = vsel %vm468, %v3614, 0.0
      %v3809 = vadd.f32 %v3807, %v3808
      %v3810 = vsel %vm468, %v3730, 0.0
      %v3811 = vadd.f32 %v3809, %v3810
      %v3812 = vsel %vm468, %v3384, 0.0
      %v3813 = vsel %vm468, %v3500, 0.0
      %v3814 = vadd.f32 %v3812, %v3813
      %v3815 = vsel %vm468, %v3616, 0.0
      %v3816 = vadd.f32 %v3814, %v3815
      %v3817 = vsel %vm468, %v3732, 0.0
      %v3818 = vadd.f32 %v3816, %v3817
      %v3819 = vsel %vm468, %v3387, 0.0
      %v3820 = vsel %vm468, %v3503, 0.0
      %v3821 = vadd.f32 %v3819, %v3820
      %v3822 = vsel %vm468, %v3619, 0.0
      %v3823 = vadd.f32 %v3821, %v3822
      %v3824 = vsel %vm468, %v3735, 0.0
      %v3825 = vadd.f32 %v3823, %v3824
      %v3826 = vsel %vm468, %v3389, 0.0
      %v3827 = vsel %vm468, %v3505, 0.0
      %v3828 = vadd.f32 %v3826, %v3827
      %v3829 = vsel %vm468, %v3621, 0.0
      %v3830 = vadd.f32 %v3828, %v3829
      %v3831 = vsel %vm468, %v3737, 0.0
      %v3832 = vadd.f32 %v3830, %v3831
      %v3833 = vsel %vm468, %v3392, 0.0
      %v3834 = vsel %vm468, %v3508, 0.0
      %v3835 = vadd.f32 %v3833, %v3834
      %v3836 = vsel %vm468, %v3624, 0.0
      %v3837 = vadd.f32 %v3835, %v3836
      %v3838 = vsel %vm468, %v3740, 0.0
      %v3839 = vadd.f32 %v3837, %v3838
      %v3840 = vsel %vm468, %v3394, 0.0
      %v3841 = vsel %vm468, %v3510, 0.0
      %v3842 = vadd.f32 %v3840, %v3841
      %v3843 = vsel %vm468, %v3626, 0.0
      %v3844 = vadd.f32 %v3842, %v3843
      %v3845 = vsel %vm468, %v3742, 0.0
      %v3846 = vadd.f32 %v3844, %v3845
      %v3847 = vsel %vm468, %v3397, 0.0
      %v3848 = vsel %vm468, %v3513, 0.0
      %v3849 = vadd.f32 %v3847, %v3848
      %v3850 = vsel %vm468, %v3629, 0.0
      %v3851 = vadd.f32 %v3849, %v3850
      %v3852 = vsel %vm468, %v3745, 0.0
      %v3853 = vadd.f32 %v3851, %v3852
      %v3854 = vsel %vm468, %v3399, 0.0
      %v3855 = vsel %vm468, %v3515, 0.0
      %v3856 = vadd.f32 %v3854, %v3855
      %v3857 = vsel %vm468, %v3631, 0.0
      %v3858 = vadd.f32 %v3856, %v3857
      %v3859 = vsel %vm468, %v3747, 0.0
      %v3860 = vadd.f32 %v3858, %v3859
      %v3861 = vld [vmem:[%s4] sm:$0x1]
      %v3863 = vperm.slane %v3861, 0
      %v3865 = vadd.f32 %v3755, %v3863
      %v3866 = vadd.f32 %v3762, %v3863
      %v3867 = vadd.f32 %v3769, %v3863
      %v3868 = vadd.f32 %v3776, %v3863
      %v3869 = vadd.f32 %v3783, %v3863
      %v3870 = vadd.f32 %v3790, %v3863
      %v3871 = vadd.f32 %v3797, %v3863
      %v3872 = vadd.f32 %v3804, %v3863
      %v3873 = vadd.f32 %v3811, %v3863
      %v3874 = vadd.f32 %v3818, %v3863
      %v3875 = vadd.f32 %v3825, %v3863
      %v3876 = vadd.f32 %v3832, %v3863
      %v3877 = vadd.f32 %v3839, %v3863
      %v3878 = vadd.f32 %v3846, %v3863
      %v3879 = vadd.f32 %v3853, %v3863
      %v3880 = vadd.f32 %v3860, %v3863
      %v3881 = vpack.c.bf16 %v3865, %v3865
      %v3882 = vpack.c.bf16 %v3866, %v3866
      %v3883 = vpack.c.bf16 %v3867, %v3867
      %v3884 = vpack.c.bf16 %v3868, %v3868
      %v3885 = vpack.c.bf16 %v3869, %v3869
      %v3886 = vpack.c.bf16 %v3870, %v3870
      %v3887 = vpack.c.bf16 %v3871, %v3871
      %v3888 = vpack.c.bf16 %v3872, %v3872
      %v3889 = vpack.c.bf16 %v3873, %v3873
      %v3890 = vpack.c.bf16 %v3874, %v3874
      %v3891 = vpack.c.bf16 %v3875, %v3875
      %v3892 = vpack.c.bf16 %v3876, %v3876
      %v3893 = vpack.c.bf16 %v3877, %v3877
      %v3894 = vpack.c.bf16 %v3878, %v3878
      %v3895 = vpack.c.bf16 %v3879, %v3879
      %v3896 = vpack.c.bf16 %v3880, %v3880
      %vm3897 = vcmask 257024
      %3898 = vst.msk [vmem:[%s389] sm:$0xf] %vm3897, %v3881
      %3899 = vst.msk [vmem:[%s389 + $0x4] sm:$0xf] %vm3897, %v3882
      %3900 = vst.msk [vmem:[%s389 + $0x8] sm:$0xf] %vm3897, %v3883
      %3901 = vst.msk [vmem:[%s389 + $0xc] sm:$0xf] %vm3897, %v3884
      %3902 = vst.msk [vmem:[%s389 + $0x10] sm:$0xf] %vm3897, %v3885
      %3903 = vst.msk [vmem:[%s389 + $0x14] sm:$0xf] %vm3897, %v3886
      %3904 = vst.msk [vmem:[%s389 + $0x18] sm:$0xf] %vm3897, %v3887
      %3905 = vst.msk [vmem:[%s389 + $0x1c] sm:$0xf] %vm3897, %v3888
      %3906 = vst.msk [vmem:[%s389 + $0x20] sm:$0xf] %vm3897, %v3889
      %3907 = vst.msk [vmem:[%s389 + $0x24] sm:$0xf] %vm3897, %v3890
      %3908 = vst.msk [vmem:[%s389 + $0x28] sm:$0xf] %vm3897, %v3891
      %3909 = vst.msk [vmem:[%s389 + $0x2c] sm:$0xf] %vm3897, %v3892
      %3910 = vst.msk [vmem:[%s389 + $0x30] sm:$0xf] %vm3897, %v3893
      %3911 = vst.msk [vmem:[%s389 + $0x34] sm:$0xf] %vm3897, %v3894
      %3912 = vst.msk [vmem:[%s389 + $0x38] sm:$0xf] %vm3897, %v3895
      %3913 = vst.msk [vmem:[%s389 + $0x3c] sm:$0xf] %vm3897, %v3896
      %s3914 = smul.u32 16, %s18
      %p3915 = scmp.lt.s32.totalorder %s3914, 63
      %s3916 = scalar_select %p3915, %s3914, 63
      %s3917 = smul.addr %s3916, 4
      %s3918 = scalar_lea.vmem %s7, %s3917
      // Predicated region
      $region49: #{tpu_custom_call.1} parent=47 // pred_check
        %p3919 = pneg %p217
      $region50: #{tpu_custom_call.1} parent=47 // pred_check_branch
        %3921 = sbr.rel (%p3919) target = $region52
      $region51: #{tpu_custom_call.1} parent=47 // pred_region
        %s3922 = smul.u32 16, %s18
      $region52: #{tpu_custom_call.1} parent=47 // pred_fallthru
        _
    $region48: #{tpu_custom_call.1} parent=5 // pred_fallthru
      _
    %p3923 = scmp.le.s32.totalorder 2, %s13
    // Predicated region
    $region53: #{tpu_custom_call.1} parent=5 // pred_check
      %p3924 = pneg %p3923
    $region54: #{tpu_custom_call.1} parent=5 // pred_check_branch
      %3926 = sbr.rel (%p3924) target = $region56
    $region55: #{tpu_custom_call.1} parent=5 // pred_region
      %s3927 = ssub.s32 %s13, 2
      // Predicated region
      $region57: #{tpu_custom_call.1} parent=55 // pred_check
        %p3928 = pneg %p223
      $region58: #{tpu_custom_call.1} parent=55 // pred_check_branch
        %3930 = sbr.rel (%p3928) target = $region60
      $region59: #{tpu_custom_call.1} parent=55 // pred_region
        %s3931 = smul.u32 16, %s19
        %p3932 = scmp.lt.s32.totalorder %s3931, 63
        %s3933 = scalar_select %p3932, %s3931, 63
        %s3934 = smul.addr %s3933, 4
        %s3935 = scalar_lea.vmem %s7, %s3934
      $region60: #{tpu_custom_call.1} parent=55 // pred_fallthru
        _
    $region56: #{tpu_custom_call.1} parent=5 // pred_fallthru
      _
  $region6: #{tpu_custom_call.1} parent=0 // loop_footer
    %s17 = sadd.s32 1, %s13
  $region7: #{tpu_custom_call.1} parent=0 // loop_footer_branch
    %12 = sbr.rel target = $region3
  $region8: #{tpu_custom_call.1} parent=0 // loop_exit
    _

</llo_original>
